<compile_context>
chip_gen: v7x
topology: tpu7x:2x2x1
jax: 0.10.0
libtpu: 0.0.40
codegen_flags: <defaults>
</compile_context>

<pallas_src>
import functools

import jax
import jax.numpy as jnp
from jax import lax
from jax.experimental import pallas as pl
from jax.experimental.pallas import tpu as pltpu

EPS = 1e-5  # PyTorch BatchNorm default


def _round_up(x, m):
    return (x + m - 1) // m * m


# ----------------------------------------------------------------------------
# Fused kernel: conv1+bn1+relu -> conv2+bn2+relu -> conv3+bn3+res+relu
# One grid step == one batch element; everything per-stage stays in VMEM.
# ----------------------------------------------------------------------------
def _bottleneck_kernel(x_ref, w1_ref, b1_ref, w2_ref, b2_ref, w3_ref, b3_ref,
                       mask_ref, o_ref, pad_a, pad_b, stack,
                       *, Hp, Wp, B, OFF0, cp_in, cp_mid, c_res):
    HpWp = Hp * Wp
    mask = mask_ref[...]                                  # (1, B) f32 valid-pos mask

    def build_stack(src_ref, cp):
        # In-VMEM im2col: stack rows [t*cp:(t+1)*cp] = src[:, off_t : off_t+B]
        # (each 3x3x3 tap is a contiguous lane slice in this layout).
        for kd in range(3):
            for kh in range(3):
                for kw in range(3):
                    t = (kd * 3 + kh) * 3 + kw
                    off = kd * HpWp + kh * Wp + kw
                    stack[pl.ds(t * cp, cp), :] = src_ref[:, pl.ds(off, B)]
        return 27 * cp

    def gemm_bias(k, w_ref, b_ref):
        # bf16 x bf16 -> f32 accumulate on the MXU.  BN scale is pre-folded
        # into the weight rows, so the epilogue is a bias add only.
        y = jnp.dot(w_ref[...], stack[pl.ds(0, k), :],
                    preferred_element_type=jnp.float32)   # (Cout, B) f32
        return y + b_ref[...]

    def scatter_padded(dst_ref, y):
        # Zero the whole padded slab, then store the masked interior at a
        # constant lane offset -> next stage sees correct SAME zero padding.
        dst_ref[...] = jnp.zeros_like(dst_ref)
        dst_ref[pl.ds(0, y.shape[0]), pl.ds(OFF0, B)] = (y * mask).astype(dst_ref.dtype)

    # --- stage 1: conv1 + bn1 + relu -------------------------------------
    k1 = build_stack(x_ref, cp_in)
    y1 = jnp.maximum(gemm_bias(k1, w1_ref, b1_ref), 0.0)
    scatter_padded(pad_a, y1)

    # --- stage 2: conv2 + bn2 + relu -------------------------------------
    k2 = build_stack(pad_a, cp_mid)
    y2 = jnp.maximum(gemm_bias(k2, w2_ref, b2_ref), 0.0)
    scatter_padded(pad_b, y2)

    # --- stage 3: conv3 + bn3 + residual + relu (lane-dense output) ------
    k3 = build_stack(pad_b, cp_mid)
    y3 = gemm_bias(k3, w3_ref, b3_ref)
    resid = x_ref[pl.ds(0, c_res), pl.ds(OFF0, B)].astype(jnp.float32)
    o_ref[...] = jnp.maximum(y3 + resid, 0.0).astype(o_ref.dtype)


# ----------------------------------------------------------------------------
# Parameter construction (deterministic, synthetic) and BN/weight folding
# ----------------------------------------------------------------------------
def make_conv_bn_params(key, cin, cout):
    k = jax.random.split(key, 6)
    w = jax.random.normal(k[0], (cout, cin, 3, 3, 3), jnp.float32) * 0.05
    b = jax.random.normal(k[1], (cout,), jnp.float32) * 0.05
    gamma = 1.0 + 0.1 * jax.random.normal(k[2], (cout,), jnp.float32)
    beta = 0.05 * jax.random.normal(k[3], (cout,), jnp.float32)
    mean = 0.05 * jax.random.normal(k[4], (cout,), jnp.float32)
    var = 1.0 + 0.1 * jax.random.uniform(k[5], (cout,), jnp.float32)
    return dict(w=w, b=b, gamma=gamma, beta=beta, mean=mean, var=var)


def fold_params_packed(p, cin_pad):
    """Fold eval-mode BN + conv bias; pack weight as (Cout, 27*cin_pad) bf16.

    Column index = ((kd*3+kh)*3+kw)*cin_pad + cin  (matches the in-kernel
    stack layout); BN scale is folded into the weight rows; phantom input
    channels are zero rows.
    """
    scale = p["gamma"] / jnp.sqrt(p["var"] + EPS)
    bias = p["beta"] + scale * (p["b"] - p["mean"])
    w = p["w"]                                       # (Cout, Cin, 3, 3, 3)
    cout, cin = w.shape[0], w.shape[1]
    wt = jnp.transpose(w, (0, 2, 3, 4, 1))           # (Cout, kd, kh, kw, Cin)
    wt = jnp.pad(wt, ((0, 0),) * 4 + ((0, cin_pad - cin),))
    wt = wt.reshape(cout, 27 * cin_pad) * scale[:, None]
    return wt.astype(jnp.bfloat16), bias.astype(jnp.float32).reshape(cout, 1)


# ----------------------------------------------------------------------------
# Wrapper: layout plumbing only (no im2col / no per-stage HBM round-trips)
# ----------------------------------------------------------------------------
def bottleneck_forward(x, p1, p2, p3):
    N, D, H, W, c_in = x.shape
    c1, c2, c3 = p1["w"].shape[0], p2["w"].shape[0], p3["w"].shape[0]
    assert c3 == c_in, "downsample=None requires inplants == plants*expansion"

    Dp, Hp, Wp = D + 2, H + 2, W + 2
    P = Dp * Hp * Wp
    B = (D - 1) * Hp * Wp + (H - 1) * Wp + W          # contiguous compute range
    OFF0 = Hp * Wp + Wp + 1                           # flat index of coord (1,1,1)

    cp_in = _round_up(c_in, 8)
    cp_mid = _round_up(max(c1, c2), 8)

    w1t, b1 = fold_params_packed(p1, cp_in)
    w2t, b2 = fold_params_packed(p2, cp_mid)
    w3t, b3 = fold_params_packed(p3, cp_mid)

    # Layout plumbing: channels-major, zero spatial pad of 1, flatten, bf16.
    xc = jnp.transpose(x, (0, 4, 1, 2, 3))
    xc = jnp.pad(xc, ((0, 0), (0, cp_in - c_in), (1, 1), (1, 1), (1, 1)))
    x_flat = xc.reshape(N, cp_in, P).astype(jnp.bfloat16)

    # Mask of valid output positions over the B-range (padded-stride order).
    b_idx = jnp.arange(B, dtype=jnp.int32)
    hh = (b_idx % (Hp * Wp)) // Wp
    ww = b_idx % Wp
    mask = ((hh < H) & (ww < W)).astype(jnp.float32).reshape(1, B)

    kernel = functools.partial(
        _bottleneck_kernel, Hp=Hp, Wp=Wp, B=B, OFF0=OFF0,
        cp_in=cp_in, cp_mid=cp_mid, c_res=c3)

    out = pl.pallas_call(
        kernel,
        out_shape=jax.ShapeDtypeStruct((N, c3, B), jnp.float32),
        grid=(N,),
        in_specs=[
            pl.BlockSpec((None, cp_in, P), lambda n: (n, 0, 0)),      # input x
            pl.BlockSpec((c1, 27 * cp_in), lambda n: (0, 0)),         # w1 (resident)
            pl.BlockSpec((c1, 1), lambda n: (0, 0)),                  # b1
            pl.BlockSpec((c2, 27 * cp_mid), lambda n: (0, 0)),        # w2
            pl.BlockSpec((c2, 1), lambda n: (0, 0)),                  # b2
            pl.BlockSpec((c3, 27 * cp_mid), lambda n: (0, 0)),        # w3
            pl.BlockSpec((c3, 1), lambda n: (0, 0)),                  # b3
            pl.BlockSpec((1, B), lambda n: (0, 0)),                   # valid mask
        ],
        out_specs=pl.BlockSpec((None, c3, B), lambda n: (n, 0, 0)),
        scratch_shapes=[
            pltpu.VMEM((cp_mid, P), jnp.bfloat16),                    # padded act (stage1 out)
            pltpu.VMEM((cp_mid, P), jnp.bfloat16),                    # padded act (stage2 out)
            pltpu.VMEM((27 * max(cp_in, cp_mid), B), jnp.bfloat16),   # im2col K-stack
        ],
        compiler_params=pltpu.CompilerParams(
            dimension_semantics=("parallel",),       # shards batch over v7x's 2 TCs
            vmem_limit_bytes=48 * 1024 * 1024,
        ),
    )(x_flat, w1t, b1, w2t, b2, w3t, b3, mask)

    # Un-flatten (layout plumbing): flat index b = d*Hp*Wp + h*Wp + w.
    out = jnp.pad(out, ((0, 0), (0, 0), (0, D * Hp * Wp - B)))
    out = out.reshape(N, c3, D, Hp, Wp)[:, :, :, :H, :W]
    return jnp.transpose(out, (0, 2, 3, 4, 1))


# ----------------------------------------------------------------------------
# Pure-JAX reference (f32, lax.conv) for correctness checking
# ----------------------------------------------------------------------------
def ref_conv_bn(x, p, relu, residual=None):
    w_dhwio = jnp.transpose(p["w"], (2, 3, 4, 1, 0))  # (kD,kH,kW,Cin,Cout)
    y = lax.conv_general_dilated(
        x, w_dhwio, window_strides=(1, 1, 1), padding="SAME",
        dimension_numbers=("NDHWC", "DHWIO", "NDHWC"))
    y = y + p["b"]
    y = p["gamma"] * (y - p["mean"]) / jnp.sqrt(p["var"] + EPS) + p["beta"]
    if residual is not None:
        y = y + residual
    if relu:
        y = jnp.maximum(y, 0.0)
    return y


def ref_bottleneck(x, p1, p2, p3):
    out = ref_conv_bn(x, p1, relu=True)
    out = ref_conv_bn(out, p2, relu=True)
    out = ref_conv_bn(out, p3, relu=True, residual=x)
    return out


if __name__ == "__main__":
    # Small shapes implied by the module: Bottleneck(inplants, plants) with
    # downsample=None needs inplants == plants * expansion (= 4*plants).
    N, D, H, W = 2, 4, 8, 8
    plants = 4
    inplants = plants * 4  # 16

    key = jax.random.PRNGKey(0)
    kx, k1, k2, k3 = jax.random.split(key, 4)

    x = jax.random.normal(kx, (N, D, H, W, inplants), jnp.float32)
    p1 = make_conv_bn_params(k1, inplants, plants)
    p2 = make_conv_bn_params(k2, plants, plants)
    p3 = make_conv_bn_params(k3, plants, plants * 4)

    fwd = jax.jit(bottleneck_forward)
    out = jax.block_until_ready(fwd(x, p1, p2, p3))
    assert out.shape == (N, D, H, W, inplants)

    ref = jax.block_until_ready(ref_bottleneck(x, p1, p2, p3))
    # bf16 matmul operands / bf16-resident intermediates -> loosened tolerance.
    max_err = float(jnp.max(jnp.abs(out - ref)))
    ref_max = float(jnp.max(jnp.abs(ref)))
    assert max_err <= 4e-2 * max(ref_max, 1.0), f"mismatch: {max_err} (ref max {ref_max})"

    print("KERNEL_OK")
</pallas_src>

<mosaic_0001>
module attributes {stable_mosaic.version = 11 : i64} {
  func.func @_bottleneck_kernel(%arg0: i32, %arg1: memref<1x16x600xbf16, #tpu.memory_space<vmem>>, %arg2: memref<4x432xbf16, #tpu.memory_space<vmem>>, %arg3: memref<4x1xf32, #tpu.memory_space<vmem>>, %arg4: memref<4x216xbf16, #tpu.memory_space<vmem>>, %arg5: memref<4x1xf32, #tpu.memory_space<vmem>>, %arg6: memref<16x216xbf16, #tpu.memory_space<vmem>>, %arg7: memref<16x1xf32, #tpu.memory_space<vmem>>, %arg8: memref<1x378xf32, #tpu.memory_space<vmem>>, %arg9: memref<1x16x378xf32, #tpu.memory_space<vmem>>, %arg10: memref<8x600xbf16, #tpu.memory_space<vmem>>, %arg11: memref<8x600xbf16, #tpu.memory_space<vmem>>, %arg12: memref<432x378xbf16, #tpu.memory_space<vmem>>) attributes {dimension_semantics = [#tpu.dimension_semantics<parallel>], iteration_bounds = array<i64: 2>, scalar_prefetch = 0 : i64, scratch_operands = 3 : i64, tpu.core_type = #tpu.core_type<tc>, window_params = [{transform_indices = @transform_0, window_bounds = array<i64: 1, 16, 600>}, {pipeline_mode = #tpu.pipeline_mode<synchronous>, transform_indices = @transform_1, window_bounds = array<i64: 4, 432>}, {pipeline_mode = #tpu.pipeline_mode<synchronous>, transform_indices = @transform_2, window_bounds = array<i64: 4, 1>}, {pipeline_mode = #tpu.pipeline_mode<synchronous>, transform_indices = @transform_3, window_bounds = array<i64: 4, 216>}, {pipeline_mode = #tpu.pipeline_mode<synchronous>, transform_indices = @transform_4, window_bounds = array<i64: 4, 1>}, {pipeline_mode = #tpu.pipeline_mode<synchronous>, transform_indices = @transform_5, window_bounds = array<i64: 16, 216>}, {pipeline_mode = #tpu.pipeline_mode<synchronous>, transform_indices = @transform_6, window_bounds = array<i64: 16, 1>}, {pipeline_mode = #tpu.pipeline_mode<synchronous>, transform_indices = @transform_7, window_bounds = array<i64: 1, 378>}, {transform_indices = @transform_8, window_bounds = array<i64: 1, 16, 378>}]} {
    %c0 = arith.constant 0 : index
    %c0_0 = arith.constant 0 : index
    %0 = vector.load %arg8[%c0, %c0_0] : memref<1x378xf32, #tpu.memory_space<vmem>>, vector<1x378xf32>
    %c0_1 = arith.constant 0 : index
    %c0_2 = arith.constant 0 : index
    %c0_3 = arith.constant 0 : index
    %1 = vector.load %arg1[%c0_1, %c0_2, %c0_3] : memref<1x16x600xbf16, #tpu.memory_space<vmem>>, vector<1x16x378xbf16>
    %2 = vector.shape_cast %1 : vector<1x16x378xbf16> to vector<16x378xbf16>
    %c0_4 = arith.constant 0 : index
    %c0_5 = arith.constant 0 : index
    %3 = vector.load %arg12[%c0_4, %c0_5] : memref<432x378xbf16, #tpu.memory_space<vmem>>, vector<16x378xbf16>
    tpu.vector_store %arg12[%c0_4, %c0_5], %2 {strides = array<i32>} : memref<432x378xbf16, #tpu.memory_space<vmem>>, vector<16x378xbf16>,
    %c0_6 = arith.constant 0 : index
    %c0_7 = arith.constant 0 : index
    %c1 = arith.constant 1 : index
    %4 = vector.load %arg1[%c0_6, %c0_7, %c1] : memref<1x16x600xbf16, #tpu.memory_space<vmem>>, vector<1x16x378xbf16>
    %5 = vector.shape_cast %4 : vector<1x16x378xbf16> to vector<16x378xbf16>
    %c16 = arith.constant 16 : index
    %c0_8 = arith.constant 0 : index
    %6 = vector.load %arg12[%c16, %c0_8] : memref<432x378xbf16, #tpu.memory_space<vmem>>, vector<16x378xbf16>
    tpu.vector_store %arg12[%c16, %c0_8], %5 {strides = array<i32>} : memref<432x378xbf16, #tpu.memory_space<vmem>>, vector<16x378xbf16>,
    %c0_9 = arith.constant 0 : index
    %c0_10 = arith.constant 0 : index
    %c2 = arith.constant 2 : index
    %7 = vector.load %arg1[%c0_9, %c0_10, %c2] : memref<1x16x600xbf16, #tpu.memory_space<vmem>>, vector<1x16x378xbf16>
    %8 = vector.shape_cast %7 : vector<1x16x378xbf16> to vector<16x378xbf16>
    %c32 = arith.constant 32 : index
    %c0_11 = arith.constant 0 : index
    %9 = vector.load %arg12[%c32, %c0_11] : memref<432x378xbf16, #tpu.memory_space<vmem>>, vector<16x378xbf16>
    tpu.vector_store %arg12[%c32, %c0_11], %8 {strides = array<i32>} : memref<432x378xbf16, #tpu.memory_space<vmem>>, vector<16x378xbf16>,
    %c0_12 = arith.constant 0 : index
    %c0_13 = arith.constant 0 : index
    %c10 = arith.constant 10 : index
    %10 = vector.load %arg1[%c0_12, %c0_13, %c10] : memref<1x16x600xbf16, #tpu.memory_space<vmem>>, vector<1x16x378xbf16>
    %11 = vector.shape_cast %10 : vector<1x16x378xbf16> to vector<16x378xbf16>
    %c48 = arith.constant 48 : index
    %c0_14 = arith.constant 0 : index
    %12 = vector.load %arg12[%c48, %c0_14] : memref<432x378xbf16, #tpu.memory_space<vmem>>, vector<16x378xbf16>
    tpu.vector_store %arg12[%c48, %c0_14], %11 {strides = array<i32>} : memref<432x378xbf16, #tpu.memory_space<vmem>>, vector<16x378xbf16>,
    %c0_15 = arith.constant 0 : index
    %c0_16 = arith.constant 0 : index
    %c11 = arith.constant 11 : index
    %13 = vector.load %arg1[%c0_15, %c0_16, %c11] : memref<1x16x600xbf16, #tpu.memory_space<vmem>>, vector<1x16x378xbf16>
    %14 = vector.shape_cast %13 : vector<1x16x378xbf16> to vector<16x378xbf16>
    %c64 = arith.constant 64 : index
    %c0_17 = arith.constant 0 : index
    %15 = vector.load %arg12[%c64, %c0_17] : memref<432x378xbf16, #tpu.memory_space<vmem>>, vector<16x378xbf16>
    tpu.vector_store %arg12[%c64, %c0_17], %14 {strides = array<i32>} : memref<432x378xbf16, #tpu.memory_space<vmem>>, vector<16x378xbf16>,
    %c0_18 = arith.constant 0 : index
    %c0_19 = arith.constant 0 : index
    %c12 = arith.constant 12 : index
    %16 = vector.load %arg1[%c0_18, %c0_19, %c12] : memref<1x16x600xbf16, #tpu.memory_space<vmem>>, vector<1x16x378xbf16>
    %17 = vector.shape_cast %16 : vector<1x16x378xbf16> to vector<16x378xbf16>
    %c80 = arith.constant 80 : index
    %c0_20 = arith.constant 0 : index
    %18 = vector.load %arg12[%c80, %c0_20] : memref<432x378xbf16, #tpu.memory_space<vmem>>, vector<16x378xbf16>
    tpu.vector_store %arg12[%c80, %c0_20], %17 {strides = array<i32>} : memref<432x378xbf16, #tpu.memory_space<vmem>>, vector<16x378xbf16>,
    %c0_21 = arith.constant 0 : index
    %c0_22 = arith.constant 0 : index
    %c20 = arith.constant 20 : index
    %19 = vector.load %arg1[%c0_21, %c0_22, %c20] : memref<1x16x600xbf16, #tpu.memory_space<vmem>>, vector<1x16x378xbf16>
    %20 = vector.shape_cast %19 : vector<1x16x378xbf16> to vector<16x378xbf16>
    %c96 = arith.constant 96 : index
    %c0_23 = arith.constant 0 : index
    %21 = vector.load %arg12[%c96, %c0_23] : memref<432x378xbf16, #tpu.memory_space<vmem>>, vector<16x378xbf16>
    tpu.vector_store %arg12[%c96, %c0_23], %20 {strides = array<i32>} : memref<432x378xbf16, #tpu.memory_space<vmem>>, vector<16x378xbf16>,
    %c0_24 = arith.constant 0 : index
    %c0_25 = arith.constant 0 : index
    %c21 = arith.constant 21 : index
    %22 = vector.load %arg1[%c0_24, %c0_25, %c21] : memref<1x16x600xbf16, #tpu.memory_space<vmem>>, vector<1x16x378xbf16>
    %23 = vector.shape_cast %22 : vector<1x16x378xbf16> to vector<16x378xbf16>
    %c112 = arith.constant 112 : index
    %c0_26 = arith.constant 0 : index
    %24 = vector.load %arg12[%c112, %c0_26] : memref<432x378xbf16, #tpu.memory_space<vmem>>, vector<16x378xbf16>
    tpu.vector_store %arg12[%c112, %c0_26], %23 {strides = array<i32>} : memref<432x378xbf16, #tpu.memory_space<vmem>>, vector<16x378xbf16>,
    %c0_27 = arith.constant 0 : index
    %c0_28 = arith.constant 0 : index
    %c22 = arith.constant 22 : index
    %25 = vector.load %arg1[%c0_27, %c0_28, %c22] : memref<1x16x600xbf16, #tpu.memory_space<vmem>>, vector<1x16x378xbf16>
    %26 = vector.shape_cast %25 : vector<1x16x378xbf16> to vector<16x378xbf16>
    %c128 = arith.constant 128 : index
    %c0_29 = arith.constant 0 : index
    %27 = vector.load %arg12[%c128, %c0_29] : memref<432x378xbf16, #tpu.memory_space<vmem>>, vector<16x378xbf16>
    tpu.vector_store %arg12[%c128, %c0_29], %26 {strides = array<i32>} : memref<432x378xbf16, #tpu.memory_space<vmem>>, vector<16x378xbf16>,
    %c0_30 = arith.constant 0 : index
    %c0_31 = arith.constant 0 : index
    %c100 = arith.constant 100 : index
    %28 = vector.load %arg1[%c0_30, %c0_31, %c100] : memref<1x16x600xbf16, #tpu.memory_space<vmem>>, vector<1x16x378xbf16>
    %29 = vector.shape_cast %28 : vector<1x16x378xbf16> to vector<16x378xbf16>
    %c144 = arith.constant 144 : index
    %c0_32 = arith.constant 0 : index
    %30 = vector.load %arg12[%c144, %c0_32] : memref<432x378xbf16, #tpu.memory_space<vmem>>, vector<16x378xbf16>
    tpu.vector_store %arg12[%c144, %c0_32], %29 {strides = array<i32>} : memref<432x378xbf16, #tpu.memory_space<vmem>>, vector<16x378xbf16>,
    %c0_33 = arith.constant 0 : index
    %c0_34 = arith.constant 0 : index
    %c101 = arith.constant 101 : index
    %31 = vector.load %arg1[%c0_33, %c0_34, %c101] : memref<1x16x600xbf16, #tpu.memory_space<vmem>>, vector<1x16x378xbf16>
    %32 = vector.shape_cast %31 : vector<1x16x378xbf16> to vector<16x378xbf16>
    %c160 = arith.constant 160 : index
    %c0_35 = arith.constant 0 : index
    %33 = vector.load %arg12[%c160, %c0_35] : memref<432x378xbf16, #tpu.memory_space<vmem>>, vector<16x378xbf16>
    tpu.vector_store %arg12[%c160, %c0_35], %32 {strides = array<i32>} : memref<432x378xbf16, #tpu.memory_space<vmem>>, vector<16x378xbf16>,
    %c0_36 = arith.constant 0 : index
    %c0_37 = arith.constant 0 : index
    %c102 = arith.constant 102 : index
    %34 = vector.load %arg1[%c0_36, %c0_37, %c102] : memref<1x16x600xbf16, #tpu.memory_space<vmem>>, vector<1x16x378xbf16>
    %35 = vector.shape_cast %34 : vector<1x16x378xbf16> to vector<16x378xbf16>
    %c176 = arith.constant 176 : index
    %c0_38 = arith.constant 0 : index
    %36 = vector.load %arg12[%c176, %c0_38] : memref<432x378xbf16, #tpu.memory_space<vmem>>, vector<16x378xbf16>
    tpu.vector_store %arg12[%c176, %c0_38], %35 {strides = array<i32>} : memref<432x378xbf16, #tpu.memory_space<vmem>>, vector<16x378xbf16>,
    %c0_39 = arith.constant 0 : index
    %c0_40 = arith.constant 0 : index
    %c110 = arith.constant 110 : index
    %37 = vector.load %arg1[%c0_39, %c0_40, %c110] : memref<1x16x600xbf16, #tpu.memory_space<vmem>>, vector<1x16x378xbf16>
    %38 = vector.shape_cast %37 : vector<1x16x378xbf16> to vector<16x378xbf16>
    %c192 = arith.constant 192 : index
    %c0_41 = arith.constant 0 : index
    %39 = vector.load %arg12[%c192, %c0_41] : memref<432x378xbf16, #tpu.memory_space<vmem>>, vector<16x378xbf16>
    tpu.vector_store %arg12[%c192, %c0_41], %38 {strides = array<i32>} : memref<432x378xbf16, #tpu.memory_space<vmem>>, vector<16x378xbf16>,
    %c0_42 = arith.constant 0 : index
    %c0_43 = arith.constant 0 : index
    %c111 = arith.constant 111 : index
    %40 = vector.load %arg1[%c0_42, %c0_43, %c111] : memref<1x16x600xbf16, #tpu.memory_space<vmem>>, vector<1x16x378xbf16>
    %41 = vector.shape_cast %40 : vector<1x16x378xbf16> to vector<16x378xbf16>
    %c208 = arith.constant 208 : index
    %c0_44 = arith.constant 0 : index
    %42 = vector.load %arg12[%c208, %c0_44] : memref<432x378xbf16, #tpu.memory_space<vmem>>, vector<16x378xbf16>
    tpu.vector_store %arg12[%c208, %c0_44], %41 {strides = array<i32>} : memref<432x378xbf16, #tpu.memory_space<vmem>>, vector<16x378xbf16>,
    %c0_45 = arith.constant 0 : index
    %c0_46 = arith.constant 0 : index
    %c112_47 = arith.constant 112 : index
    %43 = vector.load %arg1[%c0_45, %c0_46, %c112_47] : memref<1x16x600xbf16, #tpu.memory_space<vmem>>, vector<1x16x378xbf16>
    %44 = vector.shape_cast %43 : vector<1x16x378xbf16> to vector<16x378xbf16>
    %c224 = arith.constant 224 : index
    %c0_48 = arith.constant 0 : index
    %45 = vector.load %arg12[%c224, %c0_48] : memref<432x378xbf16, #tpu.memory_space<vmem>>, vector<16x378xbf16>
    tpu.vector_store %arg12[%c224, %c0_48], %44 {strides = array<i32>} : memref<432x378xbf16, #tpu.memory_space<vmem>>, vector<16x378xbf16>,
    %c0_49 = arith.constant 0 : index
    %c0_50 = arith.constant 0 : index
    %c120 = arith.constant 120 : index
    %46 = vector.load %arg1[%c0_49, %c0_50, %c120] : memref<1x16x600xbf16, #tpu.memory_space<vmem>>, vector<1x16x378xbf16>
    %47 = vector.shape_cast %46 : vector<1x16x378xbf16> to vector<16x378xbf16>
    %c240 = arith.constant 240 : index
    %c0_51 = arith.constant 0 : index
    %48 = vector.load %arg12[%c240, %c0_51] : memref<432x378xbf16, #tpu.memory_space<vmem>>, vector<16x378xbf16>
    tpu.vector_store %arg12[%c240, %c0_51], %47 {strides = array<i32>} : memref<432x378xbf16, #tpu.memory_space<vmem>>, vector<16x378xbf16>,
    %c0_52 = arith.constant 0 : index
    %c0_53 = arith.constant 0 : index
    %c121 = arith.constant 121 : index
    %49 = vector.load %arg1[%c0_52, %c0_53, %c121] : memref<1x16x600xbf16, #tpu.memory_space<vmem>>, vector<1x16x378xbf16>
    %50 = vector.shape_cast %49 : vector<1x16x378xbf16> to vector<16x378xbf16>
    %c256 = arith.constant 256 : index
    %c0_54 = arith.constant 0 : index
    %51 = vector.load %arg12[%c256, %c0_54] : memref<432x378xbf16, #tpu.memory_space<vmem>>, vector<16x378xbf16>
    tpu.vector_store %arg12[%c256, %c0_54], %50 {strides = array<i32>} : memref<432x378xbf16, #tpu.memory_space<vmem>>, vector<16x378xbf16>,
    %c0_55 = arith.constant 0 : index
    %c0_56 = arith.constant 0 : index
    %c122 = arith.constant 122 : index
    %52 = vector.load %arg1[%c0_55, %c0_56, %c122] : memref<1x16x600xbf16, #tpu.memory_space<vmem>>, vector<1x16x378xbf16>
    %53 = vector.shape_cast %52 : vector<1x16x378xbf16> to vector<16x378xbf16>
    %c272 = arith.constant 272 : index
    %c0_57 = arith.constant 0 : index
    %54 = vector.load %arg12[%c272, %c0_57] : memref<432x378xbf16, #tpu.memory_space<vmem>>, vector<16x378xbf16>
    tpu.vector_store %arg12[%c272, %c0_57], %53 {strides = array<i32>} : memref<432x378xbf16, #tpu.memory_space<vmem>>, vector<16x378xbf16>,
    %c0_58 = arith.constant 0 : index
    %c0_59 = arith.constant 0 : index
    %c200 = arith.constant 200 : index
    %55 = vector.load %arg1[%c0_58, %c0_59, %c200] : memref<1x16x600xbf16, #tpu.memory_space<vmem>>, vector<1x16x378xbf16>
    %56 = vector.shape_cast %55 : vector<1x16x378xbf16> to vector<16x378xbf16>
    %c288 = arith.constant 288 : index
    %c0_60 = arith.constant 0 : index
    %57 = vector.load %arg12[%c288, %c0_60] : memref<432x378xbf16, #tpu.memory_space<vmem>>, vector<16x378xbf16>
    tpu.vector_store %arg12[%c288, %c0_60], %56 {strides = array<i32>} : memref<432x378xbf16, #tpu.memory_space<vmem>>, vector<16x378xbf16>,
    %c0_61 = arith.constant 0 : index
    %c0_62 = arith.constant 0 : index
    %c201 = arith.constant 201 : index
    %58 = vector.load %arg1[%c0_61, %c0_62, %c201] : memref<1x16x600xbf16, #tpu.memory_space<vmem>>, vector<1x16x378xbf16>
    %59 = vector.shape_cast %58 : vector<1x16x378xbf16> to vector<16x378xbf16>
    %c304 = arith.constant 304 : index
    %c0_63 = arith.constant 0 : index
    %60 = vector.load %arg12[%c304, %c0_63] : memref<432x378xbf16, #tpu.memory_space<vmem>>, vector<16x378xbf16>
    tpu.vector_store %arg12[%c304, %c0_63], %59 {strides = array<i32>} : memref<432x378xbf16, #tpu.memory_space<vmem>>, vector<16x378xbf16>,
    %c0_64 = arith.constant 0 : index
    %c0_65 = arith.constant 0 : index
    %c202 = arith.constant 202 : index
    %61 = vector.load %arg1[%c0_64, %c0_65, %c202] : memref<1x16x600xbf16, #tpu.memory_space<vmem>>, vector<1x16x378xbf16>
    %62 = vector.shape_cast %61 : vector<1x16x378xbf16> to vector<16x378xbf16>
    %c320 = arith.constant 320 : index
    %c0_66 = arith.constant 0 : index
    %63 = vector.load %arg12[%c320, %c0_66] : memref<432x378xbf16, #tpu.memory_space<vmem>>, vector<16x378xbf16>
    tpu.vector_store %arg12[%c320, %c0_66], %62 {strides = array<i32>} : memref<432x378xbf16, #tpu.memory_space<vmem>>, vector<16x378xbf16>,
    %c0_67 = arith.constant 0 : index
    %c0_68 = arith.constant 0 : index
    %c210 = arith.constant 210 : index
    %64 = vector.load %arg1[%c0_67, %c0_68, %c210] : memref<1x16x600xbf16, #tpu.memory_space<vmem>>, vector<1x16x378xbf16>
    %65 = vector.shape_cast %64 : vector<1x16x378xbf16> to vector<16x378xbf16>
    %c336 = arith.constant 336 : index
    %c0_69 = arith.constant 0 : index
    %66 = vector.load %arg12[%c336, %c0_69] : memref<432x378xbf16, #tpu.memory_space<vmem>>, vector<16x378xbf16>
    tpu.vector_store %arg12[%c336, %c0_69], %65 {strides = array<i32>} : memref<432x378xbf16, #tpu.memory_space<vmem>>, vector<16x378xbf16>,
    %c0_70 = arith.constant 0 : index
    %c0_71 = arith.constant 0 : index
    %c211 = arith.constant 211 : index
    %67 = vector.load %arg1[%c0_70, %c0_71, %c211] : memref<1x16x600xbf16, #tpu.memory_space<vmem>>, vector<1x16x378xbf16>
    %68 = vector.shape_cast %67 : vector<1x16x378xbf16> to vector<16x378xbf16>
    %c352 = arith.constant 352 : index
    %c0_72 = arith.constant 0 : index
    %69 = vector.load %arg12[%c352, %c0_72] : memref<432x378xbf16, #tpu.memory_space<vmem>>, vector<16x378xbf16>
    tpu.vector_store %arg12[%c352, %c0_72], %68 {strides = array<i32>} : memref<432x378xbf16, #tpu.memory_space<vmem>>, vector<16x378xbf16>,
    %c0_73 = arith.constant 0 : index
    %c0_74 = arith.constant 0 : index
    %c212 = arith.constant 212 : index
    %70 = vector.load %arg1[%c0_73, %c0_74, %c212] : memref<1x16x600xbf16, #tpu.memory_space<vmem>>, vector<1x16x378xbf16>
    %71 = vector.shape_cast %70 : vector<1x16x378xbf16> to vector<16x378xbf16>
    %c368 = arith.constant 368 : index
    %c0_75 = arith.constant 0 : index
    %72 = vector.load %arg12[%c368, %c0_75] : memref<432x378xbf16, #tpu.memory_space<vmem>>, vector<16x378xbf16>
    tpu.vector_store %arg12[%c368, %c0_75], %71 {strides = array<i32>} : memref<432x378xbf16, #tpu.memory_space<vmem>>, vector<16x378xbf16>,
    %c0_76 = arith.constant 0 : index
    %c0_77 = arith.constant 0 : index
    %c220 = arith.constant 220 : index
    %73 = vector.load %arg1[%c0_76, %c0_77, %c220] : memref<1x16x600xbf16, #tpu.memory_space<vmem>>, vector<1x16x378xbf16>
    %74 = vector.shape_cast %73 : vector<1x16x378xbf16> to vector<16x378xbf16>
    %c384 = arith.constant 384 : index
    %c0_78 = arith.constant 0 : index
    %75 = vector.load %arg12[%c384, %c0_78] : memref<432x378xbf16, #tpu.memory_space<vmem>>, vector<16x378xbf16>
    tpu.vector_store %arg12[%c384, %c0_78], %74 {strides = array<i32>} : memref<432x378xbf16, #tpu.memory_space<vmem>>, vector<16x378xbf16>,
    %c0_79 = arith.constant 0 : index
    %c0_80 = arith.constant 0 : index
    %c221 = arith.constant 221 : index
    %76 = vector.load %arg1[%c0_79, %c0_80, %c221] : memref<1x16x600xbf16, #tpu.memory_space<vmem>>, vector<1x16x378xbf16>
    %77 = vector.shape_cast %76 : vector<1x16x378xbf16> to vector<16x378xbf16>
    %c400 = arith.constant 400 : index
    %c0_81 = arith.constant 0 : index
    %78 = vector.load %arg12[%c400, %c0_81] : memref<432x378xbf16, #tpu.memory_space<vmem>>, vector<16x378xbf16>
    tpu.vector_store %arg12[%c400, %c0_81], %77 {strides = array<i32>} : memref<432x378xbf16, #tpu.memory_space<vmem>>, vector<16x378xbf16>,
    %c0_82 = arith.constant 0 : index
    %c0_83 = arith.constant 0 : index
    %c222 = arith.constant 222 : index
    %79 = vector.load %arg1[%c0_82, %c0_83, %c222] : memref<1x16x600xbf16, #tpu.memory_space<vmem>>, vector<1x16x378xbf16>
    %80 = vector.shape_cast %79 : vector<1x16x378xbf16> to vector<16x378xbf16>
    %c416 = arith.constant 416 : index
    %c0_84 = arith.constant 0 : index
    %81 = vector.load %arg12[%c416, %c0_84] : memref<432x378xbf16, #tpu.memory_space<vmem>>, vector<16x378xbf16>
    tpu.vector_store %arg12[%c416, %c0_84], %80 {strides = array<i32>} : memref<432x378xbf16, #tpu.memory_space<vmem>>, vector<16x378xbf16>,
    %c0_85 = arith.constant 0 : index
    %c0_86 = arith.constant 0 : index
    %82 = vector.load %arg2[%c0_85, %c0_86] : memref<4x432xbf16, #tpu.memory_space<vmem>>, vector<4x432xbf16>
    %c0_87 = arith.constant 0 : index
    %c0_88 = arith.constant 0 : index
    %83 = vector.load %arg12[%c0_87, %c0_88] : memref<432x378xbf16, #tpu.memory_space<vmem>>, vector<432x378xbf16>
    %cst = arith.constant dense<0.000000e+00> : vector<4x378xf32>
    %84 = tpu.matmul %82, %83, %cst {dimension_numbers = #tpu.dot_dimension_numbers<[1], [0], [0], [1], [0, 0, 1, 1], [], []>} : vector<4x432xbf16>, vector<432x378xbf16>, vector<4x378xf32> -> vector<4x378xf32>
    %c0_89 = arith.constant 0 : index
    %c0_90 = arith.constant 0 : index
    %85 = vector.load %arg3[%c0_89, %c0_90] : memref<4x1xf32, #tpu.memory_space<vmem>>, vector<4x1xf32>
    %86 = vector.broadcast %85 : vector<4x1xf32> to vector<4x378xf32>
    %87 = arith.addf %84, %86 : vector<4x378xf32>
    %cst_91 = arith.constant 0.000000e+00 : f32
    %88 = vector.broadcast %cst_91 : f32 to vector<4x378xf32>
    %89 = arith.maximumf %87, %88 : vector<4x378xf32>
    %cst_92 = arith.constant 0.000000e+00 : bf16
    %90 = vector.broadcast %cst_92 : bf16 to vector<8x600xbf16>
    %c0_93 = arith.constant 0 : index
    %c0_94 = arith.constant 0 : index
    %91 = vector.load %arg10[%c0_93, %c0_94] : memref<8x600xbf16, #tpu.memory_space<vmem>>, vector<8x600xbf16>
    tpu.vector_store %arg10[%c0_93, %c0_94], %90 {strides = array<i32>} : memref<8x600xbf16, #tpu.memory_space<vmem>>, vector<8x600xbf16>,
    %92 = vector.broadcast %0 : vector<1x378xf32> to vector<4x378xf32>
    %93 = arith.mulf %89, %92 : vector<4x378xf32>
    %94 = arith.truncf %93 : vector<4x378xf32> to vector<4x378xbf16>
    %c0_95 = arith.constant 0 : index
    %c111_96 = arith.constant 111 : index
    %95 = vector.load %arg10[%c0_95, %c111_96] : memref<8x600xbf16, #tpu.memory_space<vmem>>, vector<4x378xbf16>
    tpu.vector_store %arg10[%c0_95, %c111_96], %94 {strides = array<i32>} : memref<8x600xbf16, #tpu.memory_space<vmem>>, vector<4x378xbf16>,
    %c0_97 = arith.constant 0 : index
    %c0_98 = arith.constant 0 : index
    %96 = vector.load %arg10[%c0_97, %c0_98] : memref<8x600xbf16, #tpu.memory_space<vmem>>, vector<8x378xbf16>
    %c0_99 = arith.constant 0 : index
    %c0_100 = arith.constant 0 : index
    %97 = vector.load %arg12[%c0_99, %c0_100] : memref<432x378xbf16, #tpu.memory_space<vmem>>, vector<8x378xbf16>
    tpu.vector_store %arg12[%c0_99, %c0_100], %96 {strides = array<i32>} : memref<432x378xbf16, #tpu.memory_space<vmem>>, vector<8x378xbf16>,
    %c0_101 = arith.constant 0 : index
    %c1_102 = arith.constant 1 : index
    %98 = vector.load %arg10[%c0_101, %c1_102] : memref<8x600xbf16, #tpu.memory_space<vmem>>, vector<8x378xbf16>
    %c8 = arith.constant 8 : index
    %c0_103 = arith.constant 0 : index
    %99 = vector.load %arg12[%c8, %c0_103] : memref<432x378xbf16, #tpu.memory_space<vmem>>, vector<8x378xbf16>
    tpu.vector_store %arg12[%c8, %c0_103], %98 {strides = array<i32>} : memref<432x378xbf16, #tpu.memory_space<vmem>>, vector<8x378xbf16>,
    %c0_104 = arith.constant 0 : index
    %c2_105 = arith.constant 2 : index
    %100 = vector.load %arg10[%c0_104, %c2_105] : memref<8x600xbf16, #tpu.memory_space<vmem>>, vector<8x378xbf16>
    %c16_106 = arith.constant 16 : index
    %c0_107 = arith.constant 0 : index
    %101 = vector.load %arg12[%c16_106, %c0_107] : memref<432x378xbf16, #tpu.memory_space<vmem>>, vector<8x378xbf16>
    tpu.vector_store %arg12[%c16_106, %c0_107], %100 {strides = array<i32>} : memref<432x378xbf16, #tpu.memory_space<vmem>>, vector<8x378xbf16>,
    %c0_108 = arith.constant 0 : index
    %c10_109 = arith.constant 10 : index
    %102 = vector.load %arg10[%c0_108, %c10_109] : memref<8x600xbf16, #tpu.memory_space<vmem>>, vector<8x378xbf16>
    %c24 = arith.constant 24 : index
    %c0_110 = arith.constant 0 : index
    %103 = vector.load %arg12[%c24, %c0_110] : memref<432x378xbf16, #tpu.memory_space<vmem>>, vector<8x378xbf16>
    tpu.vector_store %arg12[%c24, %c0_110], %102 {strides = array<i32>} : memref<432x378xbf16, #tpu.memory_space<vmem>>, vector<8x378xbf16>,
    %c0_111 = arith.constant 0 : index
    %c11_112 = arith.constant 11 : index
    %104 = vector.load %arg10[%c0_111, %c11_112] : memref<8x600xbf16, #tpu.memory_space<vmem>>, vector<8x378xbf16>
    %c32_113 = arith.constant 32 : index
    %c0_114 = arith.constant 0 : index
    %105 = vector.load %arg12[%c32_113, %c0_114] : memref<432x378xbf16, #tpu.memory_space<vmem>>, vector<8x378xbf16>
    tpu.vector_store %arg12[%c32_113, %c0_114], %104 {strides = array<i32>} : memref<432x378xbf16, #tpu.memory_space<vmem>>, vector<8x378xbf16>,
    %c0_115 = arith.constant 0 : index
    %c12_116 = arith.constant 12 : index
    %106 = vector.load %arg10[%c0_115, %c12_116] : memref<8x600xbf16, #tpu.memory_space<vmem>>, vector<8x378xbf16>
    %c40 = arith.constant 40 : index
    %c0_117 = arith.constant 0 : index
    %107 = vector.load %arg12[%c40, %c0_117] : memref<432x378xbf16, #tpu.memory_space<vmem>>, vector<8x378xbf16>
    tpu.vector_store %arg12[%c40, %c0_117], %106 {strides = array<i32>} : memref<432x378xbf16, #tpu.memory_space<vmem>>, vector<8x378xbf16>,
    %c0_118 = arith.constant 0 : index
    %c20_119 = arith.constant 20 : index
    %108 = vector.load %arg10[%c0_118, %c20_119] : memref<8x600xbf16, #tpu.memory_space<vmem>>, vector<8x378xbf16>
    %c48_120 = arith.constant 48 : index
    %c0_121 = arith.constant 0 : index
    %109 = vector.load %arg12[%c48_120, %c0_121] : memref<432x378xbf16, #tpu.memory_space<vmem>>, vector<8x378xbf16>
    tpu.vector_store %arg12[%c48_120, %c0_121], %108 {strides = array<i32>} : memref<432x378xbf16, #tpu.memory_space<vmem>>, vector<8x378xbf16>,
    %c0_122 = arith.constant 0 : index
    %c21_123 = arith.constant 21 : index
    %110 = vector.load %arg10[%c0_122, %c21_123] : memref<8x600xbf16, #tpu.memory_space<vmem>>, vector<8x378xbf16>
    %c56 = arith.constant 56 : index
    %c0_124 = arith.constant 0 : index
    %111 = vector.load %arg12[%c56, %c0_124] : memref<432x378xbf16, #tpu.memory_space<vmem>>, vector<8x378xbf16>
    tpu.vector_store %arg12[%c56, %c0_124], %110 {strides = array<i32>} : memref<432x378xbf16, #tpu.memory_space<vmem>>, vector<8x378xbf16>,
    %c0_125 = arith.constant 0 : index
    %c22_126 = arith.constant 22 : index
    %112 = vector.load %arg10[%c0_125, %c22_126] : memref<8x600xbf16, #tpu.memory_space<vmem>>, vector<8x378xbf16>
    %c64_127 = arith.constant 64 : index
    %c0_128 = arith.constant 0 : index
    %113 = vector.load %arg12[%c64_127, %c0_128] : memref<432x378xbf16, #tpu.memory_space<vmem>>, vector<8x378xbf16>
    tpu.vector_store %arg12[%c64_127, %c0_128], %112 {strides = array<i32>} : memref<432x378xbf16, #tpu.memory_space<vmem>>, vector<8x378xbf16>,
    %c0_129 = arith.constant 0 : index
    %c100_130 = arith.constant 100 : index
    %114 = vector.load %arg10[%c0_129, %c100_130] : memref<8x600xbf16, #tpu.memory_space<vmem>>, vector<8x378xbf16>
    %c72 = arith.constant 72 : index
    %c0_131 = arith.constant 0 : index
    %115 = vector.load %arg12[%c72, %c0_131] : memref<432x378xbf16, #tpu.memory_space<vmem>>, vector<8x378xbf16>
    tpu.vector_store %arg12[%c72, %c0_131], %114 {strides = array<i32>} : memref<432x378xbf16, #tpu.memory_space<vmem>>, vector<8x378xbf16>,
    %c0_132 = arith.constant 0 : index
    %c101_133 = arith.constant 101 : index
    %116 = vector.load %arg10[%c0_132, %c101_133] : memref<8x600xbf16, #tpu.memory_space<vmem>>, vector<8x378xbf16>
    %c80_134 = arith.constant 80 : index
    %c0_135 = arith.constant 0 : index
    %117 = vector.load %arg12[%c80_134, %c0_135] : memref<432x378xbf16, #tpu.memory_space<vmem>>, vector<8x378xbf16>
    tpu.vector_store %arg12[%c80_134, %c0_135], %116 {strides = array<i32>} : memref<432x378xbf16, #tpu.memory_space<vmem>>, vector<8x378xbf16>,
    %c0_136 = arith.constant 0 : index
    %c102_137 = arith.constant 102 : index
    %118 = vector.load %arg10[%c0_136, %c102_137] : memref<8x600xbf16, #tpu.memory_space<vmem>>, vector<8x378xbf16>
    %c88 = arith.constant 88 : index
    %c0_138 = arith.constant 0 : index
    %119 = vector.load %arg12[%c88, %c0_138] : memref<432x378xbf16, #tpu.memory_space<vmem>>, vector<8x378xbf16>
    tpu.vector_store %arg12[%c88, %c0_138], %118 {strides = array<i32>} : memref<432x378xbf16, #tpu.memory_space<vmem>>, vector<8x378xbf16>,
    %c0_139 = arith.constant 0 : index
    %c110_140 = arith.constant 110 : index
    %120 = vector.load %arg10[%c0_139, %c110_140] : memref<8x600xbf16, #tpu.memory_space<vmem>>, vector<8x378xbf16>
    %c96_141 = arith.constant 96 : index
    %c0_142 = arith.constant 0 : index
    %121 = vector.load %arg12[%c96_141, %c0_142] : memref<432x378xbf16, #tpu.memory_space<vmem>>, vector<8x378xbf16>
    tpu.vector_store %arg12[%c96_141, %c0_142], %120 {strides = array<i32>} : memref<432x378xbf16, #tpu.memory_space<vmem>>, vector<8x378xbf16>,
    %c0_143 = arith.constant 0 : index
    %c111_144 = arith.constant 111 : index
    %122 = vector.load %arg10[%c0_143, %c111_144] : memref<8x600xbf16, #tpu.memory_space<vmem>>, vector<8x378xbf16>
    %c104 = arith.constant 104 : index
    %c0_145 = arith.constant 0 : index
    %123 = vector.load %arg12[%c104, %c0_145] : memref<432x378xbf16, #tpu.memory_space<vmem>>, vector<8x378xbf16>
    tpu.vector_store %arg12[%c104, %c0_145], %122 {strides = array<i32>} : memref<432x378xbf16, #tpu.memory_space<vmem>>, vector<8x378xbf16>,
    %c0_146 = arith.constant 0 : index
    %c112_147 = arith.constant 112 : index
    %124 = vector.load %arg10[%c0_146, %c112_147] : memref<8x600xbf16, #tpu.memory_space<vmem>>, vector<8x378xbf16>
    %c112_148 = arith.constant 112 : index
    %c0_149 = arith.constant 0 : index
    %125 = vector.load %arg12[%c112_148, %c0_149] : memref<432x378xbf16, #tpu.memory_space<vmem>>, vector<8x378xbf16>
    tpu.vector_store %arg12[%c112_148, %c0_149], %124 {strides = array<i32>} : memref<432x378xbf16, #tpu.memory_space<vmem>>, vector<8x378xbf16>,
    %c0_150 = arith.constant 0 : index
    %c120_151 = arith.constant 120 : index
    %126 = vector.load %arg10[%c0_150, %c120_151] : memref<8x600xbf16, #tpu.memory_space<vmem>>, vector<8x378xbf16>
    %c120_152 = arith.constant 120 : index
    %c0_153 = arith.constant 0 : index
    %127 = vector.load %arg12[%c120_152, %c0_153] : memref<432x378xbf16, #tpu.memory_space<vmem>>, vector<8x378xbf16>
    tpu.vector_store %arg12[%c120_152, %c0_153], %126 {strides = array<i32>} : memref<432x378xbf16, #tpu.memory_space<vmem>>, vector<8x378xbf16>,
    %c0_154 = arith.constant 0 : index
    %c121_155 = arith.constant 121 : index
    %128 = vector.load %arg10[%c0_154, %c121_155] : memref<8x600xbf16, #tpu.memory_space<vmem>>, vector<8x378xbf16>
    %c128_156 = arith.constant 128 : index
    %c0_157 = arith.constant 0 : index
    %129 = vector.load %arg12[%c128_156, %c0_157] : memref<432x378xbf16, #tpu.memory_space<vmem>>, vector<8x378xbf16>
    tpu.vector_store %arg12[%c128_156, %c0_157], %128 {strides = array<i32>} : memref<432x378xbf16, #tpu.memory_space<vmem>>, vector<8x378xbf16>,
    %c0_158 = arith.constant 0 : index
    %c122_159 = arith.constant 122 : index
    %130 = vector.load %arg10[%c0_158, %c122_159] : memref<8x600xbf16, #tpu.memory_space<vmem>>, vector<8x378xbf16>
    %c136 = arith.constant 136 : index
    %c0_160 = arith.constant 0 : index
    %131 = vector.load %arg12[%c136, %c0_160] : memref<432x378xbf16, #tpu.memory_space<vmem>>, vector<8x378xbf16>
    tpu.vector_store %arg12[%c136, %c0_160], %130 {strides = array<i32>} : memref<432x378xbf16, #tpu.memory_space<vmem>>, vector<8x378xbf16>,
    %c0_161 = arith.constant 0 : index
    %c200_162 = arith.constant 200 : index
    %132 = vector.load %arg10[%c0_161, %c200_162] : memref<8x600xbf16, #tpu.memory_space<vmem>>, vector<8x378xbf16>
    %c144_163 = arith.constant 144 : index
    %c0_164 = arith.constant 0 : index
    %133 = vector.load %arg12[%c144_163, %c0_164] : memref<432x378xbf16, #tpu.memory_space<vmem>>, vector<8x378xbf16>
    tpu.vector_store %arg12[%c144_163, %c0_164], %132 {strides = array<i32>} : memref<432x378xbf16, #tpu.memory_space<vmem>>, vector<8x378xbf16>,
    %c0_165 = arith.constant 0 : index
    %c201_166 = arith.constant 201 : index
    %134 = vector.load %arg10[%c0_165, %c201_166] : memref<8x600xbf16, #tpu.memory_space<vmem>>, vector<8x378xbf16>
    %c152 = arith.constant 152 : index
    %c0_167 = arith.constant 0 : index
    %135 = vector.load %arg12[%c152, %c0_167] : memref<432x378xbf16, #tpu.memory_space<vmem>>, vector<8x378xbf16>
    tpu.vector_store %arg12[%c152, %c0_167], %134 {strides = array<i32>} : memref<432x378xbf16, #tpu.memory_space<vmem>>, vector<8x378xbf16>,
    %c0_168 = arith.constant 0 : index
    %c202_169 = arith.constant 202 : index
    %136 = vector.load %arg10[%c0_168, %c202_169] : memref<8x600xbf16, #tpu.memory_space<vmem>>, vector<8x378xbf16>
    %c160_170 = arith.constant 160 : index
    %c0_171 = arith.constant 0 : index
    %137 = vector.load %arg12[%c160_170, %c0_171] : memref<432x378xbf16, #tpu.memory_space<vmem>>, vector<8x378xbf16>
    tpu.vector_store %arg12[%c160_170, %c0_171], %136 {strides = array<i32>} : memref<432x378xbf16, #tpu.memory_space<vmem>>, vector<8x378xbf16>,
    %c0_172 = arith.constant 0 : index
    %c210_173 = arith.constant 210 : index
    %138 = vector.load %arg10[%c0_172, %c210_173] : memref<8x600xbf16, #tpu.memory_space<vmem>>, vector<8x378xbf16>
    %c168 = arith.constant 168 : index
    %c0_174 = arith.constant 0 : index
    %139 = vector.load %arg12[%c168, %c0_174] : memref<432x378xbf16, #tpu.memory_space<vmem>>, vector<8x378xbf16>
    tpu.vector_store %arg12[%c168, %c0_174], %138 {strides = array<i32>} : memref<432x378xbf16, #tpu.memory_space<vmem>>, vector<8x378xbf16>,
    %c0_175 = arith.constant 0 : index
    %c211_176 = arith.constant 211 : index
    %140 = vector.load %arg10[%c0_175, %c211_176] : memref<8x600xbf16, #tpu.memory_space<vmem>>, vector<8x378xbf16>
    %c176_177 = arith.constant 176 : index
    %c0_178 = arith.constant 0 : index
    %141 = vector.load %arg12[%c176_177, %c0_178] : memref<432x378xbf16, #tpu.memory_space<vmem>>, vector<8x378xbf16>
    tpu.vector_store %arg12[%c176_177, %c0_178], %140 {strides = array<i32>} : memref<432x378xbf16, #tpu.memory_space<vmem>>, vector<8x378xbf16>,
    %c0_179 = arith.constant 0 : index
    %c212_180 = arith.constant 212 : index
    %142 = vector.load %arg10[%c0_179, %c212_180] : memref<8x600xbf16, #tpu.memory_space<vmem>>, vector<8x378xbf16>
    %c184 = arith.constant 184 : index
    %c0_181 = arith.constant 0 : index
    %143 = vector.load %arg12[%c184, %c0_181] : memref<432x378xbf16, #tpu.memory_space<vmem>>, vector<8x378xbf16>
    tpu.vector_store %arg12[%c184, %c0_181], %142 {strides = array<i32>} : memref<432x378xbf16, #tpu.memory_space<vmem>>, vector<8x378xbf16>,
    %c0_182 = arith.constant 0 : index
    %c220_183 = arith.constant 220 : index
    %144 = vector.load %arg10[%c0_182, %c220_183] : memref<8x600xbf16, #tpu.memory_space<vmem>>, vector<8x378xbf16>
    %c192_184 = arith.constant 192 : index
    %c0_185 = arith.constant 0 : index
    %145 = vector.load %arg12[%c192_184, %c0_185] : memref<432x378xbf16, #tpu.memory_space<vmem>>, vector<8x378xbf16>
    tpu.vector_store %arg12[%c192_184, %c0_185], %144 {strides = array<i32>} : memref<432x378xbf16, #tpu.memory_space<vmem>>, vector<8x378xbf16>,
    %c0_186 = arith.constant 0 : index
    %c221_187 = arith.constant 221 : index
    %146 = vector.load %arg10[%c0_186, %c221_187] : memref<8x600xbf16, #tpu.memory_space<vmem>>, vector<8x378xbf16>
    %c200_188 = arith.constant 200 : index
    %c0_189 = arith.constant 0 : index
    %147 = vector.load %arg12[%c200_188, %c0_189] : memref<432x378xbf16, #tpu.memory_space<vmem>>, vector<8x378xbf16>
    tpu.vector_store %arg12[%c200_188, %c0_189], %146 {strides = array<i32>} : memref<432x378xbf16, #tpu.memory_space<vmem>>, vector<8x378xbf16>,
    %c0_190 = arith.constant 0 : index
    %c222_191 = arith.constant 222 : index
    %148 = vector.load %arg10[%c0_190, %c222_191] : memref<8x600xbf16, #tpu.memory_space<vmem>>, vector<8x378xbf16>
    %c208_192 = arith.constant 208 : index
    %c0_193 = arith.constant 0 : index
    %149 = vector.load %arg12[%c208_192, %c0_193] : memref<432x378xbf16, #tpu.memory_space<vmem>>, vector<8x378xbf16>
    tpu.vector_store %arg12[%c208_192, %c0_193], %148 {strides = array<i32>} : memref<432x378xbf16, #tpu.memory_space<vmem>>, vector<8x378xbf16>,
    %c0_194 = arith.constant 0 : index
    %c0_195 = arith.constant 0 : index
    %150 = vector.load %arg4[%c0_194, %c0_195] : memref<4x216xbf16, #tpu.memory_space<vmem>>, vector<4x216xbf16>
    %c0_196 = arith.constant 0 : index
    %c0_197 = arith.constant 0 : index
    %151 = vector.load %arg12[%c0_196, %c0_197] : memref<432x378xbf16, #tpu.memory_space<vmem>>, vector<216x378xbf16>
    %cst_198 = arith.constant dense<0.000000e+00> : vector<4x378xf32>
    %152 = tpu.matmul %150, %151, %cst_198 {dimension_numbers = #tpu.dot_dimension_numbers<[1], [0], [0], [1], [0, 0, 1, 1], [], []>} : vector<4x216xbf16>, vector<216x378xbf16>, vector<4x378xf32> -> vector<4x378xf32>
    %c0_199 = arith.constant 0 : index
    %c0_200 = arith.constant 0 : index
    %153 = vector.load %arg5[%c0_199, %c0_200] : memref<4x1xf32, #tpu.memory_space<vmem>>, vector<4x1xf32>
    %154 = vector.broadcast %153 : vector<4x1xf32> to vector<4x378xf32>
    %155 = arith.addf %152, %154 : vector<4x378xf32>
    %cst_201 = arith.constant 0.000000e+00 : f32
    %156 = vector.broadcast %cst_201 : f32 to vector<4x378xf32>
    %157 = arith.maximumf %155, %156 : vector<4x378xf32>
    %cst_202 = arith.constant 0.000000e+00 : bf16
    %158 = vector.broadcast %cst_202 : bf16 to vector<8x600xbf16>
    %c0_203 = arith.constant 0 : index
    %c0_204 = arith.constant 0 : index
    %159 = vector.load %arg11[%c0_203, %c0_204] : memref<8x600xbf16, #tpu.memory_space<vmem>>, vector<8x600xbf16>
    tpu.vector_store %arg11[%c0_203, %c0_204], %158 {strides = array<i32>} : memref<8x600xbf16, #tpu.memory_space<vmem>>, vector<8x600xbf16>,
    %160 = vector.broadcast %0 : vector<1x378xf32> to vector<4x378xf32>
    %161 = arith.mulf %157, %160 : vector<4x378xf32>
    %162 = arith.truncf %161 : vector<4x378xf32> to vector<4x378xbf16>
    %c0_205 = arith.constant 0 : index
    %c111_206 = arith.constant 111 : index
    %163 = vector.load %arg11[%c0_205, %c111_206] : memref<8x600xbf16, #tpu.memory_space<vmem>>, vector<4x378xbf16>
    tpu.vector_store %arg11[%c0_205, %c111_206], %162 {strides = array<i32>} : memref<8x600xbf16, #tpu.memory_space<vmem>>, vector<4x378xbf16>,
    %c0_207 = arith.constant 0 : index
    %c0_208 = arith.constant 0 : index
    %164 = vector.load %arg11[%c0_207, %c0_208] : memref<8x600xbf16, #tpu.memory_space<vmem>>, vector<8x378xbf16>
    %c0_209 = arith.constant 0 : index
    %c0_210 = arith.constant 0 : index
    %165 = vector.load %arg12[%c0_209, %c0_210] : memref<432x378xbf16, #tpu.memory_space<vmem>>, vector<8x378xbf16>
    tpu.vector_store %arg12[%c0_209, %c0_210], %164 {strides = array<i32>} : memref<432x378xbf16, #tpu.memory_space<vmem>>, vector<8x378xbf16>,
    %c0_211 = arith.constant 0 : index
    %c1_212 = arith.constant 1 : index
    %166 = vector.load %arg11[%c0_211, %c1_212] : memref<8x600xbf16, #tpu.memory_space<vmem>>, vector<8x378xbf16>
    %c8_213 = arith.constant 8 : index
    %c0_214 = arith.constant 0 : index
    %167 = vector.load %arg12[%c8_213, %c0_214] : memref<432x378xbf16, #tpu.memory_space<vmem>>, vector<8x378xbf16>
    tpu.vector_store %arg12[%c8_213, %c0_214], %166 {strides = array<i32>} : memref<432x378xbf16, #tpu.memory_space<vmem>>, vector<8x378xbf16>,
    %c0_215 = arith.constant 0 : index
    %c2_216 = arith.constant 2 : index
    %168 = vector.load %arg11[%c0_215, %c2_216] : memref<8x600xbf16, #tpu.memory_space<vmem>>, vector<8x378xbf16>
    %c16_217 = arith.constant 16 : index
    %c0_218 = arith.constant 0 : index
    %169 = vector.load %arg12[%c16_217, %c0_218] : memref<432x378xbf16, #tpu.memory_space<vmem>>, vector<8x378xbf16>
    tpu.vector_store %arg12[%c16_217, %c0_218], %168 {strides = array<i32>} : memref<432x378xbf16, #tpu.memory_space<vmem>>, vector<8x378xbf16>,
    %c0_219 = arith.constant 0 : index
    %c10_220 = arith.constant 10 : index
    %170 = vector.load %arg11[%c0_219, %c10_220] : memref<8x600xbf16, #tpu.memory_space<vmem>>, vector<8x378xbf16>
    %c24_221 = arith.constant 24 : index
    %c0_222 = arith.constant 0 : index
    %171 = vector.load %arg12[%c24_221, %c0_222] : memref<432x378xbf16, #tpu.memory_space<vmem>>, vector<8x378xbf16>
    tpu.vector_store %arg12[%c24_221, %c0_222], %170 {strides = array<i32>} : memref<432x378xbf16, #tpu.memory_space<vmem>>, vector<8x378xbf16>,
    %c0_223 = arith.constant 0 : index
    %c11_224 = arith.constant 11 : index
    %172 = vector.load %arg11[%c0_223, %c11_224] : memref<8x600xbf16, #tpu.memory_space<vmem>>, vector<8x378xbf16>
    %c32_225 = arith.constant 32 : index
    %c0_226 = arith.constant 0 : index
    %173 = vector.load %arg12[%c32_225, %c0_226] : memref<432x378xbf16, #tpu.memory_space<vmem>>, vector<8x378xbf16>
    tpu.vector_store %arg12[%c32_225, %c0_226], %172 {strides = array<i32>} : memref<432x378xbf16, #tpu.memory_space<vmem>>, vector<8x378xbf16>,
    %c0_227 = arith.constant 0 : index
    %c12_228 = arith.constant 12 : index
    %174 = vector.load %arg11[%c0_227, %c12_228] : memref<8x600xbf16, #tpu.memory_space<vmem>>, vector<8x378xbf16>
    %c40_229 = arith.constant 40 : index
    %c0_230 = arith.constant 0 : index
    %175 = vector.load %arg12[%c40_229, %c0_230] : memref<432x378xbf16, #tpu.memory_space<vmem>>, vector<8x378xbf16>
    tpu.vector_store %arg12[%c40_229, %c0_230], %174 {strides = array<i32>} : memref<432x378xbf16, #tpu.memory_space<vmem>>, vector<8x378xbf16>,
    %c0_231 = arith.constant 0 : index
    %c20_232 = arith.constant 20 : index
    %176 = vector.load %arg11[%c0_231, %c20_232] : memref<8x600xbf16, #tpu.memory_space<vmem>>, vector<8x378xbf16>
    %c48_233 = arith.constant 48 : index
    %c0_234 = arith.constant 0 : index
    %177 = vector.load %arg12[%c48_233, %c0_234] : memref<432x378xbf16, #tpu.memory_space<vmem>>, vector<8x378xbf16>
    tpu.vector_store %arg12[%c48_233, %c0_234], %176 {strides = array<i32>} : memref<432x378xbf16, #tpu.memory_space<vmem>>, vector<8x378xbf16>,
    %c0_235 = arith.constant 0 : index
    %c21_236 = arith.constant 21 : index
    %178 = vector.load %arg11[%c0_235, %c21_236] : memref<8x600xbf16, #tpu.memory_space<vmem>>, vector<8x378xbf16>
    %c56_237 = arith.constant 56 : index
    %c0_238 = arith.constant 0 : index
    %179 = vector.load %arg12[%c56_237, %c0_238] : memref<432x378xbf16, #tpu.memory_space<vmem>>, vector<8x378xbf16>
    tpu.vector_store %arg12[%c56_237, %c0_238], %178 {strides = array<i32>} : memref<432x378xbf16, #tpu.memory_space<vmem>>, vector<8x378xbf16>,
    %c0_239 = arith.constant 0 : index
    %c22_240 = arith.constant 22 : index
    %180 = vector.load %arg11[%c0_239, %c22_240] : memref<8x600xbf16, #tpu.memory_space<vmem>>, vector<8x378xbf16>
    %c64_241 = arith.constant 64 : index
    %c0_242 = arith.constant 0 : index
    %181 = vector.load %arg12[%c64_241, %c0_242] : memref<432x378xbf16, #tpu.memory_space<vmem>>, vector<8x378xbf16>
    tpu.vector_store %arg12[%c64_241, %c0_242], %180 {strides = array<i32>} : memref<432x378xbf16, #tpu.memory_space<vmem>>, vector<8x378xbf16>,
    %c0_243 = arith.constant 0 : index
    %c100_244 = arith.constant 100 : index
    %182 = vector.load %arg11[%c0_243, %c100_244] : memref<8x600xbf16, #tpu.memory_space<vmem>>, vector<8x378xbf16>
    %c72_245 = arith.constant 72 : index
    %c0_246 = arith.constant 0 : index
    %183 = vector.load %arg12[%c72_245, %c0_246] : memref<432x378xbf16, #tpu.memory_space<vmem>>, vector<8x378xbf16>
    tpu.vector_store %arg12[%c72_245, %c0_246], %182 {strides = array<i32>} : memref<432x378xbf16, #tpu.memory_space<vmem>>, vector<8x378xbf16>,
    %c0_247 = arith.constant 0 : index
    %c101_248 = arith.constant 101 : index
    %184 = vector.load %arg11[%c0_247, %c101_248] : memref<8x600xbf16, #tpu.memory_space<vmem>>, vector<8x378xbf16>
    %c80_249 = arith.constant 80 : index
    %c0_250 = arith.constant 0 : index
    %185 = vector.load %arg12[%c80_249, %c0_250] : memref<432x378xbf16, #tpu.memory_space<vmem>>, vector<8x378xbf16>
    tpu.vector_store %arg12[%c80_249, %c0_250], %184 {strides = array<i32>} : memref<432x378xbf16, #tpu.memory_space<vmem>>, vector<8x378xbf16>,
    %c0_251 = arith.constant 0 : index
    %c102_252 = arith.constant 102 : index
    %186 = vector.load %arg11[%c0_251, %c102_252] : memref<8x600xbf16, #tpu.memory_space<vmem>>, vector<8x378xbf16>
    %c88_253 = arith.constant 88 : index
    %c0_254 = arith.constant 0 : index
    %187 = vector.load %arg12[%c88_253, %c0_254] : memref<432x378xbf16, #tpu.memory_space<vmem>>, vector<8x378xbf16>
    tpu.vector_store %arg12[%c88_253, %c0_254], %186 {strides = array<i32>} : memref<432x378xbf16, #tpu.memory_space<vmem>>, vector<8x378xbf16>,
    %c0_255 = arith.constant 0 : index
    %c110_256 = arith.constant 110 : index
    %188 = vector.load %arg11[%c0_255, %c110_256] : memref<8x600xbf16, #tpu.memory_space<vmem>>, vector<8x378xbf16>
    %c96_257 = arith.constant 96 : index
    %c0_258 = arith.constant 0 : index
    %189 = vector.load %arg12[%c96_257, %c0_258] : memref<432x378xbf16, #tpu.memory_space<vmem>>, vector<8x378xbf16>
    tpu.vector_store %arg12[%c96_257, %c0_258], %188 {strides = array<i32>} : memref<432x378xbf16, #tpu.memory_space<vmem>>, vector<8x378xbf16>,
    %c0_259 = arith.constant 0 : index
    %c111_260 = arith.constant 111 : index
    %190 = vector.load %arg11[%c0_259, %c111_260] : memref<8x600xbf16, #tpu.memory_space<vmem>>, vector<8x378xbf16>
    %c104_261 = arith.constant 104 : index
    %c0_262 = arith.constant 0 : index
    %191 = vector.load %arg12[%c104_261, %c0_262] : memref<432x378xbf16, #tpu.memory_space<vmem>>, vector<8x378xbf16>
    tpu.vector_store %arg12[%c104_261, %c0_262], %190 {strides = array<i32>} : memref<432x378xbf16, #tpu.memory_space<vmem>>, vector<8x378xbf16>,
    %c0_263 = arith.constant 0 : index
    %c112_264 = arith.constant 112 : index
    %192 = vector.load %arg11[%c0_263, %c112_264] : memref<8x600xbf16, #tpu.memory_space<vmem>>, vector<8x378xbf16>
    %c112_265 = arith.constant 112 : index
    %c0_266 = arith.constant 0 : index
    %193 = vector.load %arg12[%c112_265, %c0_266] : memref<432x378xbf16, #tpu.memory_space<vmem>>, vector<8x378xbf16>
    tpu.vector_store %arg12[%c112_265, %c0_266], %192 {strides = array<i32>} : memref<432x378xbf16, #tpu.memory_space<vmem>>, vector<8x378xbf16>,
    %c0_267 = arith.constant 0 : index
    %c120_268 = arith.constant 120 : index
    %194 = vector.load %arg11[%c0_267, %c120_268] : memref<8x600xbf16, #tpu.memory_space<vmem>>, vector<8x378xbf16>
    %c120_269 = arith.constant 120 : index
    %c0_270 = arith.constant 0 : index
    %195 = vector.load %arg12[%c120_269, %c0_270] : memref<432x378xbf16, #tpu.memory_space<vmem>>, vector<8x378xbf16>
    tpu.vector_store %arg12[%c120_269, %c0_270], %194 {strides = array<i32>} : memref<432x378xbf16, #tpu.memory_space<vmem>>, vector<8x378xbf16>,
    %c0_271 = arith.constant 0 : index
    %c121_272 = arith.constant 121 : index
    %196 = vector.load %arg11[%c0_271, %c121_272] : memref<8x600xbf16, #tpu.memory_space<vmem>>, vector<8x378xbf16>
    %c128_273 = arith.constant 128 : index
    %c0_274 = arith.constant 0 : index
    %197 = vector.load %arg12[%c128_273, %c0_274] : memref<432x378xbf16, #tpu.memory_space<vmem>>, vector<8x378xbf16>
    tpu.vector_store %arg12[%c128_273, %c0_274], %196 {strides = array<i32>} : memref<432x378xbf16, #tpu.memory_space<vmem>>, vector<8x378xbf16>,
    %c0_275 = arith.constant 0 : index
    %c122_276 = arith.constant 122 : index
    %198 = vector.load %arg11[%c0_275, %c122_276] : memref<8x600xbf16, #tpu.memory_space<vmem>>, vector<8x378xbf16>
    %c136_277 = arith.constant 136 : index
    %c0_278 = arith.constant 0 : index
    %199 = vector.load %arg12[%c136_277, %c0_278] : memref<432x378xbf16, #tpu.memory_space<vmem>>, vector<8x378xbf16>
    tpu.vector_store %arg12[%c136_277, %c0_278], %198 {strides = array<i32>} : memref<432x378xbf16, #tpu.memory_space<vmem>>, vector<8x378xbf16>,
    %c0_279 = arith.constant 0 : index
    %c200_280 = arith.constant 200 : index
    %200 = vector.load %arg11[%c0_279, %c200_280] : memref<8x600xbf16, #tpu.memory_space<vmem>>, vector<8x378xbf16>
    %c144_281 = arith.constant 144 : index
    %c0_282 = arith.constant 0 : index
    %201 = vector.load %arg12[%c144_281, %c0_282] : memref<432x378xbf16, #tpu.memory_space<vmem>>, vector<8x378xbf16>
    tpu.vector_store %arg12[%c144_281, %c0_282], %200 {strides = array<i32>} : memref<432x378xbf16, #tpu.memory_space<vmem>>, vector<8x378xbf16>,
    %c0_283 = arith.constant 0 : index
    %c201_284 = arith.constant 201 : index
    %202 = vector.load %arg11[%c0_283, %c201_284] : memref<8x600xbf16, #tpu.memory_space<vmem>>, vector<8x378xbf16>
    %c152_285 = arith.constant 152 : index
    %c0_286 = arith.constant 0 : index
    %203 = vector.load %arg12[%c152_285, %c0_286] : memref<432x378xbf16, #tpu.memory_space<vmem>>, vector<8x378xbf16>
    tpu.vector_store %arg12[%c152_285, %c0_286], %202 {strides = array<i32>} : memref<432x378xbf16, #tpu.memory_space<vmem>>, vector<8x378xbf16>,
    %c0_287 = arith.constant 0 : index
    %c202_288 = arith.constant 202 : index
    %204 = vector.load %arg11[%c0_287, %c202_288] : memref<8x600xbf16, #tpu.memory_space<vmem>>, vector<8x378xbf16>
    %c160_289 = arith.constant 160 : index
    %c0_290 = arith.constant 0 : index
    %205 = vector.load %arg12[%c160_289, %c0_290] : memref<432x378xbf16, #tpu.memory_space<vmem>>, vector<8x378xbf16>
    tpu.vector_store %arg12[%c160_289, %c0_290], %204 {strides = array<i32>} : memref<432x378xbf16, #tpu.memory_space<vmem>>, vector<8x378xbf16>,
    %c0_291 = arith.constant 0 : index
    %c210_292 = arith.constant 210 : index
    %206 = vector.load %arg11[%c0_291, %c210_292] : memref<8x600xbf16, #tpu.memory_space<vmem>>, vector<8x378xbf16>
    %c168_293 = arith.constant 168 : index
    %c0_294 = arith.constant 0 : index
    %207 = vector.load %arg12[%c168_293, %c0_294] : memref<432x378xbf16, #tpu.memory_space<vmem>>, vector<8x378xbf16>
    tpu.vector_store %arg12[%c168_293, %c0_294], %206 {strides = array<i32>} : memref<432x378xbf16, #tpu.memory_space<vmem>>, vector<8x378xbf16>,
    %c0_295 = arith.constant 0 : index
    %c211_296 = arith.constant 211 : index
    %208 = vector.load %arg11[%c0_295, %c211_296] : memref<8x600xbf16, #tpu.memory_space<vmem>>, vector<8x378xbf16>
    %c176_297 = arith.constant 176 : index
    %c0_298 = arith.constant 0 : index
    %209 = vector.load %arg12[%c176_297, %c0_298] : memref<432x378xbf16, #tpu.memory_space<vmem>>, vector<8x378xbf16>
    tpu.vector_store %arg12[%c176_297, %c0_298], %208 {strides = array<i32>} : memref<432x378xbf16, #tpu.memory_space<vmem>>, vector<8x378xbf16>,
    %c0_299 = arith.constant 0 : index
    %c212_300 = arith.constant 212 : index
    %210 = vector.load %arg11[%c0_299, %c212_300] : memref<8x600xbf16, #tpu.memory_space<vmem>>, vector<8x378xbf16>
    %c184_301 = arith.constant 184 : index
    %c0_302 = arith.constant 0 : index
    %211 = vector.load %arg12[%c184_301, %c0_302] : memref<432x378xbf16, #tpu.memory_space<vmem>>, vector<8x378xbf16>
    tpu.vector_store %arg12[%c184_301, %c0_302], %210 {strides = array<i32>} : memref<432x378xbf16, #tpu.memory_space<vmem>>, vector<8x378xbf16>,
    %c0_303 = arith.constant 0 : index
    %c220_304 = arith.constant 220 : index
    %212 = vector.load %arg11[%c0_303, %c220_304] : memref<8x600xbf16, #tpu.memory_space<vmem>>, vector<8x378xbf16>
    %c192_305 = arith.constant 192 : index
    %c0_306 = arith.constant 0 : index
    %213 = vector.load %arg12[%c192_305, %c0_306] : memref<432x378xbf16, #tpu.memory_space<vmem>>, vector<8x378xbf16>
    tpu.vector_store %arg12[%c192_305, %c0_306], %212 {strides = array<i32>} : memref<432x378xbf16, #tpu.memory_space<vmem>>, vector<8x378xbf16>,
    %c0_307 = arith.constant 0 : index
    %c221_308 = arith.constant 221 : index
    %214 = vector.load %arg11[%c0_307, %c221_308] : memref<8x600xbf16, #tpu.memory_space<vmem>>, vector<8x378xbf16>
    %c200_309 = arith.constant 200 : index
    %c0_310 = arith.constant 0 : index
    %215 = vector.load %arg12[%c200_309, %c0_310] : memref<432x378xbf16, #tpu.memory_space<vmem>>, vector<8x378xbf16>
    tpu.vector_store %arg12[%c200_309, %c0_310], %214 {strides = array<i32>} : memref<432x378xbf16, #tpu.memory_space<vmem>>, vector<8x378xbf16>,
    %c0_311 = arith.constant 0 : index
    %c222_312 = arith.constant 222 : index
    %216 = vector.load %arg11[%c0_311, %c222_312] : memref<8x600xbf16, #tpu.memory_space<vmem>>, vector<8x378xbf16>
    %c208_313 = arith.constant 208 : index
    %c0_314 = arith.constant 0 : index
    %217 = vector.load %arg12[%c208_313, %c0_314] : memref<432x378xbf16, #tpu.memory_space<vmem>>, vector<8x378xbf16>
    tpu.vector_store %arg12[%c208_313, %c0_314], %216 {strides = array<i32>} : memref<432x378xbf16, #tpu.memory_space<vmem>>, vector<8x378xbf16>,
    %c0_315 = arith.constant 0 : index
    %c0_316 = arith.constant 0 : index
    %218 = vector.load %arg6[%c0_315, %c0_316] : memref<16x216xbf16, #tpu.memory_space<vmem>>, vector<16x216xbf16>
    %c0_317 = arith.constant 0 : index
    %c0_318 = arith.constant 0 : index
    %219 = vector.load %arg12[%c0_317, %c0_318] : memref<432x378xbf16, #tpu.memory_space<vmem>>, vector<216x378xbf16>
    %cst_319 = arith.constant dense<0.000000e+00> : vector<16x378xf32>
    %220 = tpu.matmul %218, %219, %cst_319 {dimension_numbers = #tpu.dot_dimension_numbers<[1], [0], [0], [1], [0, 0, 1, 1], [], []>} : vector<16x216xbf16>, vector<216x378xbf16>, vector<16x378xf32> -> vector<16x378xf32>
    %c0_320 = arith.constant 0 : index
    %c0_321 = arith.constant 0 : index
    %221 = vector.load %arg7[%c0_320, %c0_321] : memref<16x1xf32, #tpu.memory_space<vmem>>, vector<16x1xf32>
    %222 = vector.broadcast %221 : vector<16x1xf32> to vector<16x378xf32>
    %223 = arith.addf %220, %222 : vector<16x378xf32>
    %c0_322 = arith.constant 0 : index
    %c0_323 = arith.constant 0 : index
    %c111_324 = arith.constant 111 : index
    %224 = vector.load %arg1[%c0_322, %c0_323, %c111_324] : memref<1x16x600xbf16, #tpu.memory_space<vmem>>, vector<1x16x378xbf16>
    %225 = vector.shape_cast %224 : vector<1x16x378xbf16> to vector<16x378xbf16>
    %226 = arith.extf %225 : vector<16x378xbf16> to vector<16x378xf32>
    %227 = arith.addf %223, %226 : vector<16x378xf32>
    %cst_325 = arith.constant 0.000000e+00 : f32
    %228 = vector.broadcast %cst_325 : f32 to vector<16x378xf32>
    %229 = arith.maximumf %227, %228 : vector<16x378xf32>
    %c0_326 = arith.constant 0 : index
    %c0_327 = arith.constant 0 : index
    %c0_328 = arith.constant 0 : index
    %230 = vector.load %arg9[%c0_326, %c0_327, %c0_328] : memref<1x16x378xf32, #tpu.memory_space<vmem>>, vector<1x16x378xf32>
    %231 = vector.shape_cast %230 : vector<1x16x378xf32> to vector<16x378xf32>
    %232 = vector.shape_cast %229 : vector<16x378xf32> to vector<1x16x378xf32>
    tpu.vector_store %arg9[%c0_326, %c0_327, %c0_328], %232 {strides = array<i32>} : memref<1x16x378xf32, #tpu.memory_space<vmem>>, vector<1x16x378xf32>,
    return
  }
  func.func @transform_0(%arg0: i32) -> (i32, i32, i32) {
    %c0_i32 = arith.constant 0 : i32
    %c0_i32_0 = arith.constant 0 : i32
    %c0_i32_1 = arith.constant 0 : i32
    return %arg0, %c0_i32, %c0_i32_0 : i32, i32, i32
  }
  func.func @transform_1(%arg0: i32) -> (i32, i32) {
    %c0_i32 = arith.constant 0 : i32
    %c0_i32_0 = arith.constant 0 : i32
    %c0_i32_1 = arith.constant 0 : i32
    return %c0_i32, %c0_i32_0 : i32, i32
  }
  func.func @transform_2(%arg0: i32) -> (i32, i32) {
    %c0_i32 = arith.constant 0 : i32
    %c0_i32_0 = arith.constant 0 : i32
    %c0_i32_1 = arith.constant 0 : i32
    return %c0_i32, %c0_i32_0 : i32, i32
  }
  func.func @transform_3(%arg0: i32) -> (i32, i32) {
    %c0_i32 = arith.constant 0 : i32
    %c0_i32_0 = arith.constant 0 : i32
    %c0_i32_1 = arith.constant 0 : i32
    return %c0_i32, %c0_i32_0 : i32, i32
  }
  func.func @transform_4(%arg0: i32) -> (i32, i32) {
    %c0_i32 = arith.constant 0 : i32
    %c0_i32_0 = arith.constant 0 : i32
    %c0_i32_1 = arith.constant 0 : i32
    return %c0_i32, %c0_i32_0 : i32, i32
  }
  func.func @transform_5(%arg0: i32) -> (i32, i32) {
    %c0_i32 = arith.constant 0 : i32
    %c0_i32_0 = arith.constant 0 : i32
    %c0_i32_1 = arith.constant 0 : i32
    return %c0_i32, %c0_i32_0 : i32, i32
  }
  func.func @transform_6(%arg0: i32) -> (i32, i32) {
    %c0_i32 = arith.constant 0 : i32
    %c0_i32_0 = arith.constant 0 : i32
    %c0_i32_1 = arith.constant 0 : i32
    return %c0_i32, %c0_i32_0 : i32, i32
  }
  func.func @transform_7(%arg0: i32) -> (i32, i32) {
    %c0_i32 = arith.constant 0 : i32
    %c0_i32_0 = arith.constant 0 : i32
    %c0_i32_1 = arith.constant 0 : i32
    return %c0_i32, %c0_i32_0 : i32, i32
  }
  func.func @transform_8(%arg0: i32) -> (i32, i32, i32) {
    %c0_i32 = arith.constant 0 : i32
    %c0_i32_0 = arith.constant 0 : i32
    %c0_i32_1 = arith.constant 0 : i32
    return %arg0, %c0_i32, %c0_i32_0 : i32, i32, i32
  }
}

</mosaic_0001>

<llo_original>
// kernel: bottleneck_forward.1
$region0: #{bottleneck_forward.1}
  #allocation0 [shape = 'u32[]', space=smem, size = 0x4, offset = 0x4, fixed_abs, tag = 'smem constant byte address 0x4 - core index']
  #allocation1 [shape = 'u32[144,128]{1,0:T(1,128)}', space=vmem, size = 0x12000, scoped, tag = 'internal scratch']
  #allocation2 [shape = 'bf16[8,600]{1,0:T(8,128)(2,1)}', space=vmem, size = 0x2800, scoped, tag = 'scratch operand']
  #allocation3 [shape = 'bf16[8,600]{1,0:T(8,128)(2,1)}', space=vmem, size = 0x2800, scoped, tag = 'scratch operand']
  #allocation4 [shape = 'bf16[432,378]{1,0:T(16,128)(2,1)}', space=vmem, size = 0x51000, scoped, tag = 'scratch operand']
  %s0 = inlined_call_operand.vmem [shape: bf16[2,16,600], index: 0, kind: input, shape index: {}]
  %s1 = inlined_call_operand.vmem [shape: bf16[4,432], index: 1, kind: input, shape index: {}]
  %s2 = inlined_call_operand.vmem [shape: f32[4,1], index: 2, kind: input, shape index: {}]
  %s3 = inlined_call_operand.vmem [shape: bf16[4,216], index: 3, kind: input, shape index: {}]
  %s4 = inlined_call_operand.vmem [shape: f32[4,1], index: 4, kind: input, shape index: {}]
  %s5 = inlined_call_operand.vmem [shape: bf16[16,216], index: 5, kind: input, shape index: {}]
  %s6 = inlined_call_operand.vmem [shape: f32[16,1], index: 6, kind: input, shape index: {}]
  %s7 = inlined_call_operand.vmem [shape: f32[1,378], index: 7, kind: input, shape index: {}]
  %s8 = inlined_call_operand.vmem [shape: f32[2,16,378], index: 8, kind: output, shape index: {}]
  %s9 = sld [smem:[#allocation0]]
  $region65: #{bottleneck_forward.1} parent=0
    _
  %s11 = ssub.s32 1, %s9
  %s12 = scalar_select 0, %s11, %s9
  loop: start=0, step=1, limit=4
  $region2: #{bottleneck_forward.1} parent=0 // loop_pre_header
    _
  $region3: #{bottleneck_forward.1} parent=0 // loop_header
    %s14 = sphi 0, %s18
    %p15 = scmp.ge.s32.totalorder %s14, 4
    %s24 = sphi 0, %s26
    %s27 = sphi 0, %s24
    %s28 = sphi 0, %s27
    %s44 = sphi 0, %s28
    %s48 = sphi 0, %s48
    %s50 = sphi 0, %s48
    %s51 = sphi 0, %s50
    %s65 = sphi 0, %s51
    %s69 = sphi 0, %s69
    %s71 = sphi 0, %s69
    %s72 = sphi 0, %s71
    %s86 = sphi 0, %s72
    %s90 = sphi 0, %s90
    %s92 = sphi 0, %s90
    %s93 = sphi 0, %s92
    %s107 = sphi 0, %s93
    %s111 = sphi 0, %s111
    %s113 = sphi 0, %s111
    %s114 = sphi 0, %s113
    %s128 = sphi 0, %s114
    %s132 = sphi 0, %s132
    %s134 = sphi 0, %s132
    %s135 = sphi 0, %s134
    %s149 = sphi 0, %s135
    %s153 = sphi 0, %s153
    %s155 = sphi 0, %s153
    %s156 = sphi 0, %s155
    %s170 = sphi 0, %s156
    %s174 = sphi 0, %s174
    %s176 = sphi 0, %s174
    %s177 = sphi 0, %s176
    %s191 = sphi 0, %s177
    %s197 = sphi 0, %s199
    %s200 = sphi 0, %s197
    %s201 = sphi 0, %s200
    %s217 = sphi 0, %s201
  $region4: #{bottleneck_forward.1} parent=0 // loop_header_branch
    %17 = sbr.rel (%p15) target = $region8
  $region5: #{bottleneck_forward.1} parent=0 // loop_body
    %s19 = ssub.s32 %s14, 1
    %s20 = ssub.s32 %s14, 2
    %s21 = sadd.s32 %s14, 1
    %s22 = ssub.s32 %s14, %s21
    %p23 = scmp.eq.s32.totalorder %s22, 0
    %s25 = sadd.s32 %s24, 1
    %s26 = scalar_select %p23, %s24, %s25
    %p29 = pneg %p23
    %p30 = scmp.eq.s32.totalorder %s14, 1
    %p31 = por %p29, %p30
    %p32 = scmp.ne.s32.totalorder %s24, %s27
    %p33 = scmp.eq.s32.totalorder %s14, 0
    %p34 = por %p32, %p33
    %p35 = scmp.ne.s32.totalorder %s24, %s27
    %p36 = scmp.eq.s32.totalorder %s19, 1
    %p37 = por %p35, %p36
    %p38 = scmp.ne.s32.totalorder %s27, %s28
    %p39 = scmp.eq.s32.totalorder %s19, 0
    %p40 = por %p38, %p39
    %p41 = scmp.ne.s32.totalorder %s27, %s28
    %p42 = scmp.eq.s32.totalorder %s20, 1
    %p43 = por %p41, %p42
    %p45 = scmp.ne.s32.totalorder %s28, %s44
    %p46 = scmp.eq.s32.totalorder %s20, 0
    %p47 = por %p45, %p46
    %s49 = sadd.s32 %s48, 1
    %p52 = scmp.eq.s32.totalorder %s14, 1
    %p53 = scmp.ne.s32.totalorder %s48, %s50
    %p54 = scmp.eq.s32.totalorder %s14, 0
    %p55 = por %p53, %p54
    %p56 = scmp.ne.s32.totalorder %s48, %s50
    %p57 = scmp.eq.s32.totalorder %s19, 1
    %p58 = por %p56, %p57
    %p59 = scmp.ne.s32.totalorder %s50, %s51
    %p60 = scmp.eq.s32.totalorder %s19, 0
    %p61 = por %p59, %p60
    %p62 = scmp.ne.s32.totalorder %s50, %s51
    %p63 = scmp.eq.s32.totalorder %s20, 1
    %p64 = por %p62, %p63
    %p66 = scmp.ne.s32.totalorder %s51, %s65
    %p67 = scmp.eq.s32.totalorder %s20, 0
    %p68 = por %p66, %p67
    %s70 = sadd.s32 %s69, 1
    %p73 = scmp.eq.s32.totalorder %s14, 1
    %p74 = scmp.ne.s32.totalorder %s69, %s71
    %p75 = scmp.eq.s32.totalorder %s14, 0
    %p76 = por %p74, %p75
    %p77 = scmp.ne.s32.totalorder %s69, %s71
    %p78 = scmp.eq.s32.totalorder %s19, 1
    %p79 = por %p77, %p78
    %p80 = scmp.ne.s32.totalorder %s71, %s72
    %p81 = scmp.eq.s32.totalorder %s19, 0
    %p82 = por %p80, %p81
    %p83 = scmp.ne.s32.totalorder %s71, %s72
    %p84 = scmp.eq.s32.totalorder %s20, 1
    %p85 = por %p83, %p84
    %p87 = scmp.ne.s32.totalorder %s72, %s86
    %p88 = scmp.eq.s32.totalorder %s20, 0
    %p89 = por %p87, %p88
    %s91 = sadd.s32 %s90, 1
    %p94 = scmp.eq.s32.totalorder %s14, 1
    %p95 = scmp.ne.s32.totalorder %s90, %s92
    %p96 = scmp.eq.s32.totalorder %s14, 0
    %p97 = por %p95, %p96
    %p98 = scmp.ne.s32.totalorder %s90, %s92
    %p99 = scmp.eq.s32.totalorder %s19, 1
    %p100 = por %p98, %p99
    %p101 = scmp.ne.s32.totalorder %s92, %s93
    %p102 = scmp.eq.s32.totalorder %s19, 0
    %p103 = por %p101, %p102
    %p104 = scmp.ne.s32.totalorder %s92, %s93
    %p105 = scmp.eq.s32.totalorder %s20, 1
    %p106 = por %p104, %p105
    %p108 = scmp.ne.s32.totalorder %s93, %s107
    %p109 = scmp.eq.s32.totalorder %s20, 0
    %p110 = por %p108, %p109
    %s112 = sadd.s32 %s111, 1
    %p115 = scmp.eq.s32.totalorder %s14, 1
    %p116 = scmp.ne.s32.totalorder %s111, %s113
    %p117 = scmp.eq.s32.totalorder %s14, 0
    %p118 = por %p116, %p117
    %p119 = scmp.ne.s32.totalorder %s111, %s113
    %p120 = scmp.eq.s32.totalorder %s19, 1
    %p121 = por %p119, %p120
    %p122 = scmp.ne.s32.totalorder %s113, %s114
    %p123 = scmp.eq.s32.totalorder %s19, 0
    %p124 = por %p122, %p123
    %p125 = scmp.ne.s32.totalorder %s113, %s114
    %p126 = scmp.eq.s32.totalorder %s20, 1
    %p127 = por %p125, %p126
    %p129 = scmp.ne.s32.totalorder %s114, %s128
    %p130 = scmp.eq.s32.totalorder %s20, 0
    %p131 = por %p129, %p130
    %s133 = sadd.s32 %s132, 1
    %p136 = scmp.eq.s32.totalorder %s14, 1
    %p137 = scmp.ne.s32.totalorder %s132, %s134
    %p138 = scmp.eq.s32.totalorder %s14, 0
    %p139 = por %p137, %p138
    %p140 = scmp.ne.s32.totalorder %s132, %s134
    %p141 = scmp.eq.s32.totalorder %s19, 1
    %p142 = por %p140, %p141
    %p143 = scmp.ne.s32.totalorder %s134, %s135
    %p144 = scmp.eq.s32.totalorder %s19, 0
    %p145 = por %p143, %p144
    %p146 = scmp.ne.s32.totalorder %s134, %s135
    %p147 = scmp.eq.s32.totalorder %s20, 1
    %p148 = por %p146, %p147
    %p150 = scmp.ne.s32.totalorder %s135, %s149
    %p151 = scmp.eq.s32.totalorder %s20, 0
    %p152 = por %p150, %p151
    %s154 = sadd.s32 %s153, 1
    %p157 = scmp.eq.s32.totalorder %s14, 1
    %p158 = scmp.ne.s32.totalorder %s153, %s155
    %p159 = scmp.eq.s32.totalorder %s14, 0
    %p160 = por %p158, %p159
    %p161 = scmp.ne.s32.totalorder %s153, %s155
    %p162 = scmp.eq.s32.totalorder %s19, 1
    %p163 = por %p161, %p162
    %p164 = scmp.ne.s32.totalorder %s155, %s156
    %p165 = scmp.eq.s32.totalorder %s19, 0
    %p166 = por %p164, %p165
    %p167 = scmp.ne.s32.totalorder %s155, %s156
    %p168 = scmp.eq.s32.totalorder %s20, 1
    %p169 = por %p167, %p168
    %p171 = scmp.ne.s32.totalorder %s156, %s170
    %p172 = scmp.eq.s32.totalorder %s20, 0
    %p173 = por %p171, %p172
    %s175 = sadd.s32 %s174, 1
    %p178 = scmp.eq.s32.totalorder %s14, 1
    %p179 = scmp.ne.s32.totalorder %s174, %s176
    %p180 = scmp.eq.s32.totalorder %s14, 0
    %p181 = por %p179, %p180
    %p182 = scmp.ne.s32.totalorder %s174, %s176
    %p183 = scmp.eq.s32.totalorder %s19, 1
    %p184 = por %p182, %p183
    %p185 = scmp.ne.s32.totalorder %s176, %s177
    %p186 = scmp.eq.s32.totalorder %s19, 0
    %p187 = por %p185, %p186
    %p188 = scmp.ne.s32.totalorder %s176, %s177
    %p189 = scmp.eq.s32.totalorder %s20, 1
    %p190 = por %p188, %p189
    %p192 = scmp.ne.s32.totalorder %s177, %s191
    %p193 = scmp.eq.s32.totalorder %s20, 0
    %p194 = por %p192, %p193
    %s195 = ssub.s32 %s14, %s21
    %p196 = scmp.eq.s32.totalorder %s195, 0
    %s198 = sadd.s32 %s197, 1
    %s199 = scalar_select %p196, %s197, %s198
    %p202 = pneg %p196
    %p203 = scmp.eq.s32.totalorder %s14, 1
    %p204 = por %p202, %p203
    %p205 = scmp.ne.s32.totalorder %s197, %s200
    %p206 = scmp.eq.s32.totalorder %s14, 0
    %p207 = por %p205, %p206
    %p208 = scmp.ne.s32.totalorder %s197, %s200
    %p209 = scmp.eq.s32.totalorder %s19, 1
    %p210 = por %p208, %p209
    %p211 = scmp.ne.s32.totalorder %s200, %s201
    %p212 = scmp.eq.s32.totalorder %s19, 0
    %p213 = por %p211, %p212
    %p214 = scmp.ne.s32.totalorder %s200, %s201
    %p215 = scmp.eq.s32.totalorder %s20, 1
    %p216 = por %p214, %p215
    %p218 = scmp.ne.s32.totalorder %s201, %s217
    %p219 = scmp.eq.s32.totalorder %s20, 0
    %p220 = por %p218, %p219
    %p221 = scmp.le.s32.totalorder 1, %s14
    %p222 = scmp.lt.s32.totalorder %s14, 3
    %p223 = pnand %p221, %p222
    %p224 = pneg %p223
    // Predicated region
    $region9: #{bottleneck_forward.1} parent=5 // pred_check
      _
    $region10: #{bottleneck_forward.1} parent=5 // pred_check_branch
      %226 = sbr.rel (%p223) target = $region12
    $region11: #{bottleneck_forward.1} parent=5 // pred_region
      %s227 = ssub.s32 %s14, 1
      // Predicated region
      $region13: #{bottleneck_forward.1} parent=11 // pred_check
        %p228 = pneg %p61
      $region14: #{bottleneck_forward.1} parent=11 // pred_check_branch
        %230 = sbr.rel (%p228) target = $region16
      $region15: #{bottleneck_forward.1} parent=11 // pred_region
        _
      $region16: #{bottleneck_forward.1} parent=11 // pred_fallthru
        _
      // Predicated region
      $region17: #{bottleneck_forward.1} parent=11 // pred_check
        %p231 = pneg %p82
      $region18: #{bottleneck_forward.1} parent=11 // pred_check_branch
        %233 = sbr.rel (%p231) target = $region20
      $region19: #{bottleneck_forward.1} parent=11 // pred_region
        _
      $region20: #{bottleneck_forward.1} parent=11 // pred_fallthru
        _
      // Predicated region
      $region21: #{bottleneck_forward.1} parent=11 // pred_check
        %p234 = pneg %p103
      $region22: #{bottleneck_forward.1} parent=11 // pred_check_branch
        %236 = sbr.rel (%p234) target = $region24
      $region23: #{bottleneck_forward.1} parent=11 // pred_region
        _
      $region24: #{bottleneck_forward.1} parent=11 // pred_fallthru
        _
      // Predicated region
      $region25: #{bottleneck_forward.1} parent=11 // pred_check
        %p237 = pneg %p124
      $region26: #{bottleneck_forward.1} parent=11 // pred_check_branch
        %239 = sbr.rel (%p237) target = $region28
      $region27: #{bottleneck_forward.1} parent=11 // pred_region
        _
      $region28: #{bottleneck_forward.1} parent=11 // pred_fallthru
        _
      // Predicated region
      $region29: #{bottleneck_forward.1} parent=11 // pred_check
        %p240 = pneg %p145
      $region30: #{bottleneck_forward.1} parent=11 // pred_check_branch
        %242 = sbr.rel (%p240) target = $region32
      $region31: #{bottleneck_forward.1} parent=11 // pred_region
        _
      $region32: #{bottleneck_forward.1} parent=11 // pred_fallthru
        _
      // Predicated region
      $region33: #{bottleneck_forward.1} parent=11 // pred_check
        %p243 = pneg %p166
      $region34: #{bottleneck_forward.1} parent=11 // pred_check_branch
        %245 = sbr.rel (%p243) target = $region36
      $region35: #{bottleneck_forward.1} parent=11 // pred_region
        _
      $region36: #{bottleneck_forward.1} parent=11 // pred_fallthru
        _
      // Predicated region
      $region37: #{bottleneck_forward.1} parent=11 // pred_check
        %p246 = pneg %p187
      $region38: #{bottleneck_forward.1} parent=11 // pred_check_branch
        %248 = sbr.rel (%p246) target = $region40
      $region39: #{bottleneck_forward.1} parent=11 // pred_region
        _
      $region40: #{bottleneck_forward.1} parent=11 // pred_fallthru
        _
    $region12: #{bottleneck_forward.1} parent=5 // pred_fallthru
      _
    %p249 = scmp.lt.s32.totalorder %s14, 2
    // Predicated region
    $region41: #{bottleneck_forward.1} parent=5 // pred_check
      %p250 = pneg %p249
    $region42: #{bottleneck_forward.1} parent=5 // pred_check_branch
      %252 = sbr.rel (%p250) target = $region44
    $region43: #{bottleneck_forward.1} parent=5 // pred_region
      // Predicated region
      $region45: #{bottleneck_forward.1} parent=43 // pred_check
        %p253 = pneg %p34
      $region46: #{bottleneck_forward.1} parent=43 // pred_check_branch
        %255 = sbr.rel (%p253) target = $region48
      $region47: #{bottleneck_forward.1} parent=43 // pred_region
        %p256 = scmp.lt.s32.totalorder %s14, 1
        %s257 = scalar_select %p256, %s14, 1
        %s258 = smul.addr %s257, 10
        %s259 = smul.addr %s258, 4
        %s260 = scalar_lea.vmem %s0, %s259
      $region48: #{bottleneck_forward.1} parent=43 // pred_fallthru
        _
    $region44: #{bottleneck_forward.1} parent=5 // pred_fallthru
      _
    %p261 = scmp.le.s32.totalorder 1, %s14
    %p262 = scmp.lt.s32.totalorder %s14, 3
    %p263 = pnand %p261, %p262
    %p264 = pneg %p263
    // Predicated region
    $region49: #{bottleneck_forward.1} parent=5 // pred_check
      _
    $region50: #{bottleneck_forward.1} parent=5 // pred_check_branch
      %266 = sbr.rel (%p263) target = $region52
    $region51: #{bottleneck_forward.1} parent=5 // pred_region
      %s267 = ssub.s32 %s14, 1
      %p268 = scmp.lt.s32.totalorder %s19, 1
      %s269 = scalar_select %p268, %s19, 1
      %s270 = smul.addr %s269, 10
      %s271 = smul.addr %s270, 4
      %s272 = scalar_lea.vmem %s0, %s271
      %p273 = pneg %p40
      %p274 = pneg %p37
      %p275 = pneg %p61
      %p276 = pneg %p58
      %p277 = pneg %p82
      %p278 = pneg %p79
      %p279 = pneg %p103
      %p280 = pneg %p100
      %p281 = pneg %p124
      %p282 = pneg %p121
      %p283 = pneg %p145
      %p284 = pneg %p142
      %p285 = pneg %p166
      %p286 = pneg %p163
      %p287 = pneg %p187
      %p288 = pneg %p184
      %p289 = pneg %p213
      %p290 = pneg %p210
      %p291 = scmp.lt.s32.totalorder %s19, 1
      %s292 = scalar_select %p291, %s19, 1
      %s293 = smul.addr %s292, 6
      %s294 = smul.addr %s293, 8
      %s295 = scalar_lea.vmem %s8, %s294
      %p296 = scmp.lt.s32.totalorder %s19, 1
      %s297 = scalar_select %p296, %s19, 1
      %s298 = smul.addr %s297, 10
      %s299 = smul.addr %s298, 4
      %s300 = scalar_lea.vmem %s0, %s299
      %p301 = scmp.lt.s32.totalorder %s19, 1
      %s302 = scalar_select %p301, %s19, 1
      %s303 = smul.addr %s302, 6
      %s304 = smul.addr %s303, 8
      %s305 = scalar_lea.vmem %s8, %s304
      %v307 = vld [vmem:[%s7] sm:$0x7]
      %v308 = vld [vmem:[%s300] sm:$0xff]
      %v309 = vld [vmem:[%s300 + $0x8] sm:$0xf]
      %v310 = vld [vmem:[%s300 + $0x14] sm:$0xff]
      %v311 = vld [vmem:[%s300 + $0x1c] sm:$0xf]
      %v316 = vunpack.c.l.b16 %v308
      %v317 = vunpack.c.h.b16 %v308
      %v318 = vunpack.c.l.b16 %v309
      %v319 = vunpack.c.l.b16 %v310
      %v320 = vunpack.c.h.b16 %v310
      %v321 = vunpack.c.l.b16 %v311
      %v322 = vpack.c.b16 %v319, %v316
      %v323 = vpack.c.b16 %v320, %v317
      %v324 = vpack.c.b16 %v321, %v318
      %328 = vst [vmem:[#allocation4] sm:$0xff] %v322
      %329 = vst [vmem:[#allocation4 + $0x8] sm:$0xff] %v323
      %vm330 = vcmask 998400
      %331 = vst.msk [vmem:[#allocation4 + $0x10] sm:$0xff] %vm330, %v324
      %v332 = vld [vmem:[%s300] sm:$0xff]
      %v333 = vld [vmem:[%s300 + $0x8] sm:$0xf]
      %v334 = vld [vmem:[%s300 + $0x14] sm:$0xff]
      %v335 = vld [vmem:[%s300 + $0x1c] sm:$0xf]
      %v340 = vunpack.c.l.b16 %v332
      %v341 = vunpack.c.h.b16 %v332
      %v342 = vunpack.c.l.b16 %v333
      %v343 = vunpack.c.l.b16 %v334
      %v344 = vunpack.c.h.b16 %v334
      %v345 = vunpack.c.l.b16 %v335
      %v346 = vpack.c.b16 %v343, %v340
      %v347 = vpack.c.b16 %v344, %v341
      %v348 = vpack.c.b16 %v345, %v342
      %349 = vrot.lane.b32.xlu0 %v346, 127
      %v350 = vpop.permute.xlu0 %349
      %351 = vrot.lane.b32.xlu0 %v347, 127
      %v352 = vpop.permute.xlu0 %351
      %353 = vrot.lane.b32.xlu0 %v348, 127
      %v354 = vpop.permute.xlu0 %353
      %vm355 = vcmask 1039360
      %v356 = vsel %vm355, %v350, %v352
      %v357 = vsel %vm355, %v352, %v354
      %361 = vst [vmem:[#allocation4 + $0x18] sm:$0xff] %v356
      %362 = vst [vmem:[#allocation4 + $0x20] sm:$0xff] %v357
      %363 = vst.msk [vmem:[#allocation4 + $0x28] sm:$0xff] %vm330, %v354
      %v364 = vld [vmem:[%s300] sm:$0xff]
      %v365 = vld [vmem:[%s300 + $0x8] sm:$0xf]
      %v366 = vld [vmem:[%s300 + $0x14] sm:$0xff]
      %v367 = vld [vmem:[%s300 + $0x1c] sm:$0xf]
      %v372 = vunpack.c.l.b16 %v364
      %v373 = vunpack.c.h.b16 %v364
      %v374 = vunpack.c.l.b16 %v365
      %v375 = vunpack.c.l.b16 %v366
      %v376 = vunpack.c.h.b16 %v366
      %v377 = vunpack.c.l.b16 %v367
      %v378 = vpack.c.b16 %v375, %v372
      %v379 = vpack.c.b16 %v376, %v373
      %v380 = vpack.c.b16 %v377, %v374
      %381 = vrot.lane.b32.xlu0 %v378, 126
      %v382 = vpop.permute.xlu0 %381
      %383 = vrot.lane.b32.xlu0 %v379, 126
      %v384 = vpop.permute.xlu0 %383
      %385 = vrot.lane.b32.xlu0 %v380, 126
      %v386 = vpop.permute.xlu0 %385
      %vm387 = vcmask 1031168
      %v388 = vsel %vm387, %v382, %v384
      %v389 = vsel %vm387, %v384, %v386
      %393 = vst [vmem:[#allocation4 + $0x30] sm:$0xff] %v388
      %394 = vst [vmem:[#allocation4 + $0x38] sm:$0xff] %v389
      %395 = vst.msk [vmem:[#allocation4 + $0x40] sm:$0xff] %vm330, %v386
      %v396 = vld [vmem:[%s300] sm:$0xff]
      %v397 = vld [vmem:[%s300 + $0x8] sm:$0xff]
      %v398 = vld [vmem:[%s300 + $0x14] sm:$0xff]
      %v399 = vld [vmem:[%s300 + $0x1c] sm:$0xff]
      %v404 = vunpack.c.l.b16 %v396
      %v405 = vunpack.c.h.b16 %v396
      %v406 = vunpack.c.l.b16 %v397
      %v407 = vunpack.c.h.b16 %v397
      %v408 = vunpack.c.l.b16 %v398
      %v409 = vunpack.c.h.b16 %v398
      %v410 = vunpack.c.l.b16 %v399
      %v411 = vunpack.c.h.b16 %v399
      %v412 = vpack.c.b16 %v408, %v404
      %v413 = vpack.c.b16 %v409, %v405
      %v414 = vpack.c.b16 %v410, %v406
      %v415 = vpack.c.b16 %v411, %v407
      %416 = vrot.lane.b32.xlu0 %v412, 118
      %v417 = vpop.permute.xlu0 %416
      %418 = vrot.lane.b32.xlu0 %v413, 118
      %v419 = vpop.permute.xlu0 %418
      %420 = vrot.lane.b32.xlu0 %v414, 118
      %v421 = vpop.permute.xlu0 %420
      %422 = vrot.lane.b32.xlu0 %v415, 118
      %v423 = vpop.permute.xlu0 %422
      %vm424 = vcmask 965632
      %v425 = vsel %vm424, %v417, %v419
      %v426 = vsel %vm424, %v419, %v421
      %v427 = vsel %vm424, %v421, %v423
      %431 = vst [vmem:[#allocation4 + $0x48] sm:$0xff] %v425
      %432 = vst [vmem:[#allocation4 + $0x50] sm:$0xff] %v426
      %433 = vst.msk [vmem:[#allocation4 + $0x58] sm:$0xff] %vm330, %v427
      %v434 = vld [vmem:[%s300] sm:$0xff]
      %v435 = vld [vmem:[%s300 + $0x8] sm:$0xff]
      %v436 = vld [vmem:[%s300 + $0x14] sm:$0xff]
      %v437 = vld [vmem:[%s300 + $0x1c] sm:$0xff]
      %v442 = vunpack.c.l.b16 %v434
      %v443 = vunpack.c.h.b16 %v434
      %v444 = vunpack.c.l.b16 %v435
      %v445 = vunpack.c.h.b16 %v435
      %v446 = vunpack.c.l.b16 %v436
      %v447 = vunpack.c.h.b16 %v436
      %v448 = vunpack.c.l.b16 %v437
      %v449 = vunpack.c.h.b16 %v437
      %v450 = vpack.c.b16 %v446, %v442
      %v451 = vpack.c.b16 %v447, %v443
      %v452 = vpack.c.b16 %v448, %v444
      %v453 = vpack.c.b16 %v449, %v445
      %454 = vrot.lane.b32.xlu0 %v450, 117
      %v455 = vpop.permute.xlu0 %454
      %456 = vrot.lane.b32.xlu0 %v451, 117
      %v457 = vpop.permute.xlu0 %456
      %458 = vrot.lane.b32.xlu0 %v452, 117
      %v459 = vpop.permute.xlu0 %458
      %460 = vrot.lane.b32.xlu0 %v453, 117
      %v461 = vpop.permute.xlu0 %460
      %vm462 = vcmask 957440
      %v463 = vsel %vm462, %v455, %v457
      %v464 = vsel %vm462, %v457, %v459
      %v465 = vsel %vm462, %v459, %v461
      %469 = vst [vmem:[#allocation4 + $0x60] sm:$0xff] %v463
      %470 = vst [vmem:[#allocation4 + $0x68] sm:$0xff] %v464
      %471 = vst.msk [vmem:[#allocation4 + $0x70] sm:$0xff] %vm330, %v465
      %v472 = vld [vmem:[%s300] sm:$0xff]
      %v473 = vld [vmem:[%s300 + $0x8] sm:$0xff]
      %v474 = vld [vmem:[%s300 + $0x14] sm:$0xff]
      %v475 = vld [vmem:[%s300 + $0x1c] sm:$0xff]
      %v480 = vunpack.c.l.b16 %v472
      %v481 = vunpack.c.h.b16 %v472
      %v482 = vunpack.c.l.b16 %v473
      %v483 = vunpack.c.h.b16 %v473
      %v484 = vunpack.c.l.b16 %v474
      %v485 = vunpack.c.h.b16 %v474
      %v486 = vunpack.c.l.b16 %v475
      %v487 = vunpack.c.h.b16 %v475
      %v488 = vpack.c.b16 %v484, %v480
      %v489 = vpack.c.b16 %v485, %v481
      %v490 = vpack.c.b16 %v486, %v482
      %v491 = vpack.c.b16 %v487, %v483
      %492 = vrot.lane.b32.xlu0 %v488, 116
      %v493 = vpop.permute.xlu0 %492
      %494 = vrot.lane.b32.xlu0 %v489, 116
      %v495 = vpop.permute.xlu0 %494
      %496 = vrot.lane.b32.xlu0 %v490, 116
      %v497 = vpop.permute.xlu0 %496
      %498 = vrot.lane.b32.xlu0 %v491, 116
      %v499 = vpop.permute.xlu0 %498
      %vm500 = vcmask 949248
      %v501 = vsel %vm500, %v493, %v495
      %v502 = vsel %vm500, %v495, %v497
      %v503 = vsel %vm500, %v497, %v499
      %507 = vst [vmem:[#allocation4 + $0x78] sm:$0xff] %v501
      %508 = vst [vmem:[#allocation4 + $0x80] sm:$0xff] %v502
      %509 = vst.msk [vmem:[#allocation4 + $0x88] sm:$0xff] %vm330, %v503
      %v510 = vld [vmem:[%s300] sm:$0xff]
      %v511 = vld [vmem:[%s300 + $0x8] sm:$0xff]
      %v512 = vld [vmem:[%s300 + $0x14] sm:$0xff]
      %v513 = vld [vmem:[%s300 + $0x1c] sm:$0xff]
      %v518 = vunpack.c.l.b16 %v510
      %v519 = vunpack.c.h.b16 %v510
      %v520 = vunpack.c.l.b16 %v511
      %v521 = vunpack.c.h.b16 %v511
      %v522 = vunpack.c.l.b16 %v512
      %v523 = vunpack.c.h.b16 %v512
      %v524 = vunpack.c.l.b16 %v513
      %v525 = vunpack.c.h.b16 %v513
      %v526 = vpack.c.b16 %v522, %v518
      %v527 = vpack.c.b16 %v523, %v519
      %v528 = vpack.c.b16 %v524, %v520
      %v529 = vpack.c.b16 %v525, %v521
      %530 = vrot.lane.b32.xlu0 %v526, 108
      %v531 = vpop.permute.xlu0 %530
      %532 = vrot.lane.b32.xlu0 %v527, 108
      %v533 = vpop.permute.xlu0 %532
      %534 = vrot.lane.b32.xlu0 %v528, 108
      %v535 = vpop.permute.xlu0 %534
      %536 = vrot.lane.b32.xlu0 %v529, 108
      %v537 = vpop.permute.xlu0 %536
      %vm538 = vcmask 883712
      %v539 = vsel %vm538, %v531, %v533
      %v540 = vsel %vm538, %v533, %v535
      %v541 = vsel %vm538, %v535, %v537
      %545 = vst [vmem:[#allocation4 + $0x90] sm:$0xff] %v539
      %546 = vst [vmem:[#allocation4 + $0x98] sm:$0xff] %v540
      %547 = vst.msk [vmem:[#allocation4 + $0xa0] sm:$0xff] %vm330, %v541
      %v548 = vld [vmem:[%s300] sm:$0xff]
      %v549 = vld [vmem:[%s300 + $0x8] sm:$0xff]
      %v550 = vld [vmem:[%s300 + $0x14] sm:$0xff]
      %v551 = vld [vmem:[%s300 + $0x1c] sm:$0xff]
      %v556 = vunpack.c.l.b16 %v548
      %v557 = vunpack.c.h.b16 %v548
      %v558 = vunpack.c.l.b16 %v549
      %v559 = vunpack.c.h.b16 %v549
      %v560 = vunpack.c.l.b16 %v550
      %v561 = vunpack.c.h.b16 %v550
      %v562 = vunpack.c.l.b16 %v551
      %v563 = vunpack.c.h.b16 %v551
      %v564 = vpack.c.b16 %v560, %v556
      %v565 = vpack.c.b16 %v561, %v557
      %v566 = vpack.c.b16 %v562, %v558
      %v567 = vpack.c.b16 %v563, %v559
      %568 = vrot.lane.b32.xlu0 %v564, 107
      %v569 = vpop.permute.xlu0 %568
      %570 = vrot.lane.b32.xlu0 %v565, 107
      %v571 = vpop.permute.xlu0 %570
      %572 = vrot.lane.b32.xlu0 %v566, 107
      %v573 = vpop.permute.xlu0 %572
      %574 = vrot.lane.b32.xlu0 %v567, 107
      %v575 = vpop.permute.xlu0 %574
      %vm576 = vcmask 875520
      %v577 = vsel %vm576, %v569, %v571
      %v578 = vsel %vm576, %v571, %v573
      %v579 = vsel %vm576, %v573, %v575
      %583 = vst [vmem:[#allocation4 + $0xa8] sm:$0xff] %v577
      %584 = vst [vmem:[#allocation4 + $0xb0] sm:$0xff] %v578
      %585 = vst.msk [vmem:[#allocation4 + $0xb8] sm:$0xff] %vm330, %v579
      %v586 = vld [vmem:[%s300] sm:$0xff]
      %v587 = vld [vmem:[%s300 + $0x8] sm:$0xff]
      %v588 = vld [vmem:[%s300 + $0x14] sm:$0xff]
      %v589 = vld [vmem:[%s300 + $0x1c] sm:$0xff]
      %v594 = vunpack.c.l.b16 %v586
      %v595 = vunpack.c.h.b16 %v586
      %v596 = vunpack.c.l.b16 %v587
      %v597 = vunpack.c.h.b16 %v587
      %v598 = vunpack.c.l.b16 %v588
      %v599 = vunpack.c.h.b16 %v588
      %v600 = vunpack.c.l.b16 %v589
      %v601 = vunpack.c.h.b16 %v589
      %v602 = vpack.c.b16 %v598, %v594
      %v603 = vpack.c.b16 %v599, %v595
      %v604 = vpack.c.b16 %v600, %v596
      %v605 = vpack.c.b16 %v601, %v597
      %606 = vrot.lane.b32.xlu0 %v602, 106
      %v607 = vpop.permute.xlu0 %606
      %608 = vrot.lane.b32.xlu0 %v603, 106
      %v609 = vpop.permute.xlu0 %608
      %610 = vrot.lane.b32.xlu0 %v604, 106
      %v611 = vpop.permute.xlu0 %610
      %612 = vrot.lane.b32.xlu0 %v605, 106
      %v613 = vpop.permute.xlu0 %612
      %vm614 = vcmask 867328
      %v615 = vsel %vm614, %v607, %v609
      %v616 = vsel %vm614, %v609, %v611
      %v617 = vsel %vm614, %v611, %v613
      %621 = vst [vmem:[#allocation4 + $0xc0] sm:$0xff] %v615
      %622 = vst [vmem:[#allocation4 + $0xc8] sm:$0xff] %v616
      %623 = vst.msk [vmem:[#allocation4 + $0xd0] sm:$0xff] %vm330, %v617
      %v624 = vld [vmem:[%s300] sm:$0xff]
      %v625 = vld [vmem:[%s300 + $0x8] sm:$0xff]
      %v626 = vld [vmem:[%s300 + $0x14] sm:$0xff]
      %v627 = vld [vmem:[%s300 + $0x1c] sm:$0xff]
      %v632 = vunpack.c.l.b16 %v624
      %v633 = vunpack.c.h.b16 %v624
      %v634 = vunpack.c.l.b16 %v625
      %v635 = vunpack.c.h.b16 %v625
      %v636 = vunpack.c.l.b16 %v626
      %v637 = vunpack.c.h.b16 %v626
      %v638 = vunpack.c.l.b16 %v627
      %v639 = vunpack.c.h.b16 %v627
      %v640 = vpack.c.b16 %v636, %v632
      %v641 = vpack.c.b16 %v637, %v633
      %v642 = vpack.c.b16 %v638, %v634
      %v643 = vpack.c.b16 %v639, %v635
      %644 = vrot.lane.b32.xlu0 %v640, 28
      %v645 = vpop.permute.xlu0 %644
      %646 = vrot.lane.b32.xlu0 %v641, 28
      %v647 = vpop.permute.xlu0 %646
      %648 = vrot.lane.b32.xlu0 %v642, 28
      %v649 = vpop.permute.xlu0 %648
      %650 = vrot.lane.b32.xlu0 %v643, 28
      %v651 = vpop.permute.xlu0 %650
      %vm652 = vcmask 228352
      %v653 = vsel %vm652, %v645, %v647
      %v654 = vsel %vm652, %v647, %v649
      %v655 = vsel %vm652, %v649, %v651
      %659 = vst [vmem:[#allocation4 + $0xd8] sm:$0xff] %v653
      %660 = vst [vmem:[#allocation4 + $0xe0] sm:$0xff] %v654
      %661 = vst.msk [vmem:[#allocation4 + $0xe8] sm:$0xff] %vm330, %v655
      %v662 = vld [vmem:[%s300] sm:$0xff]
      %v663 = vld [vmem:[%s300 + $0x8] sm:$0xff]
      %v664 = vld [vmem:[%s300 + $0x14] sm:$0xff]
      %v665 = vld [vmem:[%s300 + $0x1c] sm:$0xff]
      %v670 = vunpack.c.l.b16 %v662
      %v671 = vunpack.c.h.b16 %v662
      %v672 = vunpack.c.l.b16 %v663
      %v673 = vunpack.c.h.b16 %v663
      %v674 = vunpack.c.l.b16 %v664
      %v675 = vunpack.c.h.b16 %v664
      %v676 = vunpack.c.l.b16 %v665
      %v677 = vunpack.c.h.b16 %v665
      %v678 = vpack.c.b16 %v674, %v670
      %v679 = vpack.c.b16 %v675, %v671
      %v680 = vpack.c.b16 %v676, %v672
      %v681 = vpack.c.b16 %v677, %v673
      %682 = vrot.lane.b32.xlu0 %v678, 27
      %v683 = vpop.permute.xlu0 %682
      %684 = vrot.lane.b32.xlu0 %v679, 27
      %v685 = vpop.permute.xlu0 %684
      %686 = vrot.lane.b32.xlu0 %v680, 27
      %v687 = vpop.permute.xlu0 %686
      %688 = vrot.lane.b32.xlu0 %v681, 27
      %v689 = vpop.permute.xlu0 %688
      %vm690 = vcmask 220160
      %v691 = vsel %vm690, %v683, %v685
      %v692 = vsel %vm690, %v685, %v687
      %v693 = vsel %vm690, %v687, %v689
      %697 = vst [vmem:[#allocation4 + $0xf0] sm:$0xff] %v691
      %698 = vst [vmem:[#allocation4 + $0xf8] sm:$0xff] %v692
      %699 = vst.msk [vmem:[#allocation4 + $0x100] sm:$0xff] %vm330, %v693
      %v700 = vld [vmem:[%s300] sm:$0xff]
      %v701 = vld [vmem:[%s300 + $0x8] sm:$0xff]
      %v702 = vld [vmem:[%s300 + $0x14] sm:$0xff]
      %v703 = vld [vmem:[%s300 + $0x1c] sm:$0xff]
      %v708 = vunpack.c.l.b16 %v700
      %v709 = vunpack.c.h.b16 %v700
      %v710 = vunpack.c.l.b16 %v701
      %v711 = vunpack.c.h.b16 %v701
      %v712 = vunpack.c.l.b16 %v702
      %v713 = vunpack.c.h.b16 %v702
      %v714 = vunpack.c.l.b16 %v703
      %v715 = vunpack.c.h.b16 %v703
      %v716 = vpack.c.b16 %v712, %v708
      %v717 = vpack.c.b16 %v713, %v709
      %v718 = vpack.c.b16 %v714, %v710
      %v719 = vpack.c.b16 %v715, %v711
      %720 = vrot.lane.b32.xlu0 %v716, 26
      %v721 = vpop.permute.xlu0 %720
      %722 = vrot.lane.b32.xlu0 %v717, 26
      %v723 = vpop.permute.xlu0 %722
      %724 = vrot.lane.b32.xlu0 %v718, 26
      %v725 = vpop.permute.xlu0 %724
      %726 = vrot.lane.b32.xlu0 %v719, 26
      %v727 = vpop.permute.xlu0 %726
      %vm728 = vcmask 211968
      %v729 = vsel %vm728, %v721, %v723
      %v730 = vsel %vm728, %v723, %v725
      %v731 = vsel %vm728, %v725, %v727
      %735 = vst [vmem:[#allocation4 + $0x108] sm:$0xff] %v729
      %736 = vst [vmem:[#allocation4 + $0x110] sm:$0xff] %v730
      %737 = vst.msk [vmem:[#allocation4 + $0x118] sm:$0xff] %vm330, %v731
      %v738 = vld [vmem:[%s300] sm:$0xff]
      %v739 = vld [vmem:[%s300 + $0x8] sm:$0xff]
      %v740 = vld [vmem:[%s300 + $0x14] sm:$0xff]
      %v741 = vld [vmem:[%s300 + $0x1c] sm:$0xff]
      %v746 = vunpack.c.l.b16 %v738
      %v747 = vunpack.c.h.b16 %v738
      %v748 = vunpack.c.l.b16 %v739
      %v749 = vunpack.c.h.b16 %v739
      %v750 = vunpack.c.l.b16 %v740
      %v751 = vunpack.c.h.b16 %v740
      %v752 = vunpack.c.l.b16 %v741
      %v753 = vunpack.c.h.b16 %v741
      %v754 = vpack.c.b16 %v750, %v746
      %v755 = vpack.c.b16 %v751, %v747
      %v756 = vpack.c.b16 %v752, %v748
      %v757 = vpack.c.b16 %v753, %v749
      %758 = vrot.lane.b32.xlu0 %v754, 18
      %v759 = vpop.permute.xlu0 %758
      %760 = vrot.lane.b32.xlu0 %v755, 18
      %v761 = vpop.permute.xlu0 %760
      %762 = vrot.lane.b32.xlu0 %v756, 18
      %v763 = vpop.permute.xlu0 %762
      %764 = vrot.lane.b32.xlu0 %v757, 18
      %v765 = vpop.permute.xlu0 %764
      %vm766 = vcmask 146432
      %v767 = vsel %vm766, %v759, %v761
      %v768 = vsel %vm766, %v761, %v763
      %v769 = vsel %vm766, %v763, %v765
      %773 = vst [vmem:[#allocation4 + $0x120] sm:$0xff] %v767
      %774 = vst [vmem:[#allocation4 + $0x128] sm:$0xff] %v768
      %775 = vst.msk [vmem:[#allocation4 + $0x130] sm:$0xff] %vm330, %v769
      %v776 = vld [vmem:[%s300] sm:$0xff]
      %v777 = vld [vmem:[%s300 + $0x8] sm:$0xff]
      %v778 = vld [vmem:[%s300 + $0x14] sm:$0xff]
      %v779 = vld [vmem:[%s300 + $0x1c] sm:$0xff]
      %v784 = vunpack.c.l.b16 %v776
      %v785 = vunpack.c.h.b16 %v776
      %v786 = vunpack.c.l.b16 %v777
      %v787 = vunpack.c.h.b16 %v777
      %v788 = vunpack.c.l.b16 %v778
      %v789 = vunpack.c.h.b16 %v778
      %v790 = vunpack.c.l.b16 %v779
      %v791 = vunpack.c.h.b16 %v779
      %v792 = vpack.c.b16 %v788, %v784
      %v793 = vpack.c.b16 %v789, %v785
      %v794 = vpack.c.b16 %v790, %v786
      %v795 = vpack.c.b16 %v791, %v787
      %796 = vrot.lane.b32.xlu0 %v792, 17
      %v797 = vpop.permute.xlu0 %796
      %798 = vrot.lane.b32.xlu0 %v793, 17
      %v799 = vpop.permute.xlu0 %798
      %800 = vrot.lane.b32.xlu0 %v794, 17
      %v801 = vpop.permute.xlu0 %800
      %802 = vrot.lane.b32.xlu0 %v795, 17
      %v803 = vpop.permute.xlu0 %802
      %vm804 = vcmask 138240
      %v805 = vsel %vm804, %v797, %v799
      %v806 = vsel %vm804, %v799, %v801
      %v807 = vsel %vm804, %v801, %v803
      %811 = vst [vmem:[#allocation4 + $0x138] sm:$0xff] %v805
      %812 = vst [vmem:[#allocation4 + $0x140] sm:$0xff] %v806
      %813 = vst.msk [vmem:[#allocation4 + $0x148] sm:$0xff] %vm330, %v807
      %v814 = vld [vmem:[%s300] sm:$0xff]
      %v815 = vld [vmem:[%s300 + $0x8] sm:$0xff]
      %v816 = vld [vmem:[%s300 + $0x14] sm:$0xff]
      %v817 = vld [vmem:[%s300 + $0x1c] sm:$0xff]
      %v822 = vunpack.c.l.b16 %v814
      %v823 = vunpack.c.h.b16 %v814
      %v824 = vunpack.c.l.b16 %v815
      %v825 = vunpack.c.h.b16 %v815
      %v826 = vunpack.c.l.b16 %v816
      %v827 = vunpack.c.h.b16 %v816
      %v828 = vunpack.c.l.b16 %v817
      %v829 = vunpack.c.h.b16 %v817
      %v830 = vpack.c.b16 %v826, %v822
      %v831 = vpack.c.b16 %v827, %v823
      %v832 = vpack.c.b16 %v828, %v824
      %v833 = vpack.c.b16 %v829, %v825
      %834 = vrot.lane.b32.xlu0 %v830, 16
      %v835 = vpop.permute.xlu0 %834
      %836 = vrot.lane.b32.xlu0 %v831, 16
      %v837 = vpop.permute.xlu0 %836
      %838 = vrot.lane.b32.xlu0 %v832, 16
      %v839 = vpop.permute.xlu0 %838
      %840 = vrot.lane.b32.xlu0 %v833, 16
      %v841 = vpop.permute.xlu0 %840
      %vm842 = vcmask 130048
      %v843 = vsel %vm842, %v835, %v837
      %v844 = vsel %vm842, %v837, %v839
      %v845 = vsel %vm842, %v839, %v841
      %849 = vst [vmem:[#allocation4 + $0x150] sm:$0xff] %v843
      %850 = vst [vmem:[#allocation4 + $0x158] sm:$0xff] %v844
      %851 = vst.msk [vmem:[#allocation4 + $0x160] sm:$0xff] %vm330, %v845
      %v852 = vld [vmem:[%s300] sm:$0xff]
      %v853 = vld [vmem:[%s300 + $0x8] sm:$0xff]
      %v854 = vld [vmem:[%s300 + $0x14] sm:$0xff]
      %v855 = vld [vmem:[%s300 + $0x1c] sm:$0xff]
      %v860 = vunpack.c.l.b16 %v852
      %v861 = vunpack.c.h.b16 %v852
      %v862 = vunpack.c.l.b16 %v853
      %v863 = vunpack.c.h.b16 %v853
      %v864 = vunpack.c.l.b16 %v854
      %v865 = vunpack.c.h.b16 %v854
      %v866 = vunpack.c.l.b16 %v855
      %v867 = vunpack.c.h.b16 %v855
      %v868 = vpack.c.b16 %v864, %v860
      %v869 = vpack.c.b16 %v865, %v861
      %v870 = vpack.c.b16 %v866, %v862
      %v871 = vpack.c.b16 %v867, %v863
      %872 = vrot.lane.b32.xlu0 %v868, 8
      %v873 = vpop.permute.xlu0 %872
      %874 = vrot.lane.b32.xlu0 %v869, 8
      %v875 = vpop.permute.xlu0 %874
      %876 = vrot.lane.b32.xlu0 %v870, 8
      %v877 = vpop.permute.xlu0 %876
      %878 = vrot.lane.b32.xlu0 %v871, 8
      %v879 = vpop.permute.xlu0 %878
      %vm880 = vcmask 64512
      %v881 = vsel %vm880, %v873, %v875
      %v882 = vsel %vm880, %v875, %v877
      %v883 = vsel %vm880, %v877, %v879
      %887 = vst [vmem:[#allocation4 + $0x168] sm:$0xff] %v881
      %888 = vst [vmem:[#allocation4 + $0x170] sm:$0xff] %v882
      %889 = vst.msk [vmem:[#allocation4 + $0x178] sm:$0xff] %vm330, %v883
      %v890 = vld [vmem:[%s300] sm:$0xff]
      %v891 = vld [vmem:[%s300 + $0x8] sm:$0xff]
      %v892 = vld [vmem:[%s300 + $0x14] sm:$0xff]
      %v893 = vld [vmem:[%s300 + $0x1c] sm:$0xff]
      %v898 = vunpack.c.l.b16 %v890
      %v899 = vunpack.c.h.b16 %v890
      %v900 = vunpack.c.l.b16 %v891
      %v901 = vunpack.c.h.b16 %v891
      %v902 = vunpack.c.l.b16 %v892
      %v903 = vunpack.c.h.b16 %v892
      %v904 = vunpack.c.l.b16 %v893
      %v905 = vunpack.c.h.b16 %v893
      %v906 = vpack.c.b16 %v902, %v898
      %v907 = vpack.c.b16 %v903, %v899
      %v908 = vpack.c.b16 %v904, %v900
      %v909 = vpack.c.b16 %v905, %v901
      %910 = vrot.lane.b32.xlu0 %v906, 7
      %v911 = vpop.permute.xlu0 %910
      %912 = vrot.lane.b32.xlu0 %v907, 7
      %v913 = vpop.permute.xlu0 %912
      %914 = vrot.lane.b32.xlu0 %v908, 7
      %v915 = vpop.permute.xlu0 %914
      %916 = vrot.lane.b32.xlu0 %v909, 7
      %v917 = vpop.permute.xlu0 %916
      %vm918 = vcmask 56320
      %v919 = vsel %vm918, %v911, %v913
      %v920 = vsel %vm918, %v913, %v915
      %v921 = vsel %vm918, %v915, %v917
      %925 = vst [vmem:[#allocation4 + $0x180] sm:$0xff] %v919
      %926 = vst [vmem:[#allocation4 + $0x188] sm:$0xff] %v920
      %927 = vst.msk [vmem:[#allocation4 + $0x190] sm:$0xff] %vm330, %v921
      %v928 = vld [vmem:[%s300] sm:$0xff]
      %v929 = vld [vmem:[%s300 + $0x8] sm:$0xff]
      %v930 = vld [vmem:[%s300 + $0x14] sm:$0xff]
      %v931 = vld [vmem:[%s300 + $0x1c] sm:$0xff]
      %v936 = vunpack.c.l.b16 %v928
      %v937 = vunpack.c.h.b16 %v928
      %v938 = vunpack.c.l.b16 %v929
      %v939 = vunpack.c.h.b16 %v929
      %v940 = vunpack.c.l.b16 %v930
      %v941 = vunpack.c.h.b16 %v930
      %v942 = vunpack.c.l.b16 %v931
      %v943 = vunpack.c.h.b16 %v931
      %v944 = vpack.c.b16 %v940, %v936
      %v945 = vpack.c.b16 %v941, %v937
      %v946 = vpack.c.b16 %v942, %v938
      %v947 = vpack.c.b16 %v943, %v939
      %948 = vrot.lane.b32.xlu0 %v944, 6
      %v949 = vpop.permute.xlu0 %948
      %950 = vrot.lane.b32.xlu0 %v945, 6
      %v951 = vpop.permute.xlu0 %950
      %952 = vrot.lane.b32.xlu0 %v946, 6
      %v953 = vpop.permute.xlu0 %952
      %954 = vrot.lane.b32.xlu0 %v947, 6
      %v955 = vpop.permute.xlu0 %954
      %vm956 = vcmask 48128
      %v957 = vsel %vm956, %v949, %v951
      %v958 = vsel %vm956, %v951, %v953
      %v959 = vsel %vm956, %v953, %v955
      %963 = vst [vmem:[#allocation4 + $0x198] sm:$0xff] %v957
      %964 = vst [vmem:[#allocation4 + $0x1a0] sm:$0xff] %v958
      %965 = vst.msk [vmem:[#allocation4 + $0x1a8] sm:$0xff] %vm330, %v959
      %v966 = vld [vmem:[%s300 + $0x4] sm:$0xff]
      %v967 = vld [vmem:[%s300 + $0xc] sm:$0xff]
      %v968 = vld [vmem:[%s300 + $0x18] sm:$0xff]
      %v969 = vld [vmem:[%s300 + $0x20] sm:$0xff]
      %v974 = vunpack.c.l.b16 %v966
      %v975 = vunpack.c.h.b16 %v966
      %v976 = vunpack.c.l.b16 %v967
      %v977 = vunpack.c.h.b16 %v967
      %v978 = vunpack.c.l.b16 %v968
      %v979 = vunpack.c.h.b16 %v968
      %v980 = vunpack.c.l.b16 %v969
      %v981 = vunpack.c.h.b16 %v969
      %v982 = vpack.c.b16 %v978, %v974
      %v983 = vpack.c.b16 %v979, %v975
      %v984 = vpack.c.b16 %v980, %v976
      %v985 = vpack.c.b16 %v981, %v977
      %986 = vrot.lane.b32.xlu0 %v982, 56
      %v987 = vpop.permute.xlu0 %986
      %988 = vrot.lane.b32.xlu0 %v983, 56
      %v989 = vpop.permute.xlu0 %988
      %990 = vrot.lane.b32.xlu0 %v984, 56
      %v991 = vpop.permute.xlu0 %990
      %992 = vrot.lane.b32.xlu0 %v985, 56
      %v993 = vpop.permute.xlu0 %992
      %vm994 = vcmask 457728
      %v995 = vsel %vm994, %v987, %v989
      %v996 = vsel %vm994, %v989, %v991
      %v997 = vsel %vm994, %v991, %v993
      %1001 = vst [vmem:[#allocation4 + $0x1b0] sm:$0xff] %v995
      %1002 = vst [vmem:[#allocation4 + $0x1b8] sm:$0xff] %v996
      %1003 = vst.msk [vmem:[#allocation4 + $0x1c0] sm:$0xff] %vm330, %v997
      %v1004 = vld [vmem:[%s300 + $0x4] sm:$0xff]
      %v1005 = vld [vmem:[%s300 + $0xc] sm:$0xff]
      %v1006 = vld [vmem:[%s300 + $0x18] sm:$0xff]
      %v1007 = vld [vmem:[%s300 + $0x20] sm:$0xff]
      %v1012 = vunpack.c.l.b16 %v1004
      %v1013 = vunpack.c.h.b16 %v1004
      %v1014 = vunpack.c.l.b16 %v1005
      %v1015 = vunpack.c.h.b16 %v1005
      %v1016 = vunpack.c.l.b16 %v1006
      %v1017 = vunpack.c.h.b16 %v1006
      %v1018 = vunpack.c.l.b16 %v1007
      %v1019 = vunpack.c.h.b16 %v1007
      %v1020 = vpack.c.b16 %v1016, %v1012
      %v1021 = vpack.c.b16 %v1017, %v1013
      %v1022 = vpack.c.b16 %v1018, %v1014
      %v1023 = vpack.c.b16 %v1019, %v1015
      %1024 = vrot.lane.b32.xlu0 %v1020, 55
      %v1025 = vpop.permute.xlu0 %1024
      %1026 = vrot.lane.b32.xlu0 %v1021, 55
      %v1027 = vpop.permute.xlu0 %1026
      %1028 = vrot.lane.b32.xlu0 %v1022, 55
      %v1029 = vpop.permute.xlu0 %1028
      %1030 = vrot.lane.b32.xlu0 %v1023, 55
      %v1031 = vpop.permute.xlu0 %1030
      %vm1032 = vcmask 449536
      %v1033 = vsel %vm1032, %v1025, %v1027
      %v1034 = vsel %vm1032, %v1027, %v1029
      %v1035 = vsel %vm1032, %v1029, %v1031
      %1039 = vst [vmem:[#allocation4 + $0x1c8] sm:$0xff] %v1033
      %1040 = vst [vmem:[#allocation4 + $0x1d0] sm:$0xff] %v1034
      %1041 = vst.msk [vmem:[#allocation4 + $0x1d8] sm:$0xff] %vm330, %v1035
      %v1042 = vld [vmem:[%s300 + $0x4] sm:$0xff]
      %v1043 = vld [vmem:[%s300 + $0xc] sm:$0xff]
      %v1044 = vld [vmem:[%s300 + $0x18] sm:$0xff]
      %v1045 = vld [vmem:[%s300 + $0x20] sm:$0xff]
      %v1050 = vunpack.c.l.b16 %v1042
      %v1051 = vunpack.c.h.b16 %v1042
      %v1052 = vunpack.c.l.b16 %v1043
      %v1053 = vunpack.c.h.b16 %v1043
      %v1054 = vunpack.c.l.b16 %v1044
      %v1055 = vunpack.c.h.b16 %v1044
      %v1056 = vunpack.c.l.b16 %v1045
      %v1057 = vunpack.c.h.b16 %v1045
      %v1058 = vpack.c.b16 %v1054, %v1050
      %v1059 = vpack.c.b16 %v1055, %v1051
      %v1060 = vpack.c.b16 %v1056, %v1052
      %v1061 = vpack.c.b16 %v1057, %v1053
      %1062 = vrot.lane.b32.xlu0 %v1058, 54
      %v1063 = vpop.permute.xlu0 %1062
      %1064 = vrot.lane.b32.xlu0 %v1059, 54
      %v1065 = vpop.permute.xlu0 %1064
      %1066 = vrot.lane.b32.xlu0 %v1060, 54
      %v1067 = vpop.permute.xlu0 %1066
      %1068 = vrot.lane.b32.xlu0 %v1061, 54
      %v1069 = vpop.permute.xlu0 %1068
      %vm1070 = vcmask 441344
      %v1071 = vsel %vm1070, %v1063, %v1065
      %v1072 = vsel %vm1070, %v1065, %v1067
      %v1073 = vsel %vm1070, %v1067, %v1069
      %1077 = vst [vmem:[#allocation4 + $0x1e0] sm:$0xff] %v1071
      %1078 = vst [vmem:[#allocation4 + $0x1e8] sm:$0xff] %v1072
      %1079 = vst.msk [vmem:[#allocation4 + $0x1f0] sm:$0xff] %vm330, %v1073
      %v1080 = vld [vmem:[%s300 + $0x4] sm:$0xff]
      %v1081 = vld [vmem:[%s300 + $0xc] sm:$0xff]
      %v1082 = vld [vmem:[%s300 + $0x18] sm:$0xff]
      %v1083 = vld [vmem:[%s300 + $0x20] sm:$0xff]
      %v1088 = vunpack.c.l.b16 %v1080
      %v1089 = vunpack.c.h.b16 %v1080
      %v1090 = vunpack.c.l.b16 %v1081
      %v1091 = vunpack.c.h.b16 %v1081
      %v1092 = vunpack.c.l.b16 %v1082
      %v1093 = vunpack.c.h.b16 %v1082
      %v1094 = vunpack.c.l.b16 %v1083
      %v1095 = vunpack.c.h.b16 %v1083
      %v1096 = vpack.c.b16 %v1092, %v1088
      %v1097 = vpack.c.b16 %v1093, %v1089
      %v1098 = vpack.c.b16 %v1094, %v1090
      %v1099 = vpack.c.b16 %v1095, %v1091
      %1100 = vrot.lane.b32.xlu0 %v1096, 46
      %v1101 = vpop.permute.xlu0 %1100
      %1102 = vrot.lane.b32.xlu0 %v1097, 46
      %v1103 = vpop.permute.xlu0 %1102
      %1104 = vrot.lane.b32.xlu0 %v1098, 46
      %v1105 = vpop.permute.xlu0 %1104
      %1106 = vrot.lane.b32.xlu0 %v1099, 46
      %v1107 = vpop.permute.xlu0 %1106
      %vm1108 = vcmask 375808
      %v1109 = vsel %vm1108, %v1101, %v1103
      %v1110 = vsel %vm1108, %v1103, %v1105
      %v1111 = vsel %vm1108, %v1105, %v1107
      %1115 = vst [vmem:[#allocation4 + $0x1f8] sm:$0xff] %v1109
      %1116 = vst [vmem:[#allocation4 + $0x200] sm:$0xff] %v1110
      %1117 = vst.msk [vmem:[#allocation4 + $0x208] sm:$0xff] %vm330, %v1111
      %v1118 = vld [vmem:[%s300 + $0x4] sm:$0xff]
      %v1119 = vld [vmem:[%s300 + $0xc] sm:$0xff]
      %v1120 = vld [vmem:[%s300 + $0x18] sm:$0xff]
      %v1121 = vld [vmem:[%s300 + $0x20] sm:$0xff]
      %v1126 = vunpack.c.l.b16 %v1118
      %v1127 = vunpack.c.h.b16 %v1118
      %v1128 = vunpack.c.l.b16 %v1119
      %v1129 = vunpack.c.h.b16 %v1119
      %v1130 = vunpack.c.l.b16 %v1120
      %v1131 = vunpack.c.h.b16 %v1120
      %v1132 = vunpack.c.l.b16 %v1121
      %v1133 = vunpack.c.h.b16 %v1121
      %v1134 = vpack.c.b16 %v1130, %v1126
      %v1135 = vpack.c.b16 %v1131, %v1127
      %v1136 = vpack.c.b16 %v1132, %v1128
      %v1137 = vpack.c.b16 %v1133, %v1129
      %1138 = vrot.lane.b32.xlu0 %v1134, 45
      %v1139 = vpop.permute.xlu0 %1138
      %1140 = vrot.lane.b32.xlu0 %v1135, 45
      %v1141 = vpop.permute.xlu0 %1140
      %1142 = vrot.lane.b32.xlu0 %v1136, 45
      %v1143 = vpop.permute.xlu0 %1142
      %1144 = vrot.lane.b32.xlu0 %v1137, 45
      %v1145 = vpop.permute.xlu0 %1144
      %vm1146 = vcmask 367616
      %v1147 = vsel %vm1146, %v1139, %v1141
      %v1148 = vsel %vm1146, %v1141, %v1143
      %v1149 = vsel %vm1146, %v1143, %v1145
      %1153 = vst [vmem:[#allocation4 + $0x210] sm:$0xff] %v1147
      %1154 = vst [vmem:[#allocation4 + $0x218] sm:$0xff] %v1148
      %1155 = vst.msk [vmem:[#allocation4 + $0x220] sm:$0xff] %vm330, %v1149
      %v1156 = vld [vmem:[%s300 + $0x4] sm:$0xff]
      %v1157 = vld [vmem:[%s300 + $0xc] sm:$0xff]
      %v1158 = vld [vmem:[%s300 + $0x18] sm:$0xff]
      %v1159 = vld [vmem:[%s300 + $0x20] sm:$0xff]
      %v1164 = vunpack.c.l.b16 %v1156
      %v1165 = vunpack.c.h.b16 %v1156
      %v1166 = vunpack.c.l.b16 %v1157
      %v1167 = vunpack.c.h.b16 %v1157
      %v1168 = vunpack.c.l.b16 %v1158
      %v1169 = vunpack.c.h.b16 %v1158
      %v1170 = vunpack.c.l.b16 %v1159
      %v1171 = vunpack.c.h.b16 %v1159
      %v1172 = vpack.c.b16 %v1168, %v1164
      %v1173 = vpack.c.b16 %v1169, %v1165
      %v1174 = vpack.c.b16 %v1170, %v1166
      %v1175 = vpack.c.b16 %v1171, %v1167
      %1176 = vrot.lane.b32.xlu0 %v1172, 44
      %v1177 = vpop.permute.xlu0 %1176
      %1178 = vrot.lane.b32.xlu0 %v1173, 44
      %v1179 = vpop.permute.xlu0 %1178
      %1180 = vrot.lane.b32.xlu0 %v1174, 44
      %v1181 = vpop.permute.xlu0 %1180
      %1182 = vrot.lane.b32.xlu0 %v1175, 44
      %v1183 = vpop.permute.xlu0 %1182
      %vm1184 = vcmask 359424
      %v1185 = vsel %vm1184, %v1177, %v1179
      %v1186 = vsel %vm1184, %v1179, %v1181
      %v1187 = vsel %vm1184, %v1181, %v1183
      %1191 = vst [vmem:[#allocation4 + $0x228] sm:$0xff] %v1185
      %1192 = vst [vmem:[#allocation4 + $0x230] sm:$0xff] %v1186
      %1193 = vst.msk [vmem:[#allocation4 + $0x238] sm:$0xff] %vm330, %v1187
      %v1194 = vld [vmem:[%s300 + $0x4] sm:$0xff]
      %v1195 = vld [vmem:[%s300 + $0xc] sm:$0xff]
      %v1196 = vld [vmem:[%s300 + $0x18] sm:$0xff]
      %v1197 = vld [vmem:[%s300 + $0x20] sm:$0xff]
      %v1202 = vunpack.c.l.b16 %v1194
      %v1203 = vunpack.c.h.b16 %v1194
      %v1204 = vunpack.c.l.b16 %v1195
      %v1205 = vunpack.c.h.b16 %v1195
      %v1206 = vunpack.c.l.b16 %v1196
      %v1207 = vunpack.c.h.b16 %v1196
      %v1208 = vunpack.c.l.b16 %v1197
      %v1209 = vunpack.c.h.b16 %v1197
      %v1210 = vpack.c.b16 %v1206, %v1202
      %v1211 = vpack.c.b16 %v1207, %v1203
      %v1212 = vpack.c.b16 %v1208, %v1204
      %v1213 = vpack.c.b16 %v1209, %v1205
      %1214 = vrot.lane.b32.xlu0 %v1210, 36
      %v1215 = vpop.permute.xlu0 %1214
      %1216 = vrot.lane.b32.xlu0 %v1211, 36
      %v1217 = vpop.permute.xlu0 %1216
      %1218 = vrot.lane.b32.xlu0 %v1212, 36
      %v1219 = vpop.permute.xlu0 %1218
      %1220 = vrot.lane.b32.xlu0 %v1213, 36
      %v1221 = vpop.permute.xlu0 %1220
      %vm1222 = vcmask 293888
      %v1223 = vsel %vm1222, %v1215, %v1217
      %v1224 = vsel %vm1222, %v1217, %v1219
      %v1225 = vsel %vm1222, %v1219, %v1221
      %1229 = vst [vmem:[#allocation4 + $0x240] sm:$0xff] %v1223
      %1230 = vst [vmem:[#allocation4 + $0x248] sm:$0xff] %v1224
      %1231 = vst.msk [vmem:[#allocation4 + $0x250] sm:$0xff] %vm330, %v1225
      %v1232 = vld [vmem:[%s300 + $0x4] sm:$0xff]
      %v1233 = vld [vmem:[%s300 + $0xc] sm:$0xff]
      %v1234 = vld [vmem:[%s300 + $0x18] sm:$0xff]
      %v1235 = vld [vmem:[%s300 + $0x20] sm:$0xff]
      %v1240 = vunpack.c.l.b16 %v1232
      %v1241 = vunpack.c.h.b16 %v1232
      %v1242 = vunpack.c.l.b16 %v1233
      %v1243 = vunpack.c.h.b16 %v1233
      %v1244 = vunpack.c.l.b16 %v1234
      %v1245 = vunpack.c.h.b16 %v1234
      %v1246 = vunpack.c.l.b16 %v1235
      %v1247 = vunpack.c.h.b16 %v1235
      %v1248 = vpack.c.b16 %v1244, %v1240
      %v1249 = vpack.c.b16 %v1245, %v1241
      %v1250 = vpack.c.b16 %v1246, %v1242
      %v1251 = vpack.c.b16 %v1247, %v1243
      %1252 = vrot.lane.b32.xlu0 %v1248, 35
      %v1253 = vpop.permute.xlu0 %1252
      %1254 = vrot.lane.b32.xlu0 %v1249, 35
      %v1255 = vpop.permute.xlu0 %1254
      %1256 = vrot.lane.b32.xlu0 %v1250, 35
      %v1257 = vpop.permute.xlu0 %1256
      %1258 = vrot.lane.b32.xlu0 %v1251, 35
      %v1259 = vpop.permute.xlu0 %1258
      %vm1260 = vcmask 285696
      %v1261 = vsel %vm1260, %v1253, %v1255
      %v1262 = vsel %vm1260, %v1255, %v1257
      %v1263 = vsel %vm1260, %v1257, %v1259
      %1267 = vst [vmem:[#allocation4 + $0x258] sm:$0xff] %v1261
      %1268 = vst [vmem:[#allocation4 + $0x260] sm:$0xff] %v1262
      %1269 = vst.msk [vmem:[#allocation4 + $0x268] sm:$0xff] %vm330, %v1263
      %v1270 = vld [vmem:[%s300 + $0x4] sm:$0xff]
      %v1271 = vld [vmem:[%s300 + $0xc] sm:$0xff]
      %v1272 = vld [vmem:[%s300 + $0x18] sm:$0xff]
      %v1273 = vld [vmem:[%s300 + $0x20] sm:$0xff]
      %v1278 = vunpack.c.l.b16 %v1270
      %v1279 = vunpack.c.h.b16 %v1270
      %v1280 = vunpack.c.l.b16 %v1271
      %v1281 = vunpack.c.h.b16 %v1271
      %v1282 = vunpack.c.l.b16 %v1272
      %v1283 = vunpack.c.h.b16 %v1272
      %v1284 = vunpack.c.l.b16 %v1273
      %v1285 = vunpack.c.h.b16 %v1273
      %v1286 = vpack.c.b16 %v1282, %v1278
      %v1287 = vpack.c.b16 %v1283, %v1279
      %v1288 = vpack.c.b16 %v1284, %v1280
      %v1289 = vpack.c.b16 %v1285, %v1281
      %1290 = vrot.lane.b32.xlu0 %v1286, 34
      %v1291 = vpop.permute.xlu0 %1290
      %1292 = vrot.lane.b32.xlu0 %v1287, 34
      %v1293 = vpop.permute.xlu0 %1292
      %1294 = vrot.lane.b32.xlu0 %v1288, 34
      %v1295 = vpop.permute.xlu0 %1294
      %1296 = vrot.lane.b32.xlu0 %v1289, 34
      %v1297 = vpop.permute.xlu0 %1296
      %vm1298 = vcmask 277504
      %v1299 = vsel %vm1298, %v1291, %v1293
      %v1300 = vsel %vm1298, %v1293, %v1295
      %v1301 = vsel %vm1298, %v1295, %v1297
      %1305 = vst [vmem:[#allocation4 + $0x270] sm:$0xff] %v1299
      %1306 = vst [vmem:[#allocation4 + $0x278] sm:$0xff] %v1300
      %1307 = vst.msk [vmem:[#allocation4 + $0x280] sm:$0xff] %vm330, %v1301
      %v1308 = vld [vmem:[%s1] sm:$0xff]
      %v1309 = vld [vmem:[#allocation4] sm:$0xff]
      %v1310 = vld [vmem:[#allocation4 + $0x8] sm:$0xff]
      %v1311 = vld [vmem:[#allocation4 + $0x10] sm:$0xff]
      %v1312 = vld [vmem:[#allocation4 + $0x18] sm:$0xff]
      %v1313 = vld [vmem:[#allocation4 + $0x20] sm:$0xff]
      %v1314 = vld [vmem:[#allocation4 + $0x28] sm:$0xff]
      %v1315 = vld [vmem:[#allocation4 + $0x30] sm:$0xff]
      %v1316 = vld [vmem:[#allocation4 + $0x38] sm:$0xff]
      %v1317 = vld [vmem:[#allocation4 + $0x40] sm:$0xff]
      %v1318 = vld [vmem:[#allocation4 + $0x48] sm:$0xff]
      %v1319 = vld [vmem:[#allocation4 + $0x50] sm:$0xff]
      %v1320 = vld [vmem:[#allocation4 + $0x58] sm:$0xff]
      %v1321 = vld [vmem:[#allocation4 + $0x60] sm:$0xff]
      %v1322 = vld [vmem:[#allocation4 + $0x68] sm:$0xff]
      %v1323 = vld [vmem:[#allocation4 + $0x70] sm:$0xff]
      %v1324 = vld [vmem:[#allocation4 + $0x78] sm:$0xff]
      %v1325 = vld [vmem:[#allocation4 + $0x80] sm:$0xff]
      %v1326 = vld [vmem:[#allocation4 + $0x88] sm:$0xff]
      %v1327 = vld [vmem:[#allocation4 + $0x90] sm:$0xff]
      %v1328 = vld [vmem:[#allocation4 + $0x98] sm:$0xff]
      %v1329 = vld [vmem:[#allocation4 + $0xa0] sm:$0xff]
      %v1330 = vld [vmem:[#allocation4 + $0xa8] sm:$0xff]
      %v1331 = vld [vmem:[#allocation4 + $0xb0] sm:$0xff]
      %v1332 = vld [vmem:[#allocation4 + $0xb8] sm:$0xff]
      %v1333 = vld [vmem:[#allocation4 + $0xc0] sm:$0xff]
      %v1334 = vld [vmem:[#allocation4 + $0xc8] sm:$0xff]
      %v1335 = vld [vmem:[#allocation4 + $0xd0] sm:$0xff]
      %v1336 = vld [vmem:[#allocation4 + $0xd8] sm:$0xff]
      %v1337 = vld [vmem:[#allocation4 + $0xe0] sm:$0xff]
      %v1338 = vld [vmem:[#allocation4 + $0xe8] sm:$0xff]
      %v1339 = vld [vmem:[#allocation4 + $0xf0] sm:$0xff]
      %v1340 = vld [vmem:[#allocation4 + $0xf8] sm:$0xff]
      %v1341 = vld [vmem:[#allocation4 + $0x100] sm:$0xff]
      %v1342 = vld [vmem:[#allocation4 + $0x108] sm:$0xff]
      %v1343 = vld [vmem:[#allocation4 + $0x110] sm:$0xff]
      %v1344 = vld [vmem:[#allocation4 + $0x118] sm:$0xff]
      %v1345 = vld [vmem:[#allocation4 + $0x120] sm:$0xff]
      %v1346 = vld [vmem:[#allocation4 + $0x128] sm:$0xff]
      %v1347 = vld [vmem:[#allocation4 + $0x130] sm:$0xff]
      %v1348 = vld [vmem:[#allocation4 + $0x138] sm:$0xff]
      %v1349 = vld [vmem:[#allocation4 + $0x140] sm:$0xff]
      %v1350 = vld [vmem:[#allocation4 + $0x148] sm:$0xff]
      %v1351 = vld [vmem:[#allocation4 + $0x150] sm:$0xff]
      %v1352 = vld [vmem:[#allocation4 + $0x158] sm:$0xff]
      %v1353 = vld [vmem:[#allocation4 + $0x160] sm:$0xff]
      %v1354 = vld [vmem:[#allocation4 + $0x168] sm:$0xff]
      %v1355 = vld [vmem:[#allocation4 + $0x170] sm:$0xff]
      %v1356 = vld [vmem:[#allocation4 + $0x178] sm:$0xff]
      %v1357 = vld [vmem:[#allocation4 + $0x180] sm:$0xff]
      %v1358 = vld [vmem:[#allocation4 + $0x188] sm:$0xff]
      %v1359 = vld [vmem:[#allocation4 + $0x190] sm:$0xff]
      %v1360 = vld [vmem:[#allocation4 + $0x198] sm:$0xff]
      %v1361 = vld [vmem:[#allocation4 + $0x1a0] sm:$0xff]
      %v1362 = vld [vmem:[#allocation4 + $0x1a8] sm:$0xff]
      %v1363 = vld [vmem:[#allocation4 + $0x1b0] sm:$0xff]
      %v1364 = vld [vmem:[#allocation4 + $0x1b8] sm:$0xff]
      %v1365 = vld [vmem:[#allocation4 + $0x1c0] sm:$0xff]
      %v1366 = vld [vmem:[#allocation4 + $0x1c8] sm:$0xff]
      %v1367 = vld [vmem:[#allocation4 + $0x1d0] sm:$0xff]
      %v1368 = vld [vmem:[#allocation4 + $0x1d8] sm:$0xff]
      %v1369 = vld [vmem:[#allocation4 + $0x1e0] sm:$0xff]
      %v1370 = vld [vmem:[#allocation4 + $0x1e8] sm:$0xff]
      %v1371 = vld [vmem:[#allocation4 + $0x1f0] sm:$0xff]
      %v1372 = vld [vmem:[#allocation4 + $0x1f8] sm:$0xff]
      %v1373 = vld [vmem:[#allocation4 + $0x200] sm:$0xff]
      %v1374 = vld [vmem:[#allocation4 + $0x208] sm:$0xff]
      %v1375 = vld [vmem:[#allocation4 + $0x210] sm:$0xff]
      %v1376 = vld [vmem:[#allocation4 + $0x218] sm:$0xff]
      %v1377 = vld [vmem:[#allocation4 + $0x220] sm:$0xff]
      %v1378 = vld [vmem:[#allocation4 + $0x228] sm:$0xff]
      %v1379 = vld [vmem:[#allocation4 + $0x230] sm:$0xff]
      %v1380 = vld [vmem:[#allocation4 + $0x238] sm:$0xff]
      %v1381 = vld [vmem:[#allocation4 + $0x240] sm:$0xff]
      %v1382 = vld [vmem:[#allocation4 + $0x248] sm:$0xff]
      %v1383 = vld [vmem:[#allocation4 + $0x250] sm:$0xff]
      %v1384 = vld [vmem:[#allocation4 + $0x258] sm:$0xff]
      %v1385 = vld [vmem:[#allocation4 + $0x260] sm:$0xff]
      %v1386 = vld [vmem:[#allocation4 + $0x268] sm:$0xff]
      %v1387 = vld [vmem:[#allocation4 + $0x270] sm:$0xff]
      %v1388 = vld [vmem:[#allocation4 + $0x278] sm:$0xff]
      %v1389 = vld [vmem:[#allocation4 + $0x280] sm:$0xff]
      %v1390 = vld [vmem:[%s2] sm:$0xf]
      %1392 = vset.pattern.permute.xlu0 0
      %1393 = vperm.xlu0 %1392, %v1390
      %v1394 = vpop.permute.xlu0 %1393
      %v1397 = vcombine.high %v1308, %v1308
      %v1399 = vunpack.c.l.s4 1983009808
      %v1400 = vunpack.c.0.s8 %v1399
      %v1401 = vlaneseq
      %v1402 = vshrl.u32 %v1401, 7
      %v1403 = vsub.s32 %v1400, %v1402
      %v1404 = vrot.slane %v1308, %v1403
      %v1406 = vunpack.c.l.s4 1983009808
      %v1407 = vunpack.c.0.s8 %v1406
      %v1408 = vlaneseq
      %v1409 = vshrl.u32 %v1408, 7
      %v1410 = vsub.s32 %v1407, %v1409
      %v1411 = vrot.slane %v1397, %v1410
      %v1412 = vcombine.high %v1404, %v1404
      %v1413 = vcombine.high %v1411, %v1411
      %vm1417 = vcmask 392192
      %v1419 = vsel %vm1417, %v1413, 0
      %1421 = vmatprep.subr.bf16.mxu0 %v1310
      %1422 = vmatpush1.bf16.msra.mxu0 %v1309
      %1423 = vmatprep.subr.bf16.mxu0 %v1313
      %1424 = vmatpush1.bf16.msra.mxu0 %v1312
      %1425 = vmatprep.subr.bf16.mxu0 %v1316
      %1426 = vmatpush1.bf16.msra.mxu0 %v1315
      %1427 = vmatprep.subr.bf16.mxu0 %v1319
      %1428 = vmatpush1.bf16.msra.mxu0 %v1318
      %1429 = vmatprep.subr.bf16.mxu0 %v1322
      %1430 = vmatpush1.bf16.msra.mxu0 %v1321
      %1431 = vmatprep.subr.bf16.mxu0 %v1325
      %1432 = vmatpush1.bf16.msra.mxu0 %v1324
      %1433 = vmatprep.subr.bf16.mxu0 %v1328
      %1434 = vmatpush1.bf16.msra.mxu0 %v1327
      %1435 = vmatprep.subr.bf16.mxu0 %v1331
      %1436 = vmatpush1.bf16.msra.mxu0 %v1330
      %1437 = vmatprep.subr.bf16.mxu0 %v1334
      %1438 = vmatpush1.bf16.msra.mxu0 %v1333
      %1439 = vmatprep.subr.bf16.mxu0 %v1337
      %1440 = vmatpush1.bf16.msra.mxu0 %v1336
      %1441 = vmatprep.subr.bf16.mxu0 %v1340
      %1442 = vmatpush1.bf16.msra.mxu0 %v1339
      %1443 = vmatprep.subr.bf16.mxu0 %v1343
      %1444 = vmatpush1.bf16.msra.mxu0 %v1342
      %1445 = vmatprep.subr.bf16.mxu0 %v1346
      %1446 = vmatpush1.bf16.msra.mxu0 %v1345
      %1447 = vmatprep.subr.bf16.mxu0 %v1349
      %1448 = vmatpush1.bf16.msra.mxu0 %v1348
      %1449 = vmatprep.subr.bf16.mxu0 %v1352
      %1450 = vmatpush1.bf16.msra.mxu0 %v1351
      %1451 = vmatprep.subr.bf16.mxu0 %v1355
      %1452 = vmatpush1.bf16.msra.mxu0 %v1354
      %1453 = vmatprep.mubr.bf16.mxu0 %v1412
      %1454 = vmatmul.mubr.bf16.gmra.mrb[0].mxu0 %v1404
      %v1455 = vpop.f32.mrb[0].mxu0
      %v1456 = vadd.f32 %v1394, %v1455
      %v1457 = vpop.f32.mrb[0].mxu0
      %v1458 = vadd.f32 %v1394, %v1457
      %v1459 = vpop.f32.mrb[0].mxu0
      %v1460 = vpop.f32.mrb[0].mxu0
      %1461 = vdwg.mxu0
      %1462 = vmatprep.subr.bf16.mxu0 %v1358
      %1463 = vmatpush1.bf16.msra.mxu0 %v1357
      %1464 = vmatprep.subr.bf16.mxu0 %v1361
      %1465 = vmatpush1.bf16.msra.mxu0 %v1360
      %1466 = vmatprep.subr.bf16.mxu0 %v1364
      %1467 = vmatpush1.bf16.msra.mxu0 %v1363
      %1468 = vmatprep.subr.bf16.mxu0 %v1367
      %1469 = vmatpush1.bf16.msra.mxu0 %v1366
      %1470 = vmatprep.subr.bf16.mxu0 %v1370
      %1471 = vmatpush1.bf16.msra.mxu0 %v1369
      %1472 = vmatprep.subr.bf16.mxu0 %v1373
      %1473 = vmatpush1.bf16.msra.mxu0 %v1372
      %1474 = vmatprep.subr.bf16.mxu0 %v1376
      %1475 = vmatpush1.bf16.msra.mxu0 %v1375
      %1476 = vmatprep.subr.bf16.mxu0 %v1379
      %1477 = vmatpush1.bf16.msra.mxu0 %v1378
      %1478 = vmatprep.subr.bf16.mxu0 %v1382
      %1479 = vmatpush1.bf16.msra.mxu0 %v1381
      %1480 = vmatprep.subr.bf16.mxu0 %v1385
      %1481 = vmatpush1.bf16.msra.mxu0 %v1384
      %1482 = vmatprep.subr.bf16.mxu0 %v1388
      %1483 = vmatpush1.bf16.msra.mxu0 %v1387
      %1484 = vmatprep.subr.bf16.mxu0 0
      %1485 = vmatpush1.bf16.msra.mxu0 0
      %1486 = vmatprep.subr.bf16.mxu0 0
      %1487 = vmatpush1.bf16.msra.mxu0 0
      %1488 = vmatprep.subr.bf16.mxu0 0
      %1489 = vmatpush1.bf16.msra.mxu0 0
      %1490 = vmatprep.subr.bf16.mxu0 0
      %1491 = vmatpush1.bf16.msra.mxu0 0
      %1492 = vmatprep.subr.bf16.mxu0 0
      %1493 = vmatpush1.bf16.msra.mxu0 0
      %1494 = vmatprep.mubr.bf16.mxu0 %v1419
      %1495 = vmatmul.mubr.bf16.gmra.mrb[0].mxu0 %v1411
      %v1496 = vpop.f32.mrb[0].mxu0
      %v1497 = vadd.f32 %v1456, %v1496
      %v1498 = vpop.f32.mrb[0].mxu0
      %v1499 = vadd.f32 %v1458, %v1498
      %v1500 = vpop.f32.mrb[0].mxu0
      %v1501 = vpop.f32.mrb[0].mxu0
      %1502 = vdwg.mxu0
      %1503 = vmatprep.subr.bf16.mxu0 0
      %1504 = vmatpush1.bf16.msra.mxu0 %v1311
      %1505 = vmatprep.subr.bf16.mxu0 0
      %1506 = vmatpush1.bf16.msra.mxu0 %v1314
      %1507 = vmatprep.subr.bf16.mxu0 0
      %1508 = vmatpush1.bf16.msra.mxu0 %v1317
      %1509 = vmatprep.subr.bf16.mxu0 0
      %1510 = vmatpush1.bf16.msra.mxu0 %v1320
      %1511 = vmatprep.subr.bf16.mxu0 0
      %1512 = vmatpush1.bf16.msra.mxu0 %v1323
      %1513 = vmatprep.subr.bf16.mxu0 0
      %1514 = vmatpush1.bf16.msra.mxu0 %v1326
      %1515 = vmatprep.subr.bf16.mxu0 0
      %1516 = vmatpush1.bf16.msra.mxu0 %v1329
      %1517 = vmatprep.subr.bf16.mxu0 0
      %1518 = vmatpush1.bf16.msra.mxu0 %v1332
      %1519 = vmatprep.subr.bf16.mxu0 0
      %1520 = vmatpush1.bf16.msra.mxu0 %v1335
      %1521 = vmatprep.subr.bf16.mxu0 0
      %1522 = vmatpush1.bf16.msra.mxu0 %v1338
      %1523 = vmatprep.subr.bf16.mxu0 0
      %1524 = vmatpush1.bf16.msra.mxu0 %v1341
      %1525 = vmatprep.subr.bf16.mxu0 0
      %1526 = vmatpush1.bf16.msra.mxu0 %v1344
      %1527 = vmatprep.subr.bf16.mxu0 0
      %1528 = vmatpush1.bf16.msra.mxu0 %v1347
      %1529 = vmatprep.subr.bf16.mxu0 0
      %1530 = vmatpush1.bf16.msra.mxu0 %v1350
      %1531 = vmatprep.subr.bf16.mxu0 0
      %1532 = vmatpush1.bf16.msra.mxu0 %v1353
      %1533 = vmatprep.subr.bf16.mxu0 0
      %1534 = vmatpush1.bf16.msra.mxu0 %v1356
      %1535 = vmatprep.mubr.bf16.mxu0 %v1412
      %1536 = vmatmul.mubr.bf16.gmra.mrb[0].mxu0 %v1404
      %v1537 = vpop.f32.mrb[0].mxu0
      %v1538 = vadd.f32 %v1394, %v1537
      %v1539 = vpop.f32.mrb[0].mxu0
      %v1540 = vpop.f32.mrb[0].mxu0
      %v1541 = vpop.f32.mrb[0].mxu0
      %1542 = vdwg.mxu0
      %1543 = vmatprep.subr.bf16.mxu0 0
      %1544 = vmatpush1.bf16.msra.mxu0 %v1359
      %1545 = vmatprep.subr.bf16.mxu0 0
      %1546 = vmatpush1.bf16.msra.mxu0 %v1362
      %1547 = vmatprep.subr.bf16.mxu0 0
      %1548 = vmatpush1.bf16.msra.mxu0 %v1365
      %1549 = vmatprep.subr.bf16.mxu0 0
      %1550 = vmatpush1.bf16.msra.mxu0 %v1368
      %1551 = vmatprep.subr.bf16.mxu0 0
      %1552 = vmatpush1.bf16.msra.mxu0 %v1371
      %1553 = vmatprep.subr.bf16.mxu0 0
      %1554 = vmatpush1.bf16.msra.mxu0 %v1374
      %1555 = vmatprep.subr.bf16.mxu0 0
      %1556 = vmatpush1.bf16.msra.mxu0 %v1377
      %1557 = vmatprep.subr.bf16.mxu0 0
      %1558 = vmatpush1.bf16.msra.mxu0 %v1380
      %1559 = vmatprep.subr.bf16.mxu0 0
      %1560 = vmatpush1.bf16.msra.mxu0 %v1383
      %1561 = vmatprep.subr.bf16.mxu0 0
      %1562 = vmatpush1.bf16.msra.mxu0 %v1386
      %1563 = vmatprep.subr.bf16.mxu0 0
      %1564 = vmatpush1.bf16.msra.mxu0 %v1389
      %1565 = vmatprep.subr.bf16.mxu0 0
      %1566 = vmatpush1.bf16.msra.mxu0 0
      %1567 = vmatprep.subr.bf16.mxu0 0
      %1568 = vmatpush1.bf16.msra.mxu0 0
      %1569 = vmatprep.subr.bf16.mxu0 0
      %1570 = vmatpush1.bf16.msra.mxu0 0
      %1571 = vmatprep.subr.bf16.mxu0 0
      %1572 = vmatpush1.bf16.msra.mxu0 0
      %1573 = vmatprep.subr.bf16.mxu0 0
      %1574 = vmatpush1.bf16.msra.mxu0 0
      %1575 = vmatprep.mubr.bf16.mxu0 %v1419
      %1576 = vmatmul.mubr.bf16.gmra.mrb[0].mxu0 %v1411
      %v1577 = vpop.f32.mrb[0].mxu0
      %v1578 = vadd.f32 %v1538, %v1577
      %v1579 = vpop.f32.mrb[0].mxu0
      %v1580 = vpop.f32.mrb[0].mxu0
      %v1581 = vpop.f32.mrb[0].mxu0
      %1582 = vdwg.mxu0
      %v1583 = vmax.f32 %v1497, 0.0
      %v1584 = vmax.f32 %v1499, 0.0
      %v1585 = vmax.f32 %v1578, 0.0
      %1586 = vst [vmem:[#allocation2] sm:$0xff] 0
      %1587 = vst [vmem:[#allocation2 + $0x8] sm:$0xff] 0
      %vm1588 = vcmask 715776
      %1589 = vst.msk [vmem:[#allocation2 + $0x10] sm:$0xf] %vm1588, 0
      %v1591 = vlaneseq
      %v1592 = vshrl.u32 %v1591, 7
      %v1593 = vsub.s32 0, %v1592
      %v1594 = vrot.slane %v307, %v1593
      %v1595 = vlaneseq
      %v1596 = vshrl.u32 %v1595, 7
      %v1597 = vsub.s32 1, %v1596
      %v1598 = vrot.slane %v307, %v1597
      %v1599 = vlaneseq
      %v1600 = vshrl.u32 %v1599, 7
      %v1601 = vsub.s32 2, %v1600
      %v1602 = vrot.slane %v307, %v1601
      %v1606 = vmul.f32 %v1583, %v1594
      %v1607 = vmul.f32 %v1584, %v1598
      %v1608 = vmul.f32 %v1585, %v1602
      %v1609 = vpack.c.bf16 %v1606, %v1606
      %v1610 = vpack.c.bf16 %v1607, %v1607
      %v1611 = vpack.c.bf16 %v1608, %v1608
      %v1615 = vunpack.c.l.b16 %v1609
      %v1616 = vunpack.c.l.b16 %v1610
      %v1617 = vunpack.c.l.b16 %v1611
      %v1618 = vpack.c.b16 %v1616, %v1615
      %v1619 = vpack.c.b16 %v1617, %v1617
      %1620 = vrot.lane.b32.xlu0 %v1618, 111
      %v1621 = vpop.permute.xlu0 %1620
      %1622 = vrot.lane.b32.xlu0 %v1619, 111
      %v1623 = vpop.permute.xlu0 %1622
      %v1624 = vrot.slane %v1621, 4
      %v1625 = vrot.slane %v1623, 4
      %vm1626 = vcmask 908288
      %v1627 = vsel %vm1626, %v1624, %v1621
      %vm1628 = vcmask 1043456
      %v1629 = vsel %vm1628, %v1624, %v1625
      %v1630 = vsel %vm1626, %v1629, %v1623
      %vm1633 = vcmask 1042296
      %vm1634 = vcmask 1045508
      %vm1635 = vmor %vm1634, %vm1633
      %1636 = vst.msk [vmem:[#allocation2] sm:$0x33] %vm1635, %v1627
      %vm1637 = vcmask 1041408
      %vm1638 = vcmask 857092
      %vm1639 = vmor %vm1638, %vm1637
      %1640 = vst.msk [vmem:[#allocation2 + $0x8] sm:$0x33] %vm1639, %v1630
      %v1641 = vld [vmem:[#allocation2] sm:$0xff]
      %v1642 = vld [vmem:[#allocation2 + $0x8] sm:$0xf]
      %v1645 = vunpack.c.l.b16 %v1641
      %v1646 = vunpack.c.h.b16 %v1641
      %v1647 = vunpack.c.l.b16 %v1642
      %v1648 = vpack.c.b16 %v1645, %v1645
      %v1649 = vpack.c.b16 %v1646, %v1646
      %v1650 = vpack.c.b16 %v1647, %v1647
      %1654 = vst [vmem:[#allocation4] sm:$0xf] %v1648
      %1655 = vst [vmem:[#allocation4 + $0x8] sm:$0xf] %v1649
      %vm1656 = vcmask 994304
      %1657 = vst.msk [vmem:[#allocation4 + $0x10] sm:$0xf] %vm1656, %v1650
      %v1658 = vld [vmem:[#allocation2] sm:$0xff]
      %v1659 = vld [vmem:[#allocation2 + $0x8] sm:$0xf]
      %v1662 = vunpack.c.l.b16 %v1658
      %v1663 = vunpack.c.h.b16 %v1658
      %v1664 = vunpack.c.l.b16 %v1659
      %v1665 = vpack.c.b16 %v1662, %v1662
      %v1666 = vpack.c.b16 %v1663, %v1663
      %v1667 = vpack.c.b16 %v1664, %v1664
      %1668 = vrot.lane.b32.xlu0 %v1665, 127
      %v1669 = vpop.permute.xlu0 %1668
      %1670 = vrot.lane.b32.xlu0 %v1666, 127
      %v1671 = vpop.permute.xlu0 %1670
      %1672 = vrot.lane.b32.xlu0 %v1667, 127
      %v1673 = vpop.permute.xlu0 %1672
      %v1674 = vsel %vm355, %v1669, %v1671
      %v1675 = vsel %vm355, %v1671, %v1673
      %1679 = vst [vmem:[#allocation4] sm:$0xf0] %v1674
      %1680 = vst [vmem:[#allocation4 + $0x8] sm:$0xf0] %v1675
      %vm1681 = vcmask 998404
      %1682 = vst.msk [vmem:[#allocation4 + $0x10] sm:$0xf0] %vm1681, %v1673
      %v1683 = vld [vmem:[#allocation2] sm:$0xff]
      %v1684 = vld [vmem:[#allocation2 + $0x8] sm:$0xf]
      %v1687 = vunpack.c.l.b16 %v1683
      %v1688 = vunpack.c.h.b16 %v1683
      %v1689 = vunpack.c.l.b16 %v1684
      %v1690 = vpack.c.b16 %v1687, %v1687
      %v1691 = vpack.c.b16 %v1688, %v1688
      %v1692 = vpack.c.b16 %v1689, %v1689
      %1693 = vrot.lane.b32.xlu0 %v1690, 126
      %v1694 = vpop.permute.xlu0 %1693
      %1695 = vrot.lane.b32.xlu0 %v1691, 126
      %v1696 = vpop.permute.xlu0 %1695
      %1697 = vrot.lane.b32.xlu0 %v1692, 126
      %v1698 = vpop.permute.xlu0 %1697
      %v1699 = vsel %vm387, %v1694, %v1696
      %v1700 = vsel %vm387, %v1696, %v1698
      %1704 = vst [vmem:[#allocation4 + $0x18] sm:$0xf] %v1699
      %1705 = vst [vmem:[#allocation4 + $0x20] sm:$0xf] %v1700
      %1706 = vst.msk [vmem:[#allocation4 + $0x28] sm:$0xf] %vm1656, %v1698
      %v1707 = vld [vmem:[#allocation2] sm:$0xff]
      %v1708 = vld [vmem:[#allocation2 + $0x8] sm:$0xff]
      %v1711 = vunpack.c.l.b16 %v1707
      %v1712 = vunpack.c.h.b16 %v1707
      %v1713 = vunpack.c.l.b16 %v1708
      %v1714 = vunpack.c.h.b16 %v1708
      %v1715 = vpack.c.b16 %v1711, %v1711
      %v1716 = vpack.c.b16 %v1712, %v1712
      %v1717 = vpack.c.b16 %v1713, %v1713
      %v1718 = vpack.c.b16 %v1714, %v1714
      %1719 = vrot.lane.b32.xlu0 %v1715, 118
      %v1720 = vpop.permute.xlu0 %1719
      %1721 = vrot.lane.b32.xlu0 %v1716, 118
      %v1722 = vpop.permute.xlu0 %1721
      %1723 = vrot.lane.b32.xlu0 %v1717, 118
      %v1724 = vpop.permute.xlu0 %1723
      %1725 = vrot.lane.b32.xlu0 %v1718, 118
      %v1726 = vpop.permute.xlu0 %1725
      %v1727 = vsel %vm424, %v1720, %v1722
      %v1728 = vsel %vm424, %v1722, %v1724
      %v1729 = vsel %vm424, %v1724, %v1726
      %1733 = vst [vmem:[#allocation4 + $0x18] sm:$0xf0] %v1727
      %1734 = vst [vmem:[#allocation4 + $0x20] sm:$0xf0] %v1728
      %1735 = vst.msk [vmem:[#allocation4 + $0x28] sm:$0xf0] %vm1681, %v1729
      %v1736 = vld [vmem:[#allocation2] sm:$0xff]
      %v1737 = vld [vmem:[#allocation2 + $0x8] sm:$0xff]
      %v1740 = vunpack.c.l.b16 %v1736
      %v1741 = vunpack.c.h.b16 %v1736
      %v1742 = vunpack.c.l.b16 %v1737
      %v1743 = vunpack.c.h.b16 %v1737
      %v1744 = vpack.c.b16 %v1740, %v1740
      %v1745 = vpack.c.b16 %v1741, %v1741
      %v1746 = vpack.c.b16 %v1742, %v1742
      %v1747 = vpack.c.b16 %v1743, %v1743
      %1748 = vrot.lane.b32.xlu0 %v1744, 117
      %v1749 = vpop.permute.xlu0 %1748
      %1750 = vrot.lane.b32.xlu0 %v1745, 117
      %v1751 = vpop.permute.xlu0 %1750
      %1752 = vrot.lane.b32.xlu0 %v1746, 117
      %v1753 = vpop.permute.xlu0 %1752
      %1754 = vrot.lane.b32.xlu0 %v1747, 117
      %v1755 = vpop.permute.xlu0 %1754
      %v1756 = vsel %vm462, %v1749, %v1751
      %v1757 = vsel %vm462, %v1751, %v1753
      %v1758 = vsel %vm462, %v1753, %v1755
      %1762 = vst [vmem:[#allocation4 + $0x30] sm:$0xf] %v1756
      %1763 = vst [vmem:[#allocation4 + $0x38] sm:$0xf] %v1757
      %1764 = vst.msk [vmem:[#allocation4 + $0x40] sm:$0xf] %vm1656, %v1758
      %v1765 = vld [vmem:[#allocation2] sm:$0xff]
      %v1766 = vld [vmem:[#allocation2 + $0x8] sm:$0xff]
      %v1769 = vunpack.c.l.b16 %v1765
      %v1770 = vunpack.c.h.b16 %v1765
      %v1771 = vunpack.c.l.b16 %v1766
      %v1772 = vunpack.c.h.b16 %v1766
      %v1773 = vpack.c.b16 %v1769, %v1769
      %v1774 = vpack.c.b16 %v1770, %v1770
      %v1775 = vpack.c.b16 %v1771, %v1771
      %v1776 = vpack.c.b16 %v1772, %v1772
      %1777 = vrot.lane.b32.xlu0 %v1773, 116
      %v1778 = vpop.permute.xlu0 %1777
      %1779 = vrot.lane.b32.xlu0 %v1774, 116
      %v1780 = vpop.permute.xlu0 %1779
      %1781 = vrot.lane.b32.xlu0 %v1775, 116
      %v1782 = vpop.permute.xlu0 %1781
      %1783 = vrot.lane.b32.xlu0 %v1776, 116
      %v1784 = vpop.permute.xlu0 %1783
      %v1785 = vsel %vm500, %v1778, %v1780
      %v1786 = vsel %vm500, %v1780, %v1782
      %v1787 = vsel %vm500, %v1782, %v1784
      %1791 = vst [vmem:[#allocation4 + $0x30] sm:$0xf0] %v1785
      %1792 = vst [vmem:[#allocation4 + $0x38] sm:$0xf0] %v1786
      %1793 = vst.msk [vmem:[#allocation4 + $0x40] sm:$0xf0] %vm1681, %v1787
      %v1794 = vld [vmem:[#allocation2] sm:$0xff]
      %v1795 = vld [vmem:[#allocation2 + $0x8] sm:$0xff]
      %v1798 = vunpack.c.l.b16 %v1794
      %v1799 = vunpack.c.h.b16 %v1794
      %v1800 = vunpack.c.l.b16 %v1795
      %v1801 = vunpack.c.h.b16 %v1795
      %v1802 = vpack.c.b16 %v1798, %v1798
      %v1803 = vpack.c.b16 %v1799, %v1799
      %v1804 = vpack.c.b16 %v1800, %v1800
      %v1805 = vpack.c.b16 %v1801, %v1801
      %1806 = vrot.lane.b32.xlu0 %v1802, 108
      %v1807 = vpop.permute.xlu0 %1806
      %1808 = vrot.lane.b32.xlu0 %v1803, 108
      %v1809 = vpop.permute.xlu0 %1808
      %1810 = vrot.lane.b32.xlu0 %v1804, 108
      %v1811 = vpop.permute.xlu0 %1810
      %1812 = vrot.lane.b32.xlu0 %v1805, 108
      %v1813 = vpop.permute.xlu0 %1812
      %v1814 = vsel %vm538, %v1807, %v1809
      %v1815 = vsel %vm538, %v1809, %v1811
      %v1816 = vsel %vm538, %v1811, %v1813
      %1820 = vst [vmem:[#allocation4 + $0x48] sm:$0xf] %v1814
      %1821 = vst [vmem:[#allocation4 + $0x50] sm:$0xf] %v1815
      %1822 = vst.msk [vmem:[#allocation4 + $0x58] sm:$0xf] %vm1656, %v1816
      %v1823 = vld [vmem:[#allocation2] sm:$0xff]
      %v1824 = vld [vmem:[#allocation2 + $0x8] sm:$0xff]
      %v1827 = vunpack.c.l.b16 %v1823
      %v1828 = vunpack.c.h.b16 %v1823
      %v1829 = vunpack.c.l.b16 %v1824
      %v1830 = vunpack.c.h.b16 %v1824
      %v1831 = vpack.c.b16 %v1827, %v1827
      %v1832 = vpack.c.b16 %v1828, %v1828
      %v1833 = vpack.c.b16 %v1829, %v1829
      %v1834 = vpack.c.b16 %v1830, %v1830
      %1835 = vrot.lane.b32.xlu0 %v1831, 107
      %v1836 = vpop.permute.xlu0 %1835
      %1837 = vrot.lane.b32.xlu0 %v1832, 107
      %v1838 = vpop.permute.xlu0 %1837
      %1839 = vrot.lane.b32.xlu0 %v1833, 107
      %v1840 = vpop.permute.xlu0 %1839
      %1841 = vrot.lane.b32.xlu0 %v1834, 107
      %v1842 = vpop.permute.xlu0 %1841
      %v1843 = vsel %vm576, %v1836, %v1838
      %v1844 = vsel %vm576, %v1838, %v1840
      %v1845 = vsel %vm576, %v1840, %v1842
      %1849 = vst [vmem:[#allocation4 + $0x48] sm:$0xf0] %v1843
      %1850 = vst [vmem:[#allocation4 + $0x50] sm:$0xf0] %v1844
      %1851 = vst.msk [vmem:[#allocation4 + $0x58] sm:$0xf0] %vm1681, %v1845
      %v1852 = vld [vmem:[#allocation2] sm:$0xff]
      %v1853 = vld [vmem:[#allocation2 + $0x8] sm:$0xff]
      %v1856 = vunpack.c.l.b16 %v1852
      %v1857 = vunpack.c.h.b16 %v1852
      %v1858 = vunpack.c.l.b16 %v1853
      %v1859 = vunpack.c.h.b16 %v1853
      %v1860 = vpack.c.b16 %v1856, %v1856
      %v1861 = vpack.c.b16 %v1857, %v1857
      %v1862 = vpack.c.b16 %v1858, %v1858
      %v1863 = vpack.c.b16 %v1859, %v1859
      %1864 = vrot.lane.b32.xlu0 %v1860, 106
      %v1865 = vpop.permute.xlu0 %1864
      %1866 = vrot.lane.b32.xlu0 %v1861, 106
      %v1867 = vpop.permute.xlu0 %1866
      %1868 = vrot.lane.b32.xlu0 %v1862, 106
      %v1869 = vpop.permute.xlu0 %1868
      %1870 = vrot.lane.b32.xlu0 %v1863, 106
      %v1871 = vpop.permute.xlu0 %1870
      %v1872 = vsel %vm614, %v1865, %v1867
      %v1873 = vsel %vm614, %v1867, %v1869
      %v1874 = vsel %vm614, %v1869, %v1871
      %1878 = vst [vmem:[#allocation4 + $0x60] sm:$0xf] %v1872
      %1879 = vst [vmem:[#allocation4 + $0x68] sm:$0xf] %v1873
      %1880 = vst.msk [vmem:[#allocation4 + $0x70] sm:$0xf] %vm1656, %v1874
      %v1881 = vld [vmem:[#allocation2] sm:$0xff]
      %v1882 = vld [vmem:[#allocation2 + $0x8] sm:$0xff]
      %v1885 = vunpack.c.l.b16 %v1881
      %v1886 = vunpack.c.h.b16 %v1881
      %v1887 = vunpack.c.l.b16 %v1882
      %v1888 = vunpack.c.h.b16 %v1882
      %v1889 = vpack.c.b16 %v1885, %v1885
      %v1890 = vpack.c.b16 %v1886, %v1886
      %v1891 = vpack.c.b16 %v1887, %v1887
      %v1892 = vpack.c.b16 %v1888, %v1888
      %1893 = vrot.lane.b32.xlu0 %v1889, 28
      %v1894 = vpop.permute.xlu0 %1893
      %1895 = vrot.lane.b32.xlu0 %v1890, 28
      %v1896 = vpop.permute.xlu0 %1895
      %1897 = vrot.lane.b32.xlu0 %v1891, 28
      %v1898 = vpop.permute.xlu0 %1897
      %1899 = vrot.lane.b32.xlu0 %v1892, 28
      %v1900 = vpop.permute.xlu0 %1899
      %v1901 = vsel %vm652, %v1894, %v1896
      %v1902 = vsel %vm652, %v1896, %v1898
      %v1903 = vsel %vm652, %v1898, %v1900
      %1907 = vst [vmem:[#allocation4 + $0x60] sm:$0xf0] %v1901
      %1908 = vst [vmem:[#allocation4 + $0x68] sm:$0xf0] %v1902
      %1909 = vst.msk [vmem:[#allocation4 + $0x70] sm:$0xf0] %vm1681, %v1903
      %v1910 = vld [vmem:[#allocation2] sm:$0xff]
      %v1911 = vld [vmem:[#allocation2 + $0x8] sm:$0xff]
      %v1914 = vunpack.c.l.b16 %v1910
      %v1915 = vunpack.c.h.b16 %v1910
      %v1916 = vunpack.c.l.b16 %v1911
      %v1917 = vunpack.c.h.b16 %v1911
      %v1918 = vpack.c.b16 %v1914, %v1914
      %v1919 = vpack.c.b16 %v1915, %v1915
      %v1920 = vpack.c.b16 %v1916, %v1916
      %v1921 = vpack.c.b16 %v1917, %v1917
      %1922 = vrot.lane.b32.xlu0 %v1918, 27
      %v1923 = vpop.permute.xlu0 %1922
      %1924 = vrot.lane.b32.xlu0 %v1919, 27
      %v1925 = vpop.permute.xlu0 %1924
      %1926 = vrot.lane.b32.xlu0 %v1920, 27
      %v1927 = vpop.permute.xlu0 %1926
      %1928 = vrot.lane.b32.xlu0 %v1921, 27
      %v1929 = vpop.permute.xlu0 %1928
      %v1930 = vsel %vm690, %v1923, %v1925
      %v1931 = vsel %vm690, %v1925, %v1927
      %v1932 = vsel %vm690, %v1927, %v1929
      %1936 = vst [vmem:[#allocation4 + $0x78] sm:$0xf] %v1930
      %1937 = vst [vmem:[#allocation4 + $0x80] sm:$0xf] %v1931
      %1938 = vst.msk [vmem:[#allocation4 + $0x88] sm:$0xf] %vm1656, %v1932
      %v1939 = vld [vmem:[#allocation2] sm:$0xff]
      %v1940 = vld [vmem:[#allocation2 + $0x8] sm:$0xff]
      %v1943 = vunpack.c.l.b16 %v1939
      %v1944 = vunpack.c.h.b16 %v1939
      %v1945 = vunpack.c.l.b16 %v1940
      %v1946 = vunpack.c.h.b16 %v1940
      %v1947 = vpack.c.b16 %v1943, %v1943
      %v1948 = vpack.c.b16 %v1944, %v1944
      %v1949 = vpack.c.b16 %v1945, %v1945
      %v1950 = vpack.c.b16 %v1946, %v1946
      %1951 = vrot.lane.b32.xlu0 %v1947, 26
      %v1952 = vpop.permute.xlu0 %1951
      %1953 = vrot.lane.b32.xlu0 %v1948, 26
      %v1954 = vpop.permute.xlu0 %1953
      %1955 = vrot.lane.b32.xlu0 %v1949, 26
      %v1956 = vpop.permute.xlu0 %1955
      %1957 = vrot.lane.b32.xlu0 %v1950, 26
      %v1958 = vpop.permute.xlu0 %1957
      %v1959 = vsel %vm728, %v1952, %v1954
      %v1960 = vsel %vm728, %v1954, %v1956
      %v1961 = vsel %vm728, %v1956, %v1958
      %1965 = vst [vmem:[#allocation4 + $0x78] sm:$0xf0] %v1959
      %1966 = vst [vmem:[#allocation4 + $0x80] sm:$0xf0] %v1960
      %1967 = vst.msk [vmem:[#allocation4 + $0x88] sm:$0xf0] %vm1681, %v1961
      %v1968 = vld [vmem:[#allocation2] sm:$0xff]
      %v1969 = vld [vmem:[#allocation2 + $0x8] sm:$0xff]
      %v1972 = vunpack.c.l.b16 %v1968
      %v1973 = vunpack.c.h.b16 %v1968
      %v1974 = vunpack.c.l.b16 %v1969
      %v1975 = vunpack.c.h.b16 %v1969
      %v1976 = vpack.c.b16 %v1972, %v1972
      %v1977 = vpack.c.b16 %v1973, %v1973
      %v1978 = vpack.c.b16 %v1974, %v1974
      %v1979 = vpack.c.b16 %v1975, %v1975
      %1980 = vrot.lane.b32.xlu0 %v1976, 18
      %v1981 = vpop.permute.xlu0 %1980
      %1982 = vrot.lane.b32.xlu0 %v1977, 18
      %v1983 = vpop.permute.xlu0 %1982
      %1984 = vrot.lane.b32.xlu0 %v1978, 18
      %v1985 = vpop.permute.xlu0 %1984
      %1986 = vrot.lane.b32.xlu0 %v1979, 18
      %v1987 = vpop.permute.xlu0 %1986
      %v1988 = vsel %vm766, %v1981, %v1983
      %v1989 = vsel %vm766, %v1983, %v1985
      %v1990 = vsel %vm766, %v1985, %v1987
      %1994 = vst [vmem:[#allocation4 + $0x90] sm:$0xf] %v1988
      %1995 = vst [vmem:[#allocation4 + $0x98] sm:$0xf] %v1989
      %1996 = vst.msk [vmem:[#allocation4 + $0xa0] sm:$0xf] %vm1656, %v1990
      %v1997 = vld [vmem:[#allocation2] sm:$0xff]
      %v1998 = vld [vmem:[#allocation2 + $0x8] sm:$0xff]
      %v2001 = vunpack.c.l.b16 %v1997
      %v2002 = vunpack.c.h.b16 %v1997
      %v2003 = vunpack.c.l.b16 %v1998
      %v2004 = vunpack.c.h.b16 %v1998
      %v2005 = vpack.c.b16 %v2001, %v2001
      %v2006 = vpack.c.b16 %v2002, %v2002
      %v2007 = vpack.c.b16 %v2003, %v2003
      %v2008 = vpack.c.b16 %v2004, %v2004
      %2009 = vrot.lane.b32.xlu0 %v2005, 17
      %v2010 = vpop.permute.xlu0 %2009
      %2011 = vrot.lane.b32.xlu0 %v2006, 17
      %v2012 = vpop.permute.xlu0 %2011
      %2013 = vrot.lane.b32.xlu0 %v2007, 17
      %v2014 = vpop.permute.xlu0 %2013
      %2015 = vrot.lane.b32.xlu0 %v2008, 17
      %v2016 = vpop.permute.xlu0 %2015
      %v2017 = vsel %vm804, %v2010, %v2012
      %v2018 = vsel %vm804, %v2012, %v2014
      %v2019 = vsel %vm804, %v2014, %v2016
      %2023 = vst [vmem:[#allocation4 + $0x90] sm:$0xf0] %v2017
      %2024 = vst [vmem:[#allocation4 + $0x98] sm:$0xf0] %v2018
      %2025 = vst.msk [vmem:[#allocation4 + $0xa0] sm:$0xf0] %vm1681, %v2019
      %v2026 = vld [vmem:[#allocation2] sm:$0xff]
      %v2027 = vld [vmem:[#allocation2 + $0x8] sm:$0xff]
      %v2030 = vunpack.c.l.b16 %v2026
      %v2031 = vunpack.c.h.b16 %v2026
      %v2032 = vunpack.c.l.b16 %v2027
      %v2033 = vunpack.c.h.b16 %v2027
      %v2034 = vpack.c.b16 %v2030, %v2030
      %v2035 = vpack.c.b16 %v2031, %v2031
      %v2036 = vpack.c.b16 %v2032, %v2032
      %v2037 = vpack.c.b16 %v2033, %v2033
      %2038 = vrot.lane.b32.xlu0 %v2034, 16
      %v2039 = vpop.permute.xlu0 %2038
      %2040 = vrot.lane.b32.xlu0 %v2035, 16
      %v2041 = vpop.permute.xlu0 %2040
      %2042 = vrot.lane.b32.xlu0 %v2036, 16
      %v2043 = vpop.permute.xlu0 %2042
      %2044 = vrot.lane.b32.xlu0 %v2037, 16
      %v2045 = vpop.permute.xlu0 %2044
      %v2046 = vsel %vm842, %v2039, %v2041
      %v2047 = vsel %vm842, %v2041, %v2043
      %v2048 = vsel %vm842, %v2043, %v2045
      %2052 = vst [vmem:[#allocation4 + $0xa8] sm:$0xf] %v2046
      %2053 = vst [vmem:[#allocation4 + $0xb0] sm:$0xf] %v2047
      %2054 = vst.msk [vmem:[#allocation4 + $0xb8] sm:$0xf] %vm1656, %v2048
      %v2055 = vld [vmem:[#allocation2] sm:$0xff]
      %v2056 = vld [vmem:[#allocation2 + $0x8] sm:$0xff]
      %v2059 = vunpack.c.l.b16 %v2055
      %v2060 = vunpack.c.h.b16 %v2055
      %v2061 = vunpack.c.l.b16 %v2056
      %v2062 = vunpack.c.h.b16 %v2056
      %v2063 = vpack.c.b16 %v2059, %v2059
      %v2064 = vpack.c.b16 %v2060, %v2060
      %v2065 = vpack.c.b16 %v2061, %v2061
      %v2066 = vpack.c.b16 %v2062, %v2062
      %2067 = vrot.lane.b32.xlu0 %v2063, 8
      %v2068 = vpop.permute.xlu0 %2067
      %2069 = vrot.lane.b32.xlu0 %v2064, 8
      %v2070 = vpop.permute.xlu0 %2069
      %2071 = vrot.lane.b32.xlu0 %v2065, 8
      %v2072 = vpop.permute.xlu0 %2071
      %2073 = vrot.lane.b32.xlu0 %v2066, 8
      %v2074 = vpop.permute.xlu0 %2073
      %v2075 = vsel %vm880, %v2068, %v2070
      %v2076 = vsel %vm880, %v2070, %v2072
      %v2077 = vsel %vm880, %v2072, %v2074
      %2081 = vst [vmem:[#allocation4 + $0xa8] sm:$0xf0] %v2075
      %2082 = vst [vmem:[#allocation4 + $0xb0] sm:$0xf0] %v2076
      %2083 = vst.msk [vmem:[#allocation4 + $0xb8] sm:$0xf0] %vm1681, %v2077
      %v2084 = vld [vmem:[#allocation2] sm:$0xff]
      %v2085 = vld [vmem:[#allocation2 + $0x8] sm:$0xff]
      %v2088 = vunpack.c.l.b16 %v2084
      %v2089 = vunpack.c.h.b16 %v2084
      %v2090 = vunpack.c.l.b16 %v2085
      %v2091 = vunpack.c.h.b16 %v2085
      %v2092 = vpack.c.b16 %v2088, %v2088
      %v2093 = vpack.c.b16 %v2089, %v2089
      %v2094 = vpack.c.b16 %v2090, %v2090
      %v2095 = vpack.c.b16 %v2091, %v2091
      %2096 = vrot.lane.b32.xlu0 %v2092, 7
      %v2097 = vpop.permute.xlu0 %2096
      %2098 = vrot.lane.b32.xlu0 %v2093, 7
      %v2099 = vpop.permute.xlu0 %2098
      %2100 = vrot.lane.b32.xlu0 %v2094, 7
      %v2101 = vpop.permute.xlu0 %2100
      %2102 = vrot.lane.b32.xlu0 %v2095, 7
      %v2103 = vpop.permute.xlu0 %2102
      %v2104 = vsel %vm918, %v2097, %v2099
      %v2105 = vsel %vm918, %v2099, %v2101
      %v2106 = vsel %vm918, %v2101, %v2103
      %2110 = vst [vmem:[#allocation4 + $0xc0] sm:$0xf] %v2104
      %2111 = vst [vmem:[#allocation4 + $0xc8] sm:$0xf] %v2105
      %2112 = vst.msk [vmem:[#allocation4 + $0xd0] sm:$0xf] %vm1656, %v2106
      %v2113 = vld [vmem:[#allocation2] sm:$0xff]
      %v2114 = vld [vmem:[#allocation2 + $0x8] sm:$0xff]
      %v2117 = vunpack.c.l.b16 %v2113
      %v2118 = vunpack.c.h.b16 %v2113
      %v2119 = vunpack.c.l.b16 %v2114
      %v2120 = vunpack.c.h.b16 %v2114
      %v2121 = vpack.c.b16 %v2117, %v2117
      %v2122 = vpack.c.b16 %v2118, %v2118
      %v2123 = vpack.c.b16 %v2119, %v2119
      %v2124 = vpack.c.b16 %v2120, %v2120
      %2125 = vrot.lane.b32.xlu0 %v2121, 6
      %v2126 = vpop.permute.xlu0 %2125
      %2127 = vrot.lane.b32.xlu0 %v2122, 6
      %v2128 = vpop.permute.xlu0 %2127
      %2129 = vrot.lane.b32.xlu0 %v2123, 6
      %v2130 = vpop.permute.xlu0 %2129
      %2131 = vrot.lane.b32.xlu0 %v2124, 6
      %v2132 = vpop.permute.xlu0 %2131
      %v2133 = vsel %vm956, %v2126, %v2128
      %v2134 = vsel %vm956, %v2128, %v2130
      %v2135 = vsel %vm956, %v2130, %v2132
      %2139 = vst [vmem:[#allocation4 + $0xc0] sm:$0xf0] %v2133
      %2140 = vst [vmem:[#allocation4 + $0xc8] sm:$0xf0] %v2134
      %2141 = vst.msk [vmem:[#allocation4 + $0xd0] sm:$0xf0] %vm1681, %v2135
      %v2142 = vld [vmem:[#allocation2 + $0x4] sm:$0xff]
      %v2143 = vld [vmem:[#allocation2 + $0xc] sm:$0xff]
      %v2146 = vunpack.c.l.b16 %v2142
      %v2147 = vunpack.c.h.b16 %v2142
      %v2148 = vunpack.c.l.b16 %v2143
      %v2149 = vunpack.c.h.b16 %v2143
      %v2150 = vpack.c.b16 %v2146, %v2146
      %v2151 = vpack.c.b16 %v2147, %v2147
      %v2152 = vpack.c.b16 %v2148, %v2148
      %v2153 = vpack.c.b16 %v2149, %v2149
      %2154 = vrot.lane.b32.xlu0 %v2150, 56
      %v2155 = vpop.permute.xlu0 %2154
      %2156 = vrot.lane.b32.xlu0 %v2151, 56
      %v2157 = vpop.permute.xlu0 %2156
      %2158 = vrot.lane.b32.xlu0 %v2152, 56
      %v2159 = vpop.permute.xlu0 %2158
      %2160 = vrot.lane.b32.xlu0 %v2153, 56
      %v2161 = vpop.permute.xlu0 %2160
      %v2162 = vsel %vm994, %v2155, %v2157
      %v2163 = vsel %vm994, %v2157, %v2159
      %v2164 = vsel %vm994, %v2159, %v2161
      %2168 = vst [vmem:[#allocation4 + $0xd8] sm:$0xf] %v2162
      %2169 = vst [vmem:[#allocation4 + $0xe0] sm:$0xf] %v2163
      %2170 = vst.msk [vmem:[#allocation4 + $0xe8] sm:$0xf] %vm1656, %v2164
      %v2171 = vld [vmem:[#allocation2 + $0x4] sm:$0xff]
      %v2172 = vld [vmem:[#allocation2 + $0xc] sm:$0xff]
      %v2175 = vunpack.c.l.b16 %v2171
      %v2176 = vunpack.c.h.b16 %v2171
      %v2177 = vunpack.c.l.b16 %v2172
      %v2178 = vunpack.c.h.b16 %v2172
      %v2179 = vpack.c.b16 %v2175, %v2175
      %v2180 = vpack.c.b16 %v2176, %v2176
      %v2181 = vpack.c.b16 %v2177, %v2177
      %v2182 = vpack.c.b16 %v2178, %v2178
      %2183 = vrot.lane.b32.xlu0 %v2179, 55
      %v2184 = vpop.permute.xlu0 %2183
      %2185 = vrot.lane.b32.xlu0 %v2180, 55
      %v2186 = vpop.permute.xlu0 %2185
      %2187 = vrot.lane.b32.xlu0 %v2181, 55
      %v2188 = vpop.permute.xlu0 %2187
      %2189 = vrot.lane.b32.xlu0 %v2182, 55
      %v2190 = vpop.permute.xlu0 %2189
      %v2191 = vsel %vm1032, %v2184, %v2186
      %v2192 = vsel %vm1032, %v2186, %v2188
      %v2193 = vsel %vm1032, %v2188, %v2190
      %2197 = vst [vmem:[#allocation4 + $0xd8] sm:$0xf0] %v2191
      %2198 = vst [vmem:[#allocation4 + $0xe0] sm:$0xf0] %v2192
      %2199 = vst.msk [vmem:[#allocation4 + $0xe8] sm:$0xf0] %vm1681, %v2193
      %v2200 = vld [vmem:[#allocation2 + $0x4] sm:$0xff]
      %v2201 = vld [vmem:[#allocation2 + $0xc] sm:$0xff]
      %v2204 = vunpack.c.l.b16 %v2200
      %v2205 = vunpack.c.h.b16 %v2200
      %v2206 = vunpack.c.l.b16 %v2201
      %v2207 = vunpack.c.h.b16 %v2201
      %v2208 = vpack.c.b16 %v2204, %v2204
      %v2209 = vpack.c.b16 %v2205, %v2205
      %v2210 = vpack.c.b16 %v2206, %v2206
      %v2211 = vpack.c.b16 %v2207, %v2207
      %2212 = vrot.lane.b32.xlu0 %v2208, 54
      %v2213 = vpop.permute.xlu0 %2212
      %2214 = vrot.lane.b32.xlu0 %v2209, 54
      %v2215 = vpop.permute.xlu0 %2214
      %2216 = vrot.lane.b32.xlu0 %v2210, 54
      %v2217 = vpop.permute.xlu0 %2216
      %2218 = vrot.lane.b32.xlu0 %v2211, 54
      %v2219 = vpop.permute.xlu0 %2218
      %v2220 = vsel %vm1070, %v2213, %v2215
      %v2221 = vsel %vm1070, %v2215, %v2217
      %v2222 = vsel %vm1070, %v2217, %v2219
      %2226 = vst [vmem:[#allocation4 + $0xf0] sm:$0xf] %v2220
      %2227 = vst [vmem:[#allocation4 + $0xf8] sm:$0xf] %v2221
      %2228 = vst.msk [vmem:[#allocation4 + $0x100] sm:$0xf] %vm1656, %v2222
      %v2229 = vld [vmem:[#allocation2 + $0x4] sm:$0xff]
      %v2230 = vld [vmem:[#allocation2 + $0xc] sm:$0xff]
      %v2233 = vunpack.c.l.b16 %v2229
      %v2234 = vunpack.c.h.b16 %v2229
      %v2235 = vunpack.c.l.b16 %v2230
      %v2236 = vunpack.c.h.b16 %v2230
      %v2237 = vpack.c.b16 %v2233, %v2233
      %v2238 = vpack.c.b16 %v2234, %v2234
      %v2239 = vpack.c.b16 %v2235, %v2235
      %v2240 = vpack.c.b16 %v2236, %v2236
      %2241 = vrot.lane.b32.xlu0 %v2237, 46
      %v2242 = vpop.permute.xlu0 %2241
      %2243 = vrot.lane.b32.xlu0 %v2238, 46
      %v2244 = vpop.permute.xlu0 %2243
      %2245 = vrot.lane.b32.xlu0 %v2239, 46
      %v2246 = vpop.permute.xlu0 %2245
      %2247 = vrot.lane.b32.xlu0 %v2240, 46
      %v2248 = vpop.permute.xlu0 %2247
      %v2249 = vsel %vm1108, %v2242, %v2244
      %v2250 = vsel %vm1108, %v2244, %v2246
      %v2251 = vsel %vm1108, %v2246, %v2248
      %2255 = vst [vmem:[#allocation4 + $0xf0] sm:$0xf0] %v2249
      %2256 = vst [vmem:[#allocation4 + $0xf8] sm:$0xf0] %v2250
      %2257 = vst.msk [vmem:[#allocation4 + $0x100] sm:$0xf0] %vm1681, %v2251
      %v2258 = vld [vmem:[#allocation2 + $0x4] sm:$0xff]
      %v2259 = vld [vmem:[#allocation2 + $0xc] sm:$0xff]
      %v2262 = vunpack.c.l.b16 %v2258
      %v2263 = vunpack.c.h.b16 %v2258
      %v2264 = vunpack.c.l.b16 %v2259
      %v2265 = vunpack.c.h.b16 %v2259
      %v2266 = vpack.c.b16 %v2262, %v2262
      %v2267 = vpack.c.b16 %v2263, %v2263
      %v2268 = vpack.c.b16 %v2264, %v2264
      %v2269 = vpack.c.b16 %v2265, %v2265
      %2270 = vrot.lane.b32.xlu0 %v2266, 45
      %v2271 = vpop.permute.xlu0 %2270
      %2272 = vrot.lane.b32.xlu0 %v2267, 45
      %v2273 = vpop.permute.xlu0 %2272
      %2274 = vrot.lane.b32.xlu0 %v2268, 45
      %v2275 = vpop.permute.xlu0 %2274
      %2276 = vrot.lane.b32.xlu0 %v2269, 45
      %v2277 = vpop.permute.xlu0 %2276
      %v2278 = vsel %vm1146, %v2271, %v2273
      %v2279 = vsel %vm1146, %v2273, %v2275
      %v2280 = vsel %vm1146, %v2275, %v2277
      %2284 = vst [vmem:[#allocation4 + $0x108] sm:$0xf] %v2278
      %2285 = vst [vmem:[#allocation4 + $0x110] sm:$0xf] %v2279
      %2286 = vst.msk [vmem:[#allocation4 + $0x118] sm:$0xf] %vm1656, %v2280
      %v2287 = vld [vmem:[#allocation2 + $0x4] sm:$0xff]
      %v2288 = vld [vmem:[#allocation2 + $0xc] sm:$0xff]
      %v2291 = vunpack.c.l.b16 %v2287
      %v2292 = vunpack.c.h.b16 %v2287
      %v2293 = vunpack.c.l.b16 %v2288
      %v2294 = vunpack.c.h.b16 %v2288
      %v2295 = vpack.c.b16 %v2291, %v2291
      %v2296 = vpack.c.b16 %v2292, %v2292
      %v2297 = vpack.c.b16 %v2293, %v2293
      %v2298 = vpack.c.b16 %v2294, %v2294
      %2299 = vrot.lane.b32.xlu0 %v2295, 44
      %v2300 = vpop.permute.xlu0 %2299
      %2301 = vrot.lane.b32.xlu0 %v2296, 44
      %v2302 = vpop.permute.xlu0 %2301
      %2303 = vrot.lane.b32.xlu0 %v2297, 44
      %v2304 = vpop.permute.xlu0 %2303
      %2305 = vrot.lane.b32.xlu0 %v2298, 44
      %v2306 = vpop.permute.xlu0 %2305
      %v2307 = vsel %vm1184, %v2300, %v2302
      %v2308 = vsel %vm1184, %v2302, %v2304
      %v2309 = vsel %vm1184, %v2304, %v2306
      %2313 = vst [vmem:[#allocation4 + $0x108] sm:$0xf0] %v2307
      %2314 = vst [vmem:[#allocation4 + $0x110] sm:$0xf0] %v2308
      %2315 = vst.msk [vmem:[#allocation4 + $0x118] sm:$0xf0] %vm1681, %v2309
      %v2316 = vld [vmem:[#allocation2 + $0x4] sm:$0xff]
      %v2317 = vld [vmem:[#allocation2 + $0xc] sm:$0xff]
      %v2320 = vunpack.c.l.b16 %v2316
      %v2321 = vunpack.c.h.b16 %v2316
      %v2322 = vunpack.c.l.b16 %v2317
      %v2323 = vunpack.c.h.b16 %v2317
      %v2324 = vpack.c.b16 %v2320, %v2320
      %v2325 = vpack.c.b16 %v2321, %v2321
      %v2326 = vpack.c.b16 %v2322, %v2322
      %v2327 = vpack.c.b16 %v2323, %v2323
      %2328 = vrot.lane.b32.xlu0 %v2324, 36
      %v2329 = vpop.permute.xlu0 %2328
      %2330 = vrot.lane.b32.xlu0 %v2325, 36
      %v2331 = vpop.permute.xlu0 %2330
      %2332 = vrot.lane.b32.xlu0 %v2326, 36
      %v2333 = vpop.permute.xlu0 %2332
      %2334 = vrot.lane.b32.xlu0 %v2327, 36
      %v2335 = vpop.permute.xlu0 %2334
      %v2336 = vsel %vm1222, %v2329, %v2331
      %v2337 = vsel %vm1222, %v2331, %v2333
      %v2338 = vsel %vm1222, %v2333, %v2335
      %2342 = vst [vmem:[#allocation4 + $0x120] sm:$0xf] %v2336
      %2343 = vst [vmem:[#allocation4 + $0x128] sm:$0xf] %v2337
      %2344 = vst.msk [vmem:[#allocation4 + $0x130] sm:$0xf] %vm1656, %v2338
      %v2345 = vld [vmem:[#allocation2 + $0x4] sm:$0xff]
      %v2346 = vld [vmem:[#allocation2 + $0xc] sm:$0xff]
      %v2349 = vunpack.c.l.b16 %v2345
      %v2350 = vunpack.c.h.b16 %v2345
      %v2351 = vunpack.c.l.b16 %v2346
      %v2352 = vunpack.c.h.b16 %v2346
      %v2353 = vpack.c.b16 %v2349, %v2349
      %v2354 = vpack.c.b16 %v2350, %v2350
      %v2355 = vpack.c.b16 %v2351, %v2351
      %v2356 = vpack.c.b16 %v2352, %v2352
      %2357 = vrot.lane.b32.xlu0 %v2353, 35
      %v2358 = vpop.permute.xlu0 %2357
      %2359 = vrot.lane.b32.xlu0 %v2354, 35
      %v2360 = vpop.permute.xlu0 %2359
      %2361 = vrot.lane.b32.xlu0 %v2355, 35
      %v2362 = vpop.permute.xlu0 %2361
      %2363 = vrot.lane.b32.xlu0 %v2356, 35
      %v2364 = vpop.permute.xlu0 %2363
      %v2365 = vsel %vm1260, %v2358, %v2360
      %v2366 = vsel %vm1260, %v2360, %v2362
      %v2367 = vsel %vm1260, %v2362, %v2364
      %2371 = vst [vmem:[#allocation4 + $0x120] sm:$0xf0] %v2365
      %2372 = vst [vmem:[#allocation4 + $0x128] sm:$0xf0] %v2366
      %2373 = vst.msk [vmem:[#allocation4 + $0x130] sm:$0xf0] %vm1681, %v2367
      %v2374 = vld [vmem:[#allocation2 + $0x4] sm:$0xff]
      %v2375 = vld [vmem:[#allocation2 + $0xc] sm:$0xff]
      %v2378 = vunpack.c.l.b16 %v2374
      %v2379 = vunpack.c.h.b16 %v2374
      %v2380 = vunpack.c.l.b16 %v2375
      %v2381 = vunpack.c.h.b16 %v2375
      %v2382 = vpack.c.b16 %v2378, %v2378
      %v2383 = vpack.c.b16 %v2379, %v2379
      %v2384 = vpack.c.b16 %v2380, %v2380
      %v2385 = vpack.c.b16 %v2381, %v2381
      %2386 = vrot.lane.b32.xlu0 %v2382, 34
      %v2387 = vpop.permute.xlu0 %2386
      %2388 = vrot.lane.b32.xlu0 %v2383, 34
      %v2389 = vpop.permute.xlu0 %2388
      %2390 = vrot.lane.b32.xlu0 %v2384, 34
      %v2391 = vpop.permute.xlu0 %2390
      %2392 = vrot.lane.b32.xlu0 %v2385, 34
      %v2393 = vpop.permute.xlu0 %2392
      %v2394 = vsel %vm1298, %v2387, %v2389
      %v2395 = vsel %vm1298, %v2389, %v2391
      %v2396 = vsel %vm1298, %v2391, %v2393
      %2400 = vst [vmem:[#allocation4 + $0x138] sm:$0xf] %v2394
      %2401 = vst [vmem:[#allocation4 + $0x140] sm:$0xf] %v2395
      %2402 = vst.msk [vmem:[#allocation4 + $0x148] sm:$0xf] %vm1656, %v2396
      %v2403 = vld [vmem:[%s3] sm:$0xf]
      %v2404 = vld [vmem:[#allocation4] sm:$0xff]
      %v2405 = vld [vmem:[#allocation4 + $0x8] sm:$0xff]
      %v2406 = vld [vmem:[#allocation4 + $0x10] sm:$0xff]
      %v2407 = vld [vmem:[#allocation4 + $0x18] sm:$0xff]
      %v2408 = vld [vmem:[#allocation4 + $0x20] sm:$0xff]
      %v2409 = vld [vmem:[#allocation4 + $0x28] sm:$0xff]
      %v2410 = vld [vmem:[#allocation4 + $0x30] sm:$0xff]
      %v2411 = vld [vmem:[#allocation4 + $0x38] sm:$0xff]
      %v2412 = vld [vmem:[#allocation4 + $0x40] sm:$0xff]
      %v2413 = vld [vmem:[#allocation4 + $0x48] sm:$0xff]
      %v2414 = vld [vmem:[#allocation4 + $0x50] sm:$0xff]
      %v2415 = vld [vmem:[#allocation4 + $0x58] sm:$0xff]
      %v2416 = vld [vmem:[#allocation4 + $0x60] sm:$0xff]
      %v2417 = vld [vmem:[#allocation4 + $0x68] sm:$0xff]
      %v2418 = vld [vmem:[#allocation4 + $0x70] sm:$0xff]
      %v2419 = vld [vmem:[#allocation4 + $0x78] sm:$0xff]
      %v2420 = vld [vmem:[#allocation4 + $0x80] sm:$0xff]
      %v2421 = vld [vmem:[#allocation4 + $0x88] sm:$0xff]
      %v2422 = vld [vmem:[#allocation4 + $0x90] sm:$0xff]
      %v2423 = vld [vmem:[#allocation4 + $0x98] sm:$0xff]
      %v2424 = vld [vmem:[#allocation4 + $0xa0] sm:$0xff]
      %v2425 = vld [vmem:[#allocation4 + $0xa8] sm:$0xff]
      %v2426 = vld [vmem:[#allocation4 + $0xb0] sm:$0xff]
      %v2427 = vld [vmem:[#allocation4 + $0xb8] sm:$0xff]
      %v2428 = vld [vmem:[#allocation4 + $0xc0] sm:$0xff]
      %v2429 = vld [vmem:[#allocation4 + $0xc8] sm:$0xff]
      %v2430 = vld [vmem:[#allocation4 + $0xd0] sm:$0xff]
      %v2431 = vld [vmem:[#allocation4 + $0xd8] sm:$0xff]
      %v2432 = vld [vmem:[#allocation4 + $0xe0] sm:$0xff]
      %v2433 = vld [vmem:[#allocation4 + $0xe8] sm:$0xff]
      %v2434 = vld [vmem:[#allocation4 + $0xf0] sm:$0xff]
      %v2435 = vld [vmem:[#allocation4 + $0xf8] sm:$0xff]
      %v2436 = vld [vmem:[#allocation4 + $0x100] sm:$0xff]
      %v2437 = vld [vmem:[#allocation4 + $0x108] sm:$0xff]
      %v2438 = vld [vmem:[#allocation4 + $0x110] sm:$0xff]
      %v2439 = vld [vmem:[#allocation4 + $0x118] sm:$0xff]
      %v2440 = vld [vmem:[#allocation4 + $0x120] sm:$0xff]
      %v2441 = vld [vmem:[#allocation4 + $0x128] sm:$0xff]
      %v2442 = vld [vmem:[#allocation4 + $0x130] sm:$0xff]
      %v2443 = vld [vmem:[#allocation4 + $0x138] sm:$0xf]
      %v2444 = vld [vmem:[#allocation4 + $0x140] sm:$0xf]
      %v2445 = vld [vmem:[#allocation4 + $0x148] sm:$0xf]
      %v2446 = vld [vmem:[%s4] sm:$0xf]
      %2448 = vset.pattern.permute.xlu0 0
      %2449 = vperm.xlu0 %2448, %v2446
      %v2450 = vpop.permute.xlu0 %2449
      %v2454 = vunpack.c.l.s4 1983009808
      %v2455 = vunpack.c.0.s8 %v2454
      %v2456 = vlaneseq
      %v2457 = vshrl.u32 %v2456, 7
      %v2458 = vsub.s32 %v2455, %v2457
      %v2459 = vrot.slane %v2403, %v2458
      %v2460 = vcombine.high %v2459, %v2459
      %vm2462 = vcmask 719872
      %v2464 = vsel %vm2462, %v2460, 0
      %vm2466 = vcmask 1043456
      %v2468 = vsel %vm2466, %v2443, 0
      %v2471 = vsel %vm2466, %v2444, 0
      %v2474 = vsel %vm2466, %v2445, 0
      %2476 = vmatprep.subr.bf16.mxu0 %v2405
      %2477 = vmatpush1.bf16.msra.mxu0 %v2404
      %2478 = vmatprep.subr.bf16.mxu0 %v2408
      %2479 = vmatpush1.bf16.msra.mxu0 %v2407
      %2480 = vmatprep.subr.bf16.mxu0 %v2411
      %2481 = vmatpush1.bf16.msra.mxu0 %v2410
      %2482 = vmatprep.subr.bf16.mxu0 %v2414
      %2483 = vmatpush1.bf16.msra.mxu0 %v2413
      %2484 = vmatprep.subr.bf16.mxu0 %v2417
      %2485 = vmatpush1.bf16.msra.mxu0 %v2416
      %2486 = vmatprep.subr.bf16.mxu0 %v2420
      %2487 = vmatpush1.bf16.msra.mxu0 %v2419
      %2488 = vmatprep.subr.bf16.mxu0 %v2423
      %2489 = vmatpush1.bf16.msra.mxu0 %v2422
      %2490 = vmatprep.subr.bf16.mxu0 %v2426
      %2491 = vmatpush1.bf16.msra.mxu0 %v2425
      %2492 = vmatprep.subr.bf16.mxu0 %v2429
      %2493 = vmatpush1.bf16.msra.mxu0 %v2428
      %2494 = vmatprep.subr.bf16.mxu0 %v2432
      %2495 = vmatpush1.bf16.msra.mxu0 %v2431
      %2496 = vmatprep.subr.bf16.mxu0 %v2435
      %2497 = vmatpush1.bf16.msra.mxu0 %v2434
      %2498 = vmatprep.subr.bf16.mxu0 %v2438
      %2499 = vmatpush1.bf16.msra.mxu0 %v2437
      %2500 = vmatprep.subr.bf16.mxu0 %v2441
      %2501 = vmatpush1.bf16.msra.mxu0 %v2440
      %2502 = vmatprep.subr.bf16.mxu0 %v2471
      %2503 = vmatpush1.bf16.msra.mxu0 %v2468
      %2504 = vmatprep.subr.bf16.mxu0 0
      %2505 = vmatpush1.bf16.msra.mxu0 0
      %2506 = vmatprep.subr.bf16.mxu0 0
      %2507 = vmatpush1.bf16.msra.mxu0 0
      %2508 = vmatprep.mubr.bf16.mxu0 %v2464
      %2509 = vmatmul.mubr.bf16.gmra.mrb[0].mxu0 %v2459
      %v2510 = vpop.f32.mrb[0].mxu0
      %v2511 = vadd.f32 %v2450, %v2510
      %v2512 = vpop.f32.mrb[0].mxu0
      %v2513 = vadd.f32 %v2450, %v2512
      %v2514 = vpop.f32.mrb[0].mxu0
      %v2515 = vpop.f32.mrb[0].mxu0
      %2516 = vdwg.mxu0
      %2517 = vmatprep.subr.bf16.mxu0 0
      %2518 = vmatpush1.bf16.msra.mxu0 %v2406
      %2519 = vmatprep.subr.bf16.mxu0 0
      %2520 = vmatpush1.bf16.msra.mxu0 %v2409
      %2521 = vmatprep.subr.bf16.mxu0 0
      %2522 = vmatpush1.bf16.msra.mxu0 %v2412
      %2523 = vmatprep.subr.bf16.mxu0 0
      %2524 = vmatpush1.bf16.msra.mxu0 %v2415
      %2525 = vmatprep.subr.bf16.mxu0 0
      %2526 = vmatpush1.bf16.msra.mxu0 %v2418
      %2527 = vmatprep.subr.bf16.mxu0 0
      %2528 = vmatpush1.bf16.msra.mxu0 %v2421
      %2529 = vmatprep.subr.bf16.mxu0 0
      %2530 = vmatpush1.bf16.msra.mxu0 %v2424
      %2531 = vmatprep.subr.bf16.mxu0 0
      %2532 = vmatpush1.bf16.msra.mxu0 %v2427
      %2533 = vmatprep.subr.bf16.mxu0 0
      %2534 = vmatpush1.bf16.msra.mxu0 %v2430
      %2535 = vmatprep.subr.bf16.mxu0 0
      %2536 = vmatpush1.bf16.msra.mxu0 %v2433
      %2537 = vmatprep.subr.bf16.mxu0 0
      %2538 = vmatpush1.bf16.msra.mxu0 %v2436
      %2539 = vmatprep.subr.bf16.mxu0 0
      %2540 = vmatpush1.bf16.msra.mxu0 %v2439
      %2541 = vmatprep.subr.bf16.mxu0 0
      %2542 = vmatpush1.bf16.msra.mxu0 %v2442
      %2543 = vmatprep.subr.bf16.mxu0 0
      %2544 = vmatpush1.bf16.msra.mxu0 %v2474
      %2545 = vmatprep.subr.bf16.mxu0 0
      %2546 = vmatpush1.bf16.msra.mxu0 0
      %2547 = vmatprep.subr.bf16.mxu0 0
      %2548 = vmatpush1.bf16.msra.mxu0 0
      %2549 = vmatprep.mubr.bf16.mxu0 %v2464
      %2550 = vmatmul.mubr.bf16.gmra.mrb[0].mxu0 %v2459
      %v2551 = vpop.f32.mrb[0].mxu0
      %v2552 = vadd.f32 %v2450, %v2551
      %v2553 = vpop.f32.mrb[0].mxu0
      %v2554 = vpop.f32.mrb[0].mxu0
      %v2555 = vpop.f32.mrb[0].mxu0
      %2556 = vdwg.mxu0
      %v2557 = vmax.f32 %v2511, 0.0
      %v2558 = vmax.f32 %v2513, 0.0
      %v2559 = vmax.f32 %v2552, 0.0
      %2560 = vst [vmem:[#allocation3] sm:$0xff] 0
      %2561 = vst [vmem:[#allocation3 + $0x8] sm:$0xff] 0
      %2562 = vst.msk [vmem:[#allocation3 + $0x10] sm:$0xf] %vm1588, 0
      %v2563 = vmul.f32 %v2557, %v1594
      %v2564 = vmul.f32 %v2558, %v1598
      %v2565 = vmul.f32 %v2559, %v1602
      %v2566 = vpack.c.bf16 %v2563, %v2563
      %v2567 = vpack.c.bf16 %v2564, %v2564
      %v2568 = vpack.c.bf16 %v2565, %v2565
      %v2572 = vunpack.c.l.b16 %v2566
      %v2573 = vunpack.c.l.b16 %v2567
      %v2574 = vunpack.c.l.b16 %v2568
      %v2575 = vpack.c.b16 %v2573, %v2572
      %v2576 = vpack.c.b16 %v2574, %v2574
      %2577 = vrot.lane.b32.xlu0 %v2575, 111
      %v2578 = vpop.permute.xlu0 %2577
      %2579 = vrot.lane.b32.xlu0 %v2576, 111
      %v2580 = vpop.permute.xlu0 %2579
      %v2581 = vrot.slane %v2578, 4
      %v2582 = vrot.slane %v2580, 4
      %v2583 = vsel %vm1626, %v2581, %v2578
      %v2584 = vsel %vm1628, %v2581, %v2582
      %v2585 = vsel %vm1626, %v2584, %v2580
      %2588 = vst.msk [vmem:[#allocation3] sm:$0x33] %vm1635, %v2583
      %2589 = vst.msk [vmem:[#allocation3 + $0x8] sm:$0x33] %vm1639, %v2585
      %v2590 = vld [vmem:[#allocation3] sm:$0xff]
      %v2591 = vld [vmem:[#allocation3 + $0x8] sm:$0xf]
      %v2594 = vunpack.c.l.b16 %v2590
      %v2595 = vunpack.c.h.b16 %v2590
      %v2596 = vunpack.c.l.b16 %v2591
      %v2597 = vpack.c.b16 %v2594, %v2594
      %v2598 = vpack.c.b16 %v2595, %v2595
      %v2599 = vpack.c.b16 %v2596, %v2596
      %2603 = vst [vmem:[#allocation4] sm:$0xf] %v2597
      %2604 = vst [vmem:[#allocation4 + $0x8] sm:$0xf] %v2598
      %2605 = vst.msk [vmem:[#allocation4 + $0x10] sm:$0xf] %vm1656, %v2599
      %v2606 = vld [vmem:[#allocation3] sm:$0xff]
      %v2607 = vld [vmem:[#allocation3 + $0x8] sm:$0xf]
      %v2610 = vunpack.c.l.b16 %v2606
      %v2611 = vunpack.c.h.b16 %v2606
      %v2612 = vunpack.c.l.b16 %v2607
      %v2613 = vpack.c.b16 %v2610, %v2610
      %v2614 = vpack.c.b16 %v2611, %v2611
      %v2615 = vpack.c.b16 %v2612, %v2612
      %2616 = vrot.lane.b32.xlu0 %v2613, 127
      %v2617 = vpop.permute.xlu0 %2616
      %2618 = vrot.lane.b32.xlu0 %v2614, 127
      %v2619 = vpop.permute.xlu0 %2618
      %2620 = vrot.lane.b32.xlu0 %v2615, 127
      %v2621 = vpop.permute.xlu0 %2620
      %v2622 = vsel %vm355, %v2617, %v2619
      %v2623 = vsel %vm355, %v2619, %v2621
      %2627 = vst [vmem:[#allocation4] sm:$0xf0] %v2622
      %2628 = vst [vmem:[#allocation4 + $0x8] sm:$0xf0] %v2623
      %2629 = vst.msk [vmem:[#allocation4 + $0x10] sm:$0xf0] %vm1681, %v2621
      %v2630 = vld [vmem:[#allocation3] sm:$0xff]
      %v2631 = vld [vmem:[#allocation3 + $0x8] sm:$0xf]
      %v2634 = vunpack.c.l.b16 %v2630
      %v2635 = vunpack.c.h.b16 %v2630
      %v2636 = vunpack.c.l.b16 %v2631
      %v2637 = vpack.c.b16 %v2634, %v2634
      %v2638 = vpack.c.b16 %v2635, %v2635
      %v2639 = vpack.c.b16 %v2636, %v2636
      %2640 = vrot.lane.b32.xlu0 %v2637, 126
      %v2641 = vpop.permute.xlu0 %2640
      %2642 = vrot.lane.b32.xlu0 %v2638, 126
      %v2643 = vpop.permute.xlu0 %2642
      %2644 = vrot.lane.b32.xlu0 %v2639, 126
      %v2645 = vpop.permute.xlu0 %2644
      %v2646 = vsel %vm387, %v2641, %v2643
      %v2647 = vsel %vm387, %v2643, %v2645
      %2651 = vst [vmem:[#allocation4 + $0x18] sm:$0xf] %v2646
      %2652 = vst [vmem:[#allocation4 + $0x20] sm:$0xf] %v2647
      %2653 = vst.msk [vmem:[#allocation4 + $0x28] sm:$0xf] %vm1656, %v2645
      %v2654 = vld [vmem:[#allocation3] sm:$0xff]
      %v2655 = vld [vmem:[#allocation3 + $0x8] sm:$0xff]
      %v2658 = vunpack.c.l.b16 %v2654
      %v2659 = vunpack.c.h.b16 %v2654
      %v2660 = vunpack.c.l.b16 %v2655
      %v2661 = vunpack.c.h.b16 %v2655
      %v2662 = vpack.c.b16 %v2658, %v2658
      %v2663 = vpack.c.b16 %v2659, %v2659
      %v2664 = vpack.c.b16 %v2660, %v2660
      %v2665 = vpack.c.b16 %v2661, %v2661
      %2666 = vrot.lane.b32.xlu0 %v2662, 118
      %v2667 = vpop.permute.xlu0 %2666
      %2668 = vrot.lane.b32.xlu0 %v2663, 118
      %v2669 = vpop.permute.xlu0 %2668
      %2670 = vrot.lane.b32.xlu0 %v2664, 118
      %v2671 = vpop.permute.xlu0 %2670
      %2672 = vrot.lane.b32.xlu0 %v2665, 118
      %v2673 = vpop.permute.xlu0 %2672
      %v2674 = vsel %vm424, %v2667, %v2669
      %v2675 = vsel %vm424, %v2669, %v2671
      %v2676 = vsel %vm424, %v2671, %v2673
      %2680 = vst [vmem:[#allocation4 + $0x18] sm:$0xf0] %v2674
      %2681 = vst [vmem:[#allocation4 + $0x20] sm:$0xf0] %v2675
      %2682 = vst.msk [vmem:[#allocation4 + $0x28] sm:$0xf0] %vm1681, %v2676
      %v2683 = vld [vmem:[#allocation3] sm:$0xff]
      %v2684 = vld [vmem:[#allocation3 + $0x8] sm:$0xff]
      %v2687 = vunpack.c.l.b16 %v2683
      %v2688 = vunpack.c.h.b16 %v2683
      %v2689 = vunpack.c.l.b16 %v2684
      %v2690 = vunpack.c.h.b16 %v2684
      %v2691 = vpack.c.b16 %v2687, %v2687
      %v2692 = vpack.c.b16 %v2688, %v2688
      %v2693 = vpack.c.b16 %v2689, %v2689
      %v2694 = vpack.c.b16 %v2690, %v2690
      %2695 = vrot.lane.b32.xlu0 %v2691, 117
      %v2696 = vpop.permute.xlu0 %2695
      %2697 = vrot.lane.b32.xlu0 %v2692, 117
      %v2698 = vpop.permute.xlu0 %2697
      %2699 = vrot.lane.b32.xlu0 %v2693, 117
      %v2700 = vpop.permute.xlu0 %2699
      %2701 = vrot.lane.b32.xlu0 %v2694, 117
      %v2702 = vpop.permute.xlu0 %2701
      %v2703 = vsel %vm462, %v2696, %v2698
      %v2704 = vsel %vm462, %v2698, %v2700
      %v2705 = vsel %vm462, %v2700, %v2702
      %2709 = vst [vmem:[#allocation4 + $0x30] sm:$0xf] %v2703
      %2710 = vst [vmem:[#allocation4 + $0x38] sm:$0xf] %v2704
      %2711 = vst.msk [vmem:[#allocation4 + $0x40] sm:$0xf] %vm1656, %v2705
      %v2712 = vld [vmem:[#allocation3] sm:$0xff]
      %v2713 = vld [vmem:[#allocation3 + $0x8] sm:$0xff]
      %v2716 = vunpack.c.l.b16 %v2712
      %v2717 = vunpack.c.h.b16 %v2712
      %v2718 = vunpack.c.l.b16 %v2713
      %v2719 = vunpack.c.h.b16 %v2713
      %v2720 = vpack.c.b16 %v2716, %v2716
      %v2721 = vpack.c.b16 %v2717, %v2717
      %v2722 = vpack.c.b16 %v2718, %v2718
      %v2723 = vpack.c.b16 %v2719, %v2719
      %2724 = vrot.lane.b32.xlu0 %v2720, 116
      %v2725 = vpop.permute.xlu0 %2724
      %2726 = vrot.lane.b32.xlu0 %v2721, 116
      %v2727 = vpop.permute.xlu0 %2726
      %2728 = vrot.lane.b32.xlu0 %v2722, 116
      %v2729 = vpop.permute.xlu0 %2728
      %2730 = vrot.lane.b32.xlu0 %v2723, 116
      %v2731 = vpop.permute.xlu0 %2730
      %v2732 = vsel %vm500, %v2725, %v2727
      %v2733 = vsel %vm500, %v2727, %v2729
      %v2734 = vsel %vm500, %v2729, %v2731
      %2738 = vst [vmem:[#allocation4 + $0x30] sm:$0xf0] %v2732
      %2739 = vst [vmem:[#allocation4 + $0x38] sm:$0xf0] %v2733
      %2740 = vst.msk [vmem:[#allocation4 + $0x40] sm:$0xf0] %vm1681, %v2734
      %v2741 = vld [vmem:[#allocation3] sm:$0xff]
      %v2742 = vld [vmem:[#allocation3 + $0x8] sm:$0xff]
      %v2745 = vunpack.c.l.b16 %v2741
      %v2746 = vunpack.c.h.b16 %v2741
      %v2747 = vunpack.c.l.b16 %v2742
      %v2748 = vunpack.c.h.b16 %v2742
      %v2749 = vpack.c.b16 %v2745, %v2745
      %v2750 = vpack.c.b16 %v2746, %v2746
      %v2751 = vpack.c.b16 %v2747, %v2747
      %v2752 = vpack.c.b16 %v2748, %v2748
      %2753 = vrot.lane.b32.xlu0 %v2749, 108
      %v2754 = vpop.permute.xlu0 %2753
      %2755 = vrot.lane.b32.xlu0 %v2750, 108
      %v2756 = vpop.permute.xlu0 %2755
      %2757 = vrot.lane.b32.xlu0 %v2751, 108
      %v2758 = vpop.permute.xlu0 %2757
      %2759 = vrot.lane.b32.xlu0 %v2752, 108
      %v2760 = vpop.permute.xlu0 %2759
      %v2761 = vsel %vm538, %v2754, %v2756
      %v2762 = vsel %vm538, %v2756, %v2758
      %v2763 = vsel %vm538, %v2758, %v2760
      %2767 = vst [vmem:[#allocation4 + $0x48] sm:$0xf] %v2761
      %2768 = vst [vmem:[#allocation4 + $0x50] sm:$0xf] %v2762
      %2769 = vst.msk [vmem:[#allocation4 + $0x58] sm:$0xf] %vm1656, %v2763
      %v2770 = vld [vmem:[#allocation3] sm:$0xff]
      %v2771 = vld [vmem:[#allocation3 + $0x8] sm:$0xff]
      %v2774 = vunpack.c.l.b16 %v2770
      %v2775 = vunpack.c.h.b16 %v2770
      %v2776 = vunpack.c.l.b16 %v2771
      %v2777 = vunpack.c.h.b16 %v2771
      %v2778 = vpack.c.b16 %v2774, %v2774
      %v2779 = vpack.c.b16 %v2775, %v2775
      %v2780 = vpack.c.b16 %v2776, %v2776
      %v2781 = vpack.c.b16 %v2777, %v2777
      %2782 = vrot.lane.b32.xlu0 %v2778, 107
      %v2783 = vpop.permute.xlu0 %2782
      %2784 = vrot.lane.b32.xlu0 %v2779, 107
      %v2785 = vpop.permute.xlu0 %2784
      %2786 = vrot.lane.b32.xlu0 %v2780, 107
      %v2787 = vpop.permute.xlu0 %2786
      %2788 = vrot.lane.b32.xlu0 %v2781, 107
      %v2789 = vpop.permute.xlu0 %2788
      %v2790 = vsel %vm576, %v2783, %v2785
      %v2791 = vsel %vm576, %v2785, %v2787
      %v2792 = vsel %vm576, %v2787, %v2789
      %2796 = vst [vmem:[#allocation4 + $0x48] sm:$0xf0] %v2790
      %2797 = vst [vmem:[#allocation4 + $0x50] sm:$0xf0] %v2791
      %2798 = vst.msk [vmem:[#allocation4 + $0x58] sm:$0xf0] %vm1681, %v2792
      %v2799 = vld [vmem:[#allocation3] sm:$0xff]
      %v2800 = vld [vmem:[#allocation3 + $0x8] sm:$0xff]
      %v2803 = vunpack.c.l.b16 %v2799
      %v2804 = vunpack.c.h.b16 %v2799
      %v2805 = vunpack.c.l.b16 %v2800
      %v2806 = vunpack.c.h.b16 %v2800
      %v2807 = vpack.c.b16 %v2803, %v2803
      %v2808 = vpack.c.b16 %v2804, %v2804
      %v2809 = vpack.c.b16 %v2805, %v2805
      %v2810 = vpack.c.b16 %v2806, %v2806
      %2811 = vrot.lane.b32.xlu0 %v2807, 106
      %v2812 = vpop.permute.xlu0 %2811
      %2813 = vrot.lane.b32.xlu0 %v2808, 106
      %v2814 = vpop.permute.xlu0 %2813
      %2815 = vrot.lane.b32.xlu0 %v2809, 106
      %v2816 = vpop.permute.xlu0 %2815
      %2817 = vrot.lane.b32.xlu0 %v2810, 106
      %v2818 = vpop.permute.xlu0 %2817
      %v2819 = vsel %vm614, %v2812, %v2814
      %v2820 = vsel %vm614, %v2814, %v2816
      %v2821 = vsel %vm614, %v2816, %v2818
      %2825 = vst [vmem:[#allocation4 + $0x60] sm:$0xf] %v2819
      %2826 = vst [vmem:[#allocation4 + $0x68] sm:$0xf] %v2820
      %2827 = vst.msk [vmem:[#allocation4 + $0x70] sm:$0xf] %vm1656, %v2821
      %v2828 = vld [vmem:[#allocation3] sm:$0xff]
      %v2829 = vld [vmem:[#allocation3 + $0x8] sm:$0xff]
      %v2832 = vunpack.c.l.b16 %v2828
      %v2833 = vunpack.c.h.b16 %v2828
      %v2834 = vunpack.c.l.b16 %v2829
      %v2835 = vunpack.c.h.b16 %v2829
      %v2836 = vpack.c.b16 %v2832, %v2832
      %v2837 = vpack.c.b16 %v2833, %v2833
      %v2838 = vpack.c.b16 %v2834, %v2834
      %v2839 = vpack.c.b16 %v2835, %v2835
      %2840 = vrot.lane.b32.xlu0 %v2836, 28
      %v2841 = vpop.permute.xlu0 %2840
      %2842 = vrot.lane.b32.xlu0 %v2837, 28
      %v2843 = vpop.permute.xlu0 %2842
      %2844 = vrot.lane.b32.xlu0 %v2838, 28
      %v2845 = vpop.permute.xlu0 %2844
      %2846 = vrot.lane.b32.xlu0 %v2839, 28
      %v2847 = vpop.permute.xlu0 %2846
      %v2848 = vsel %vm652, %v2841, %v2843
      %v2849 = vsel %vm652, %v2843, %v2845
      %v2850 = vsel %vm652, %v2845, %v2847
      %2854 = vst [vmem:[#allocation4 + $0x60] sm:$0xf0] %v2848
      %2855 = vst [vmem:[#allocation4 + $0x68] sm:$0xf0] %v2849
      %2856 = vst.msk [vmem:[#allocation4 + $0x70] sm:$0xf0] %vm1681, %v2850
      %v2857 = vld [vmem:[#allocation3] sm:$0xff]
      %v2858 = vld [vmem:[#allocation3 + $0x8] sm:$0xff]
      %v2861 = vunpack.c.l.b16 %v2857
      %v2862 = vunpack.c.h.b16 %v2857
      %v2863 = vunpack.c.l.b16 %v2858
      %v2864 = vunpack.c.h.b16 %v2858
      %v2865 = vpack.c.b16 %v2861, %v2861
      %v2866 = vpack.c.b16 %v2862, %v2862
      %v2867 = vpack.c.b16 %v2863, %v2863
      %v2868 = vpack.c.b16 %v2864, %v2864
      %2869 = vrot.lane.b32.xlu0 %v2865, 27
      %v2870 = vpop.permute.xlu0 %2869
      %2871 = vrot.lane.b32.xlu0 %v2866, 27
      %v2872 = vpop.permute.xlu0 %2871
      %2873 = vrot.lane.b32.xlu0 %v2867, 27
      %v2874 = vpop.permute.xlu0 %2873
      %2875 = vrot.lane.b32.xlu0 %v2868, 27
      %v2876 = vpop.permute.xlu0 %2875
      %v2877 = vsel %vm690, %v2870, %v2872
      %v2878 = vsel %vm690, %v2872, %v2874
      %v2879 = vsel %vm690, %v2874, %v2876
      %2883 = vst [vmem:[#allocation4 + $0x78] sm:$0xf] %v2877
      %2884 = vst [vmem:[#allocation4 + $0x80] sm:$0xf] %v2878
      %2885 = vst.msk [vmem:[#allocation4 + $0x88] sm:$0xf] %vm1656, %v2879
      %v2886 = vld [vmem:[#allocation3] sm:$0xff]
      %v2887 = vld [vmem:[#allocation3 + $0x8] sm:$0xff]
      %v2890 = vunpack.c.l.b16 %v2886
      %v2891 = vunpack.c.h.b16 %v2886
      %v2892 = vunpack.c.l.b16 %v2887
      %v2893 = vunpack.c.h.b16 %v2887
      %v2894 = vpack.c.b16 %v2890, %v2890
      %v2895 = vpack.c.b16 %v2891, %v2891
      %v2896 = vpack.c.b16 %v2892, %v2892
      %v2897 = vpack.c.b16 %v2893, %v2893
      %2898 = vrot.lane.b32.xlu0 %v2894, 26
      %v2899 = vpop.permute.xlu0 %2898
      %2900 = vrot.lane.b32.xlu0 %v2895, 26
      %v2901 = vpop.permute.xlu0 %2900
      %2902 = vrot.lane.b32.xlu0 %v2896, 26
      %v2903 = vpop.permute.xlu0 %2902
      %2904 = vrot.lane.b32.xlu0 %v2897, 26
      %v2905 = vpop.permute.xlu0 %2904
      %v2906 = vsel %vm728, %v2899, %v2901
      %v2907 = vsel %vm728, %v2901, %v2903
      %v2908 = vsel %vm728, %v2903, %v2905
      %2912 = vst [vmem:[#allocation4 + $0x78] sm:$0xf0] %v2906
      %2913 = vst [vmem:[#allocation4 + $0x80] sm:$0xf0] %v2907
      %2914 = vst.msk [vmem:[#allocation4 + $0x88] sm:$0xf0] %vm1681, %v2908
      %v2915 = vld [vmem:[#allocation3] sm:$0xff]
      %v2916 = vld [vmem:[#allocation3 + $0x8] sm:$0xff]
      %v2919 = vunpack.c.l.b16 %v2915
      %v2920 = vunpack.c.h.b16 %v2915
      %v2921 = vunpack.c.l.b16 %v2916
      %v2922 = vunpack.c.h.b16 %v2916
      %v2923 = vpack.c.b16 %v2919, %v2919
      %v2924 = vpack.c.b16 %v2920, %v2920
      %v2925 = vpack.c.b16 %v2921, %v2921
      %v2926 = vpack.c.b16 %v2922, %v2922
      %2927 = vrot.lane.b32.xlu0 %v2923, 18
      %v2928 = vpop.permute.xlu0 %2927
      %2929 = vrot.lane.b32.xlu0 %v2924, 18
      %v2930 = vpop.permute.xlu0 %2929
      %2931 = vrot.lane.b32.xlu0 %v2925, 18
      %v2932 = vpop.permute.xlu0 %2931
      %2933 = vrot.lane.b32.xlu0 %v2926, 18
      %v2934 = vpop.permute.xlu0 %2933
      %v2935 = vsel %vm766, %v2928, %v2930
      %v2936 = vsel %vm766, %v2930, %v2932
      %v2937 = vsel %vm766, %v2932, %v2934
      %2941 = vst [vmem:[#allocation4 + $0x90] sm:$0xf] %v2935
      %2942 = vst [vmem:[#allocation4 + $0x98] sm:$0xf] %v2936
      %2943 = vst.msk [vmem:[#allocation4 + $0xa0] sm:$0xf] %vm1656, %v2937
      %v2944 = vld [vmem:[#allocation3] sm:$0xff]
      %v2945 = vld [vmem:[#allocation3 + $0x8] sm:$0xff]
      %v2948 = vunpack.c.l.b16 %v2944
      %v2949 = vunpack.c.h.b16 %v2944
      %v2950 = vunpack.c.l.b16 %v2945
      %v2951 = vunpack.c.h.b16 %v2945
      %v2952 = vpack.c.b16 %v2948, %v2948
      %v2953 = vpack.c.b16 %v2949, %v2949
      %v2954 = vpack.c.b16 %v2950, %v2950
      %v2955 = vpack.c.b16 %v2951, %v2951
      %2956 = vrot.lane.b32.xlu0 %v2952, 17
      %v2957 = vpop.permute.xlu0 %2956
      %2958 = vrot.lane.b32.xlu0 %v2953, 17
      %v2959 = vpop.permute.xlu0 %2958
      %2960 = vrot.lane.b32.xlu0 %v2954, 17
      %v2961 = vpop.permute.xlu0 %2960
      %2962 = vrot.lane.b32.xlu0 %v2955, 17
      %v2963 = vpop.permute.xlu0 %2962
      %v2964 = vsel %vm804, %v2957, %v2959
      %v2965 = vsel %vm804, %v2959, %v2961
      %v2966 = vsel %vm804, %v2961, %v2963
      %2970 = vst [vmem:[#allocation4 + $0x90] sm:$0xf0] %v2964
      %2971 = vst [vmem:[#allocation4 + $0x98] sm:$0xf0] %v2965
      %2972 = vst.msk [vmem:[#allocation4 + $0xa0] sm:$0xf0] %vm1681, %v2966
      %v2973 = vld [vmem:[#allocation3] sm:$0xff]
      %v2974 = vld [vmem:[#allocation3 + $0x8] sm:$0xff]
      %v2977 = vunpack.c.l.b16 %v2973
      %v2978 = vunpack.c.h.b16 %v2973
      %v2979 = vunpack.c.l.b16 %v2974
      %v2980 = vunpack.c.h.b16 %v2974
      %v2981 = vpack.c.b16 %v2977, %v2977
      %v2982 = vpack.c.b16 %v2978, %v2978
      %v2983 = vpack.c.b16 %v2979, %v2979
      %v2984 = vpack.c.b16 %v2980, %v2980
      %2985 = vrot.lane.b32.xlu0 %v2981, 16
      %v2986 = vpop.permute.xlu0 %2985
      %2987 = vrot.lane.b32.xlu0 %v2982, 16
      %v2988 = vpop.permute.xlu0 %2987
      %2989 = vrot.lane.b32.xlu0 %v2983, 16
      %v2990 = vpop.permute.xlu0 %2989
      %2991 = vrot.lane.b32.xlu0 %v2984, 16
      %v2992 = vpop.permute.xlu0 %2991
      %v2993 = vsel %vm842, %v2986, %v2988
      %v2994 = vsel %vm842, %v2988, %v2990
      %v2995 = vsel %vm842, %v2990, %v2992
      %2999 = vst [vmem:[#allocation4 + $0xa8] sm:$0xf] %v2993
      %3000 = vst [vmem:[#allocation4 + $0xb0] sm:$0xf] %v2994
      %3001 = vst.msk [vmem:[#allocation4 + $0xb8] sm:$0xf] %vm1656, %v2995
      %v3002 = vld [vmem:[#allocation3] sm:$0xff]
      %v3003 = vld [vmem:[#allocation3 + $0x8] sm:$0xff]
      %v3006 = vunpack.c.l.b16 %v3002
      %v3007 = vunpack.c.h.b16 %v3002
      %v3008 = vunpack.c.l.b16 %v3003
      %v3009 = vunpack.c.h.b16 %v3003
      %v3010 = vpack.c.b16 %v3006, %v3006
      %v3011 = vpack.c.b16 %v3007, %v3007
      %v3012 = vpack.c.b16 %v3008, %v3008
      %v3013 = vpack.c.b16 %v3009, %v3009
      %3014 = vrot.lane.b32.xlu0 %v3010, 8
      %v3015 = vpop.permute.xlu0 %3014
      %3016 = vrot.lane.b32.xlu0 %v3011, 8
      %v3017 = vpop.permute.xlu0 %3016
      %3018 = vrot.lane.b32.xlu0 %v3012, 8
      %v3019 = vpop.permute.xlu0 %3018
      %3020 = vrot.lane.b32.xlu0 %v3013, 8
      %v3021 = vpop.permute.xlu0 %3020
      %v3022 = vsel %vm880, %v3015, %v3017
      %v3023 = vsel %vm880, %v3017, %v3019
      %v3024 = vsel %vm880, %v3019, %v3021
      %3028 = vst [vmem:[#allocation4 + $0xa8] sm:$0xf0] %v3022
      %3029 = vst [vmem:[#allocation4 + $0xb0] sm:$0xf0] %v3023
      %3030 = vst.msk [vmem:[#allocation4 + $0xb8] sm:$0xf0] %vm1681, %v3024
      %v3031 = vld [vmem:[#allocation3] sm:$0xff]
      %v3032 = vld [vmem:[#allocation3 + $0x8] sm:$0xff]
      %v3035 = vunpack.c.l.b16 %v3031
      %v3036 = vunpack.c.h.b16 %v3031
      %v3037 = vunpack.c.l.b16 %v3032
      %v3038 = vunpack.c.h.b16 %v3032
      %v3039 = vpack.c.b16 %v3035, %v3035
      %v3040 = vpack.c.b16 %v3036, %v3036
      %v3041 = vpack.c.b16 %v3037, %v3037
      %v3042 = vpack.c.b16 %v3038, %v3038
      %3043 = vrot.lane.b32.xlu0 %v3039, 7
      %v3044 = vpop.permute.xlu0 %3043
      %3045 = vrot.lane.b32.xlu0 %v3040, 7
      %v3046 = vpop.permute.xlu0 %3045
      %3047 = vrot.lane.b32.xlu0 %v3041, 7
      %v3048 = vpop.permute.xlu0 %3047
      %3049 = vrot.lane.b32.xlu0 %v3042, 7
      %v3050 = vpop.permute.xlu0 %3049
      %v3051 = vsel %vm918, %v3044, %v3046
      %v3052 = vsel %vm918, %v3046, %v3048
      %v3053 = vsel %vm918, %v3048, %v3050
      %3057 = vst [vmem:[#allocation4 + $0xc0] sm:$0xf] %v3051
      %3058 = vst [vmem:[#allocation4 + $0xc8] sm:$0xf] %v3052
      %3059 = vst.msk [vmem:[#allocation4 + $0xd0] sm:$0xf] %vm1656, %v3053
      %v3060 = vld [vmem:[#allocation3] sm:$0xff]
      %v3061 = vld [vmem:[#allocation3 + $0x8] sm:$0xff]
      %v3064 = vunpack.c.l.b16 %v3060
      %v3065 = vunpack.c.h.b16 %v3060
      %v3066 = vunpack.c.l.b16 %v3061
      %v3067 = vunpack.c.h.b16 %v3061
      %v3068 = vpack.c.b16 %v3064, %v3064
      %v3069 = vpack.c.b16 %v3065, %v3065
      %v3070 = vpack.c.b16 %v3066, %v3066
      %v3071 = vpack.c.b16 %v3067, %v3067
      %3072 = vrot.lane.b32.xlu0 %v3068, 6
      %v3073 = vpop.permute.xlu0 %3072
      %3074 = vrot.lane.b32.xlu0 %v3069, 6
      %v3075 = vpop.permute.xlu0 %3074
      %3076 = vrot.lane.b32.xlu0 %v3070, 6
      %v3077 = vpop.permute.xlu0 %3076
      %3078 = vrot.lane.b32.xlu0 %v3071, 6
      %v3079 = vpop.permute.xlu0 %3078
      %v3080 = vsel %vm956, %v3073, %v3075
      %v3081 = vsel %vm956, %v3075, %v3077
      %v3082 = vsel %vm956, %v3077, %v3079
      %3086 = vst [vmem:[#allocation4 + $0xc0] sm:$0xf0] %v3080
      %3087 = vst [vmem:[#allocation4 + $0xc8] sm:$0xf0] %v3081
      %3088 = vst.msk [vmem:[#allocation4 + $0xd0] sm:$0xf0] %vm1681, %v3082
      %v3089 = vld [vmem:[#allocation3 + $0x4] sm:$0xff]
      %v3090 = vld [vmem:[#allocation3 + $0xc] sm:$0xff]
      %v3093 = vunpack.c.l.b16 %v3089
      %v3094 = vunpack.c.h.b16 %v3089
      %v3095 = vunpack.c.l.b16 %v3090
      %v3096 = vunpack.c.h.b16 %v3090
      %v3097 = vpack.c.b16 %v3093, %v3093
      %v3098 = vpack.c.b16 %v3094, %v3094
      %v3099 = vpack.c.b16 %v3095, %v3095
      %v3100 = vpack.c.b16 %v3096, %v3096
      %3101 = vrot.lane.b32.xlu0 %v3097, 56
      %v3102 = vpop.permute.xlu0 %3101
      %3103 = vrot.lane.b32.xlu0 %v3098, 56
      %v3104 = vpop.permute.xlu0 %3103
      %3105 = vrot.lane.b32.xlu0 %v3099, 56
      %v3106 = vpop.permute.xlu0 %3105
      %3107 = vrot.lane.b32.xlu0 %v3100, 56
      %v3108 = vpop.permute.xlu0 %3107
      %v3109 = vsel %vm994, %v3102, %v3104
      %v3110 = vsel %vm994, %v3104, %v3106
      %v3111 = vsel %vm994, %v3106, %v3108
      %3115 = vst [vmem:[#allocation4 + $0xd8] sm:$0xf] %v3109
      %3116 = vst [vmem:[#allocation4 + $0xe0] sm:$0xf] %v3110
      %3117 = vst.msk [vmem:[#allocation4 + $0xe8] sm:$0xf] %vm1656, %v3111
      %v3118 = vld [vmem:[#allocation3 + $0x4] sm:$0xff]
      %v3119 = vld [vmem:[#allocation3 + $0xc] sm:$0xff]
      %v3122 = vunpack.c.l.b16 %v3118
      %v3123 = vunpack.c.h.b16 %v3118
      %v3124 = vunpack.c.l.b16 %v3119
      %v3125 = vunpack.c.h.b16 %v3119
      %v3126 = vpack.c.b16 %v3122, %v3122
      %v3127 = vpack.c.b16 %v3123, %v3123
      %v3128 = vpack.c.b16 %v3124, %v3124
      %v3129 = vpack.c.b16 %v3125, %v3125
      %3130 = vrot.lane.b32.xlu0 %v3126, 55
      %v3131 = vpop.permute.xlu0 %3130
      %3132 = vrot.lane.b32.xlu0 %v3127, 55
      %v3133 = vpop.permute.xlu0 %3132
      %3134 = vrot.lane.b32.xlu0 %v3128, 55
      %v3135 = vpop.permute.xlu0 %3134
      %3136 = vrot.lane.b32.xlu0 %v3129, 55
      %v3137 = vpop.permute.xlu0 %3136
      %v3138 = vsel %vm1032, %v3131, %v3133
      %v3139 = vsel %vm1032, %v3133, %v3135
      %v3140 = vsel %vm1032, %v3135, %v3137
      %3144 = vst [vmem:[#allocation4 + $0xd8] sm:$0xf0] %v3138
      %3145 = vst [vmem:[#allocation4 + $0xe0] sm:$0xf0] %v3139
      %3146 = vst.msk [vmem:[#allocation4 + $0xe8] sm:$0xf0] %vm1681, %v3140
      %v3147 = vld [vmem:[#allocation3 + $0x4] sm:$0xff]
      %v3148 = vld [vmem:[#allocation3 + $0xc] sm:$0xff]
      %v3151 = vunpack.c.l.b16 %v3147
      %v3152 = vunpack.c.h.b16 %v3147
      %v3153 = vunpack.c.l.b16 %v3148
      %v3154 = vunpack.c.h.b16 %v3148
      %v3155 = vpack.c.b16 %v3151, %v3151
      %v3156 = vpack.c.b16 %v3152, %v3152
      %v3157 = vpack.c.b16 %v3153, %v3153
      %v3158 = vpack.c.b16 %v3154, %v3154
      %3159 = vrot.lane.b32.xlu0 %v3155, 54
      %v3160 = vpop.permute.xlu0 %3159
      %3161 = vrot.lane.b32.xlu0 %v3156, 54
      %v3162 = vpop.permute.xlu0 %3161
      %3163 = vrot.lane.b32.xlu0 %v3157, 54
      %v3164 = vpop.permute.xlu0 %3163
      %3165 = vrot.lane.b32.xlu0 %v3158, 54
      %v3166 = vpop.permute.xlu0 %3165
      %v3167 = vsel %vm1070, %v3160, %v3162
      %v3168 = vsel %vm1070, %v3162, %v3164
      %v3169 = vsel %vm1070, %v3164, %v3166
      %3173 = vst [vmem:[#allocation4 + $0xf0] sm:$0xf] %v3167
      %3174 = vst [vmem:[#allocation4 + $0xf8] sm:$0xf] %v3168
      %3175 = vst.msk [vmem:[#allocation4 + $0x100] sm:$0xf] %vm1656, %v3169
      %v3176 = vld [vmem:[#allocation3 + $0x4] sm:$0xff]
      %v3177 = vld [vmem:[#allocation3 + $0xc] sm:$0xff]
      %v3180 = vunpack.c.l.b16 %v3176
      %v3181 = vunpack.c.h.b16 %v3176
      %v3182 = vunpack.c.l.b16 %v3177
      %v3183 = vunpack.c.h.b16 %v3177
      %v3184 = vpack.c.b16 %v3180, %v3180
      %v3185 = vpack.c.b16 %v3181, %v3181
      %v3186 = vpack.c.b16 %v3182, %v3182
      %v3187 = vpack.c.b16 %v3183, %v3183
      %3188 = vrot.lane.b32.xlu0 %v3184, 46
      %v3189 = vpop.permute.xlu0 %3188
      %3190 = vrot.lane.b32.xlu0 %v3185, 46
      %v3191 = vpop.permute.xlu0 %3190
      %3192 = vrot.lane.b32.xlu0 %v3186, 46
      %v3193 = vpop.permute.xlu0 %3192
      %3194 = vrot.lane.b32.xlu0 %v3187, 46
      %v3195 = vpop.permute.xlu0 %3194
      %v3196 = vsel %vm1108, %v3189, %v3191
      %v3197 = vsel %vm1108, %v3191, %v3193
      %v3198 = vsel %vm1108, %v3193, %v3195
      %3202 = vst [vmem:[#allocation4 + $0xf0] sm:$0xf0] %v3196
      %3203 = vst [vmem:[#allocation4 + $0xf8] sm:$0xf0] %v3197
      %3204 = vst.msk [vmem:[#allocation4 + $0x100] sm:$0xf0] %vm1681, %v3198
      %v3205 = vld [vmem:[#allocation3 + $0x4] sm:$0xff]
      %v3206 = vld [vmem:[#allocation3 + $0xc] sm:$0xff]
      %v3209 = vunpack.c.l.b16 %v3205
      %v3210 = vunpack.c.h.b16 %v3205
      %v3211 = vunpack.c.l.b16 %v3206
      %v3212 = vunpack.c.h.b16 %v3206
      %v3213 = vpack.c.b16 %v3209, %v3209
      %v3214 = vpack.c.b16 %v3210, %v3210
      %v3215 = vpack.c.b16 %v3211, %v3211
      %v3216 = vpack.c.b16 %v3212, %v3212
      %3217 = vrot.lane.b32.xlu0 %v3213, 45
      %v3218 = vpop.permute.xlu0 %3217
      %3219 = vrot.lane.b32.xlu0 %v3214, 45
      %v3220 = vpop.permute.xlu0 %3219
      %3221 = vrot.lane.b32.xlu0 %v3215, 45
      %v3222 = vpop.permute.xlu0 %3221
      %3223 = vrot.lane.b32.xlu0 %v3216, 45
      %v3224 = vpop.permute.xlu0 %3223
      %v3225 = vsel %vm1146, %v3218, %v3220
      %v3226 = vsel %vm1146, %v3220, %v3222
      %v3227 = vsel %vm1146, %v3222, %v3224
      %3231 = vst [vmem:[#allocation4 + $0x108] sm:$0xf] %v3225
      %3232 = vst [vmem:[#allocation4 + $0x110] sm:$0xf] %v3226
      %3233 = vst.msk [vmem:[#allocation4 + $0x118] sm:$0xf] %vm1656, %v3227
      %v3234 = vld [vmem:[#allocation3 + $0x4] sm:$0xff]
      %v3235 = vld [vmem:[#allocation3 + $0xc] sm:$0xff]
      %v3238 = vunpack.c.l.b16 %v3234
      %v3239 = vunpack.c.h.b16 %v3234
      %v3240 = vunpack.c.l.b16 %v3235
      %v3241 = vunpack.c.h.b16 %v3235
      %v3242 = vpack.c.b16 %v3238, %v3238
      %v3243 = vpack.c.b16 %v3239, %v3239
      %v3244 = vpack.c.b16 %v3240, %v3240
      %v3245 = vpack.c.b16 %v3241, %v3241
      %3246 = vrot.lane.b32.xlu0 %v3242, 44
      %v3247 = vpop.permute.xlu0 %3246
      %3248 = vrot.lane.b32.xlu0 %v3243, 44
      %v3249 = vpop.permute.xlu0 %3248
      %3250 = vrot.lane.b32.xlu0 %v3244, 44
      %v3251 = vpop.permute.xlu0 %3250
      %3252 = vrot.lane.b32.xlu0 %v3245, 44
      %v3253 = vpop.permute.xlu0 %3252
      %v3254 = vsel %vm1184, %v3247, %v3249
      %v3255 = vsel %vm1184, %v3249, %v3251
      %v3256 = vsel %vm1184, %v3251, %v3253
      %3260 = vst [vmem:[#allocation4 + $0x108] sm:$0xf0] %v3254
      %3261 = vst [vmem:[#allocation4 + $0x110] sm:$0xf0] %v3255
      %3262 = vst.msk [vmem:[#allocation4 + $0x118] sm:$0xf0] %vm1681, %v3256
      %v3263 = vld [vmem:[#allocation3 + $0x4] sm:$0xff]
      %v3264 = vld [vmem:[#allocation3 + $0xc] sm:$0xff]
      %v3267 = vunpack.c.l.b16 %v3263
      %v3268 = vunpack.c.h.b16 %v3263
      %v3269 = vunpack.c.l.b16 %v3264
      %v3270 = vunpack.c.h.b16 %v3264
      %v3271 = vpack.c.b16 %v3267, %v3267
      %v3272 = vpack.c.b16 %v3268, %v3268
      %v3273 = vpack.c.b16 %v3269, %v3269
      %v3274 = vpack.c.b16 %v3270, %v3270
      %3275 = vrot.lane.b32.xlu0 %v3271, 36
      %v3276 = vpop.permute.xlu0 %3275
      %3277 = vrot.lane.b32.xlu0 %v3272, 36
      %v3278 = vpop.permute.xlu0 %3277
      %3279 = vrot.lane.b32.xlu0 %v3273, 36
      %v3280 = vpop.permute.xlu0 %3279
      %3281 = vrot.lane.b32.xlu0 %v3274, 36
      %v3282 = vpop.permute.xlu0 %3281
      %v3283 = vsel %vm1222, %v3276, %v3278
      %v3284 = vsel %vm1222, %v3278, %v3280
      %v3285 = vsel %vm1222, %v3280, %v3282
      %3289 = vst [vmem:[#allocation4 + $0x120] sm:$0xf] %v3283
      %3290 = vst [vmem:[#allocation4 + $0x128] sm:$0xf] %v3284
      %3291 = vst.msk [vmem:[#allocation4 + $0x130] sm:$0xf] %vm1656, %v3285
      %v3292 = vld [vmem:[#allocation3 + $0x4] sm:$0xff]
      %v3293 = vld [vmem:[#allocation3 + $0xc] sm:$0xff]
      %v3296 = vunpack.c.l.b16 %v3292
      %v3297 = vunpack.c.h.b16 %v3292
      %v3298 = vunpack.c.l.b16 %v3293
      %v3299 = vunpack.c.h.b16 %v3293
      %v3300 = vpack.c.b16 %v3296, %v3296
      %v3301 = vpack.c.b16 %v3297, %v3297
      %v3302 = vpack.c.b16 %v3298, %v3298
      %v3303 = vpack.c.b16 %v3299, %v3299
      %3304 = vrot.lane.b32.xlu0 %v3300, 35
      %v3305 = vpop.permute.xlu0 %3304
      %3306 = vrot.lane.b32.xlu0 %v3301, 35
      %v3307 = vpop.permute.xlu0 %3306
      %3308 = vrot.lane.b32.xlu0 %v3302, 35
      %v3309 = vpop.permute.xlu0 %3308
      %3310 = vrot.lane.b32.xlu0 %v3303, 35
      %v3311 = vpop.permute.xlu0 %3310
      %v3312 = vsel %vm1260, %v3305, %v3307
      %v3313 = vsel %vm1260, %v3307, %v3309
      %v3314 = vsel %vm1260, %v3309, %v3311
      %3318 = vst [vmem:[#allocation4 + $0x120] sm:$0xf0] %v3312
      %3319 = vst [vmem:[#allocation4 + $0x128] sm:$0xf0] %v3313
      %3320 = vst.msk [vmem:[#allocation4 + $0x130] sm:$0xf0] %vm1681, %v3314
      %v3321 = vld [vmem:[#allocation3 + $0x4] sm:$0xff]
      %v3322 = vld [vmem:[#allocation3 + $0xc] sm:$0xff]
      %v3325 = vunpack.c.l.b16 %v3321
      %v3326 = vunpack.c.h.b16 %v3321
      %v3327 = vunpack.c.l.b16 %v3322
      %v3328 = vunpack.c.h.b16 %v3322
      %v3329 = vpack.c.b16 %v3325, %v3325
      %v3330 = vpack.c.b16 %v3326, %v3326
      %v3331 = vpack.c.b16 %v3327, %v3327
      %v3332 = vpack.c.b16 %v3328, %v3328
      %3333 = vrot.lane.b32.xlu0 %v3329, 34
      %v3334 = vpop.permute.xlu0 %3333
      %3335 = vrot.lane.b32.xlu0 %v3330, 34
      %v3336 = vpop.permute.xlu0 %3335
      %3337 = vrot.lane.b32.xlu0 %v3331, 34
      %v3338 = vpop.permute.xlu0 %3337
      %3339 = vrot.lane.b32.xlu0 %v3332, 34
      %v3340 = vpop.permute.xlu0 %3339
      %v3341 = vsel %vm1298, %v3334, %v3336
      %v3342 = vsel %vm1298, %v3336, %v3338
      %v3343 = vsel %vm1298, %v3338, %v3340
      %3347 = vst [vmem:[#allocation4 + $0x138] sm:$0xf] %v3341
      %3348 = vst [vmem:[#allocation4 + $0x140] sm:$0xf] %v3342
      %3349 = vst.msk [vmem:[#allocation4 + $0x148] sm:$0xf] %vm1656, %v3343
      %v3350 = vld [vmem:[%s5] sm:$0xff]
      %v3351 = vld [vmem:[%s5 + $0x8] sm:$0xff]
      %v3352 = vld [vmem:[#allocation4] sm:$0xff]
      %v3353 = vld [vmem:[#allocation4 + $0x8] sm:$0xff]
      %v3354 = vld [vmem:[#allocation4 + $0x10] sm:$0xff]
      %v3355 = vld [vmem:[#allocation4 + $0x18] sm:$0xff]
      %v3356 = vld [vmem:[#allocation4 + $0x20] sm:$0xff]
      %v3357 = vld [vmem:[#allocation4 + $0x28] sm:$0xff]
      %v3358 = vld [vmem:[#allocation4 + $0x30] sm:$0xff]
      %v3359 = vld [vmem:[#allocation4 + $0x38] sm:$0xff]
      %v3360 = vld [vmem:[#allocation4 + $0x40] sm:$0xff]
      %v3361 = vld [vmem:[#allocation4 + $0x48] sm:$0xff]
      %v3362 = vld [vmem:[#allocation4 + $0x50] sm:$0xff]
      %v3363 = vld [vmem:[#allocation4 + $0x58] sm:$0xff]
      %v3364 = vld [vmem:[#allocation4 + $0x60] sm:$0xff]
      %v3365 = vld [vmem:[#allocation4 + $0x68] sm:$0xff]
      %v3366 = vld [vmem:[#allocation4 + $0x70] sm:$0xff]
      %v3367 = vld [vmem:[#allocation4 + $0x78] sm:$0xff]
      %v3368 = vld [vmem:[#allocation4 + $0x80] sm:$0xff]
      %v3369 = vld [vmem:[#allocation4 + $0x88] sm:$0xff]
      %v3370 = vld [vmem:[#allocation4 + $0x90] sm:$0xff]
      %v3371 = vld [vmem:[#allocation4 + $0x98] sm:$0xff]
      %v3372 = vld [vmem:[#allocation4 + $0xa0] sm:$0xff]
      %v3373 = vld [vmem:[#allocation4 + $0xa8] sm:$0xff]
      %v3374 = vld [vmem:[#allocation4 + $0xb0] sm:$0xff]
      %v3375 = vld [vmem:[#allocation4 + $0xb8] sm:$0xff]
      %v3376 = vld [vmem:[#allocation4 + $0xc0] sm:$0xff]
      %v3377 = vld [vmem:[#allocation4 + $0xc8] sm:$0xff]
      %v3378 = vld [vmem:[#allocation4 + $0xd0] sm:$0xff]
      %v3379 = vld [vmem:[#allocation4 + $0xd8] sm:$0xff]
      %v3380 = vld [vmem:[#allocation4 + $0xe0] sm:$0xff]
      %v3381 = vld [vmem:[#allocation4 + $0xe8] sm:$0xff]
      %v3382 = vld [vmem:[#allocation4 + $0xf0] sm:$0xff]
      %v3383 = vld [vmem:[#allocation4 + $0xf8] sm:$0xff]
      %v3384 = vld [vmem:[#allocation4 + $0x100] sm:$0xff]
      %v3385 = vld [vmem:[#allocation4 + $0x108] sm:$0xff]
      %v3386 = vld [vmem:[#allocation4 + $0x110] sm:$0xff]
      %v3387 = vld [vmem:[#allocation4 + $0x118] sm:$0xff]
      %v3388 = vld [vmem:[#allocation4 + $0x120] sm:$0xff]
      %v3389 = vld [vmem:[#allocation4 + $0x128] sm:$0xff]
      %v3390 = vld [vmem:[#allocation4 + $0x130] sm:$0xff]
      %v3391 = vld [vmem:[#allocation4 + $0x138] sm:$0xf]
      %v3392 = vld [vmem:[#allocation4 + $0x140] sm:$0xf]
      %v3393 = vld [vmem:[#allocation4 + $0x148] sm:$0xf]
      %v3394 = vld [vmem:[%s6] sm:$0xff]
      %v3395 = vld [vmem:[%s6 + $0x8] sm:$0xff]
      %3397 = vset.pattern.permute.xlu0 0
      %3398 = vperm.xlu0 %3397, %v3394
      %v3399 = vpop.permute.xlu0 %3398
      %3402 = vset.pattern.permute.xlu0 0
      %3403 = vperm.xlu0 %3402, %v3395
      %v3404 = vpop.permute.xlu0 %3403
      %v3408 = vunpack.c.l.b16 %v3350
      %v3409 = vunpack.c.h.b16 %v3350
      %v3410 = vunpack.c.l.b16 %v3351
      %v3411 = vunpack.c.h.b16 %v3351
      %v3412 = vpack.c.b16 %v3410, %v3408
      %v3413 = vpack.c.b16 %v3411, %v3409
      %v3416 = vsel %vm2462, %v3413, 0
      %v3419 = vsel %vm2466, %v3391, 0
      %v3422 = vsel %vm2466, %v3392, 0
      %v3425 = vsel %vm2466, %v3393, 0
      %3427 = vmatprep.subr.bf16.mxu0 %v3353
      %3428 = vmatpush1.bf16.msra.mxu0 %v3352
      %3429 = vmatprep.subr.bf16.mxu0 %v3356
      %3430 = vmatpush1.bf16.msra.mxu0 %v3355
      %3431 = vmatprep.subr.bf16.mxu0 %v3359
      %3432 = vmatpush1.bf16.msra.mxu0 %v3358
      %3433 = vmatprep.subr.bf16.mxu0 %v3362
      %3434 = vmatpush1.bf16.msra.mxu0 %v3361
      %3435 = vmatprep.subr.bf16.mxu0 %v3365
      %3436 = vmatpush1.bf16.msra.mxu0 %v3364
      %3437 = vmatprep.subr.bf16.mxu0 %v3368
      %3438 = vmatpush1.bf16.msra.mxu0 %v3367
      %3439 = vmatprep.subr.bf16.mxu0 %v3371
      %3440 = vmatpush1.bf16.msra.mxu0 %v3370
      %3441 = vmatprep.subr.bf16.mxu0 %v3374
      %3442 = vmatpush1.bf16.msra.mxu0 %v3373
      %3443 = vmatprep.subr.bf16.mxu0 %v3377
      %3444 = vmatpush1.bf16.msra.mxu0 %v3376
      %3445 = vmatprep.subr.bf16.mxu0 %v3380
      %3446 = vmatpush1.bf16.msra.mxu0 %v3379
      %3447 = vmatprep.subr.bf16.mxu0 %v3383
      %3448 = vmatpush1.bf16.msra.mxu0 %v3382
      %3449 = vmatprep.subr.bf16.mxu0 %v3386
      %3450 = vmatpush1.bf16.msra.mxu0 %v3385
      %3451 = vmatprep.subr.bf16.mxu0 %v3389
      %3452 = vmatpush1.bf16.msra.mxu0 %v3388
      %3453 = vmatprep.subr.bf16.mxu0 %v3422
      %3454 = vmatpush1.bf16.msra.mxu0 %v3419
      %3455 = vmatprep.subr.bf16.mxu0 0
      %3456 = vmatpush1.bf16.msra.mxu0 0
      %3457 = vmatprep.subr.bf16.mxu0 0
      %3458 = vmatpush1.bf16.msra.mxu0 0
      %3459 = vmatprep.mubr.bf16.mxu0 %v3416
      %3460 = vmatmul.mubr.bf16.gmra.mrb[0].mxu0 %v3412
      %v3461 = vpop.f32.mrb[0].mxu0
      %v3462 = vadd.f32 %v3399, %v3461
      %v3463 = vpop.f32.mrb[0].mxu0
      %v3464 = vadd.f32 %v3399, %v3463
      %v3465 = vpop.f32.mrb[0].mxu0
      %v3466 = vadd.f32 %v3404, %v3465
      %v3467 = vpop.f32.mrb[0].mxu0
      %v3468 = vadd.f32 %v3404, %v3467
      %3469 = vdwg.mxu0
      %3470 = vmatprep.subr.bf16.mxu0 0
      %3471 = vmatpush1.bf16.msra.mxu0 %v3354
      %3472 = vmatprep.subr.bf16.mxu0 0
      %3473 = vmatpush1.bf16.msra.mxu0 %v3357
      %3474 = vmatprep.subr.bf16.mxu0 0
      %3475 = vmatpush1.bf16.msra.mxu0 %v3360
      %3476 = vmatprep.subr.bf16.mxu0 0
      %3477 = vmatpush1.bf16.msra.mxu0 %v3363
      %3478 = vmatprep.subr.bf16.mxu0 0
      %3479 = vmatpush1.bf16.msra.mxu0 %v3366
      %3480 = vmatprep.subr.bf16.mxu0 0
      %3481 = vmatpush1.bf16.msra.mxu0 %v3369
      %3482 = vmatprep.subr.bf16.mxu0 0
      %3483 = vmatpush1.bf16.msra.mxu0 %v3372
      %3484 = vmatprep.subr.bf16.mxu0 0
      %3485 = vmatpush1.bf16.msra.mxu0 %v3375
      %3486 = vmatprep.subr.bf16.mxu0 0
      %3487 = vmatpush1.bf16.msra.mxu0 %v3378
      %3488 = vmatprep.subr.bf16.mxu0 0
      %3489 = vmatpush1.bf16.msra.mxu0 %v3381
      %3490 = vmatprep.subr.bf16.mxu0 0
      %3491 = vmatpush1.bf16.msra.mxu0 %v3384
      %3492 = vmatprep.subr.bf16.mxu0 0
      %3493 = vmatpush1.bf16.msra.mxu0 %v3387
      %3494 = vmatprep.subr.bf16.mxu0 0
      %3495 = vmatpush1.bf16.msra.mxu0 %v3390
      %3496 = vmatprep.subr.bf16.mxu0 0
      %3497 = vmatpush1.bf16.msra.mxu0 %v3425
      %3498 = vmatprep.subr.bf16.mxu0 0
      %3499 = vmatpush1.bf16.msra.mxu0 0
      %3500 = vmatprep.subr.bf16.mxu0 0
      %3501 = vmatpush1.bf16.msra.mxu0 0
      %3502 = vmatprep.mubr.bf16.mxu0 %v3416
      %3503 = vmatmul.mubr.bf16.gmra.mrb[0].mxu0 %v3412
      %v3504 = vpop.f32.mrb[0].mxu0
      %v3505 = vadd.f32 %v3399, %v3504
      %v3506 = vpop.f32.mrb[0].mxu0
      %v3507 = vpop.f32.mrb[0].mxu0
      %v3508 = vadd.f32 %v3404, %v3507
      %v3509 = vpop.f32.mrb[0].mxu0
      %3510 = vdwg.mxu0
      %v3511 = vld [vmem:[%s300] sm:$0xff]
      %v3512 = vld [vmem:[%s300 + $0x8] sm:$0xff]
      %v3513 = vld [vmem:[%s300 + $0x14] sm:$0xff]
      %v3514 = vld [vmem:[%s300 + $0x1c] sm:$0xff]
      %v3515 = vunpack.c.l.bf16 %v3511
      %v3516 = vunpack.c.h.bf16 %v3511
      %v3517 = vunpack.c.l.bf16 %v3512
      %v3518 = vunpack.c.h.bf16 %v3512
      %v3519 = vunpack.c.l.bf16 %v3513
      %v3520 = vunpack.c.h.bf16 %v3513
      %v3521 = vunpack.c.l.bf16 %v3514
      %v3522 = vunpack.c.h.bf16 %v3514
      %3531 = vrot.lane.b32.xlu0 %v3515, 17
      %v3532 = vpop.permute.xlu0 %3531
      %3533 = vrot.lane.b32.xlu0 %v3516, 17
      %v3534 = vpop.permute.xlu0 %3533
      %3535 = vrot.lane.b32.xlu0 %v3517, 17
      %v3536 = vpop.permute.xlu0 %3535
      %3537 = vrot.lane.b32.xlu0 %v3518, 17
      %v3538 = vpop.permute.xlu0 %3537
      %3539 = vrot.lane.b32.xlu0 %v3519, 17
      %v3540 = vpop.permute.xlu0 %3539
      %3541 = vrot.lane.b32.xlu0 %v3520, 17
      %v3542 = vpop.permute.xlu0 %3541
      %3543 = vrot.lane.b32.xlu0 %v3521, 17
      %v3544 = vpop.permute.xlu0 %3543
      %3545 = vrot.lane.b32.xlu0 %v3522, 17
      %v3546 = vpop.permute.xlu0 %3545
      %vm3547 = vcmask 138240
      %v3548 = vsel %vm3547, %v3532, %v3534
      %v3549 = vsel %vm3547, %v3534, %v3536
      %v3550 = vsel %vm3547, %v3536, %v3538
      %v3551 = vsel %vm3547, %v3540, %v3542
      %v3552 = vsel %vm3547, %v3542, %v3544
      %v3553 = vsel %vm3547, %v3544, %v3546
      %v3560 = vadd.f32 %v3462, %v3548
      %v3561 = vadd.f32 %v3464, %v3549
      %v3562 = vadd.f32 %v3505, %v3550
      %v3563 = vadd.f32 %v3466, %v3551
      %v3564 = vadd.f32 %v3468, %v3552
      %v3565 = vadd.f32 %v3508, %v3553
      %v3566 = vmax.f32 %v3560, 0.0
      %v3567 = vmax.f32 %v3561, 0.0
      %v3568 = vmax.f32 %v3562, 0.0
      %v3569 = vmax.f32 %v3563, 0.0
      %v3570 = vmax.f32 %v3564, 0.0
      %v3571 = vmax.f32 %v3565, 0.0
      %3572 = vst [vmem:[%s305] sm:$0xff] %v3566
      %3573 = vst [vmem:[%s305 + $0x8] sm:$0xff] %v3567
      %3574 = vst.msk [vmem:[%s305 + $0x10] sm:$0xff] %vm330, %v3568
      %3575 = vst [vmem:[%s305 + $0x18] sm:$0xff] %v3569
      %3576 = vst [vmem:[%s305 + $0x20] sm:$0xff] %v3570
      %3577 = vst.msk [vmem:[%s305 + $0x28] sm:$0xff] %vm330, %v3571
      %p3578 = scmp.lt.s32.totalorder %s19, 1
      %s3579 = scalar_select %p3578, %s19, 1
      %s3580 = smul.addr %s3579, 6
      %s3581 = smul.addr %s3580, 8
      %s3582 = scalar_lea.vmem %s8, %s3581
      // Predicated region
      $region53: #{bottleneck_forward.1} parent=51 // pred_check
        %p3583 = pneg %p210
      $region54: #{bottleneck_forward.1} parent=51 // pred_check_branch
        %3585 = sbr.rel (%p3583) target = $region56
      $region55: #{bottleneck_forward.1} parent=51 // pred_region
        _
      $region56: #{bottleneck_forward.1} parent=51 // pred_fallthru
        _
    $region52: #{bottleneck_forward.1} parent=5 // pred_fallthru
      _
    %p3586 = scmp.le.s32.totalorder 2, %s14
    // Predicated region
    $region57: #{bottleneck_forward.1} parent=5 // pred_check
      %p3587 = pneg %p3586
    $region58: #{bottleneck_forward.1} parent=5 // pred_check_branch
      %3589 = sbr.rel (%p3587) target = $region60
    $region59: #{bottleneck_forward.1} parent=5 // pred_region
      %s3590 = ssub.s32 %s14, 2
      // Predicated region
      $region61: #{bottleneck_forward.1} parent=59 // pred_check
        %p3591 = pneg %p216
      $region62: #{bottleneck_forward.1} parent=59 // pred_check_branch
        %3593 = sbr.rel (%p3591) target = $region64
      $region63: #{bottleneck_forward.1} parent=59 // pred_region
        %p3594 = scmp.lt.s32.totalorder %s20, 1
        %s3595 = scalar_select %p3594, %s20, 1
        %s3596 = smul.addr %s3595, 6
        %s3597 = smul.addr %s3596, 8
        %s3598 = scalar_lea.vmem %s8, %s3597
      $region64: #{bottleneck_forward.1} parent=59 // pred_fallthru
        _
    $region60: #{bottleneck_forward.1} parent=5 // pred_fallthru
      _
  $region6: #{bottleneck_forward.1} parent=0 // loop_footer
    %s18 = sadd.s32 1, %s14
  $region7: #{bottleneck_forward.1} parent=0 // loop_footer_branch
    %13 = sbr.rel target = $region3
  $region8: #{bottleneck_forward.1} parent=0 // loop_exit
    _

</llo_original>
